<compile_context>
chip_gen: v7x
topology: tpu7x:2x2x1
jax: 0.10.0
libtpu: 0.0.40
codegen_flags: <defaults>
</compile_context>

<pallas_src>
import numpy as np
import jax
import jax.numpy as jnp
from jax.experimental import pallas as pl
from jax.experimental.pallas import tpu as pltpu


# ----------------------------- parameter init ------------------------------

def init_linear(key, fan_in, fan_out):
    """PyTorch-style nn.Linear init: U(-1/sqrt(fan_in), 1/sqrt(fan_in))."""
    k1, k2 = jax.random.split(key)
    bound = 1.0 / np.sqrt(fan_in)
    w = jax.random.uniform(k1, (fan_in, fan_out), jnp.float32, -bound, bound)
    b = jax.random.uniform(k2, (fan_out,), jnp.float32, -bound, bound)
    return w, b


def init_expert_stack(key, n_experts, din, experts_out, experts_hidden):
    # NOTE: Expert(input, experts_out, experts_hidden) => fc1: din->experts_out,
    #       fc2: experts_out->experts_hidden (the torch code swaps the names).
    keys = jax.random.split(key, n_experts)
    w1s, b1s, w2s, b2s = [], [], [], []
    for k in keys:
        k1, k2 = jax.random.split(k)
        w1, b1 = init_linear(k1, din, experts_out)
        w2, b2 = init_linear(k2, experts_out, experts_hidden)
        w1s.append(w1); b1s.append(b1.reshape(1, -1))
        w2s.append(w2); b2s.append(b2.reshape(1, -1))
    return {'w1': jnp.stack(w1s), 'b1': jnp.stack(b1s),
            'w2': jnp.stack(w2s), 'b2': jnp.stack(b2s)}


def init_cgc(key, input_size, num_spec, num_shared, experts_out, experts_hidden):
    ks = jax.random.split(key, 6)
    p = {}
    p['experts_shared'] = init_expert_stack(ks[0], num_shared, input_size, experts_out, experts_hidden)
    p['experts_task1'] = init_expert_stack(ks[1], num_spec, input_size, experts_out, experts_hidden)
    p['experts_task2'] = init_expert_stack(ks[2], num_spec, input_size, experts_out, experts_hidden)
    wg, bg = init_linear(ks[3], input_size, 2 * num_spec + num_shared)
    p['gate_shared_w'], p['gate_shared_b'] = wg, bg.reshape(1, -1)
    wg, bg = init_linear(ks[4], input_size, num_spec + num_shared)
    p['gate_task1_w'], p['gate_task1_b'] = wg, bg.reshape(1, -1)
    wg, bg = init_linear(ks[5], input_size, num_spec + num_shared)
    p['gate_task2_w'], p['gate_task2_b'] = wg, bg.reshape(1, -1)
    return p


def init_tower(key, input_size, output_size, hidden_size):
    k1, k2 = jax.random.split(key)
    w1, b1 = init_linear(k1, input_size, hidden_size)
    w2, b2 = init_linear(k2, hidden_size, output_size)
    return {'w1': w1, 'b1': b1.reshape(1, -1), 'w2': w2, 'b2': b2.reshape(1, -1)}


def init_ple(key, num_cgc_layers, input_size, num_spec, num_shared,
             experts_out, experts_hidden, towers_hidden):
    ks = jax.random.split(key, num_cgc_layers + 3)
    params = {
        'cgc_layer1': init_cgc(ks[0], input_size, num_spec, num_shared,
                               experts_out, experts_hidden),
        # torch code hard-codes input_size=32 for the stacked CGC layers:
        'cgc_layers': [init_cgc(ks[1 + i], 32, num_spec, num_shared,
                                experts_out, experts_hidden)
                       for i in range(num_cgc_layers)],
        'tower1': init_tower(ks[num_cgc_layers + 1], experts_out, 1, towers_hidden),
        'tower2': init_tower(ks[num_cgc_layers + 2], experts_out, 1, towers_hidden),
    }
    return params


# ----------------------------- weight packing --------------------------------
# Done once on the host (plain XLA), outside any kernel.

def _block_diag(mats):
    e = len(mats)
    r, c = mats[0].shape
    out = jnp.zeros((e * r, e * c), jnp.float32)
    for i, m in enumerate(mats):
        out = out.at[i * r:(i + 1) * r, i * c:(i + 1) * c].set(m)
    return out


def pack_expert_stack(sp):
    """Concat fc1 along outputs; block-diagonal fc2 -> stack == two matmuls."""
    E, din, h1 = sp['w1'].shape
    h2 = sp['w2'].shape[2]
    w1c = jnp.transpose(sp['w1'], (1, 0, 2)).reshape(din, E * h1)
    b1c = sp['b1'].reshape(1, E * h1)
    w2bd = _block_diag([sp['w2'][e] for e in range(E)])
    b2c = sp['b2'].reshape(1, E * h2)
    return {'w1c': w1c, 'b1c': b1c, 'w2bd': w2bd, 'b2c': b2c}


def pack_cgc(p):
    return {
        'experts_shared': pack_expert_stack(p['experts_shared']),
        'experts_task1': pack_expert_stack(p['experts_task1']),
        'experts_task2': pack_expert_stack(p['experts_task2']),
        'gate_shared_w': p['gate_shared_w'], 'gate_shared_b': p['gate_shared_b'],
        'gate_task1_w': p['gate_task1_w'], 'gate_task1_b': p['gate_task1_b'],
        'gate_task2_w': p['gate_task2_w'], 'gate_task2_b': p['gate_task2_b'],
    }


def pack_ple(params):
    return {
        'cgc_layer1': pack_cgc(params['cgc_layer1']),
        'cgc_layers': [pack_cgc(lp) for lp in params['cgc_layers']],
        'tower1': params['tower1'],
        'tower2': params['tower2'],
    }


# ----------------------------- fused forward kernel --------------------------

def ple_forward(params, x, *, num_spec, num_shared, experts_hidden):
    """Whole PLE forward as a single VMEM-resident Pallas kernel."""
    B = x.shape[0]
    H = experts_hidden
    packed = pack_ple(params)
    flat, treedef = jax.tree_util.tree_flatten(packed)
    n_flat = len(flat)

    def kernel(*refs):
        x_ref = refs[0]
        p = jax.tree_util.tree_unflatten(treedef, refs[1:1 + n_flat])
        out_ref = refs[1 + n_flat]

        def linear(v, w_ref, b_ref):
            return jnp.dot(v, w_ref[...], preferred_element_type=jnp.float32) + b_ref[...]

        def expert_stack(v, sp):
            # fc1 (all experts in one matmul) -> ReLU -> (dropout=identity)
            # -> fc2 (block-diagonal, all experts in one matmul).
            h = jnp.maximum(linear(v, sp['w1c'], sp['b1c']), 0.0)
            return linear(h, sp['w2bd'], sp['b2c'])            # (B, E*H)

        def split_experts(o, n):
            return [o[:, e * H:(e + 1) * H] for e in range(n)]

        def gate_mix(xg, w_ref, b_ref, expert_list):
            logits = linear(xg, w_ref, b_ref)                  # (B, G)
            m = jnp.max(logits, axis=1, keepdims=True)
            e = jnp.exp(logits - m)
            gate = e / jnp.sum(e, axis=1, keepdims=True)       # softmax over experts
            acc = expert_list[0] * gate[:, 0:1]
            for g in range(1, len(expert_list)):               # static unroll, G <= 6
                acc = acc + expert_list[g] * gate[:, g:g + 1]
            return acc

        def cgc(lp, xs, x1, x2, if_last):
            o_sh = split_experts(expert_stack(xs, lp['experts_shared']), num_shared)
            o_t1 = split_experts(expert_stack(x1, lp['experts_task1']), num_spec)
            o_t2 = split_experts(expert_stack(x2, lp['experts_task2']), num_spec)
            g1 = gate_mix(x1, lp['gate_task1_w'], lp['gate_task1_b'], o_t1 + o_sh)
            g2 = gate_mix(x2, lp['gate_task2_w'], lp['gate_task2_b'], o_t2 + o_sh)
            if if_last:
                return [g1, g2]
            gs = gate_mix(xs, lp['gate_shared_w'], lp['gate_shared_b'], o_t1 + o_t2 + o_sh)
            return [gs, g1, g2]

        def tower(v, tp):
            h = jnp.maximum(linear(v, tp['w1'], tp['b1']), 0.0)
            # nn.Dropout(0.4): identity at inference.
            y = linear(h, tp['w2'], tp['b2'])
            return 1.0 / (1.0 + jnp.exp(-y))                   # sigmoid

        xin = x_ref[...]
        outs = cgc(p['cgc_layer1'], xin, xin, xin, False)
        n_layers = len(p['cgc_layers'])
        for i, lp in enumerate(p['cgc_layers']):
            outs = cgc(lp, outs[0], outs[1], outs[2], i == n_layers - 1)
        y1 = tower(outs[0], p['tower1'])                       # (B, 1)
        y2 = tower(outs[1], p['tower2'])                       # (B, 1)
        out_ref[...] = jnp.concatenate([y1, y2], axis=1)       # single (B, 2) store

    vmem = pl.BlockSpec(memory_space=pltpu.MemorySpace.VMEM)
    out = pl.pallas_call(
        kernel,
        out_shape=jax.ShapeDtypeStruct((B, 2), jnp.float32),
        in_specs=[vmem] * (1 + n_flat),
        out_specs=vmem,
    )(x, *flat)
    return [out[:, 0:1], out[:, 1:2]]


# ----------------------------- pure-JAX reference ----------------------------

def _ref_experts(x, p):
    outs = []
    for e in range(p['w1'].shape[0]):
        h = jnp.maximum(x @ p['w1'][e] + p['b1'][e, 0], 0.0)
        outs.append(h @ p['w2'][e] + p['b2'][e, 0])
    return jnp.stack(outs)


def _ref_gate_mix(xg, wg, bg, ex):
    g = jax.nn.softmax(xg @ wg + bg[0], axis=1)
    return jnp.einsum('abc,ba->bc', ex, g)


def _ref_tower(x, p):
    h = jnp.maximum(x @ p['w1'] + p['b1'], 0.0)
    return jax.nn.sigmoid(h @ p['w2'] + p['b2'])


def _ref_cgc(p, inputs, if_last):
    xs, x1, x2 = inputs
    os_ = _ref_experts(xs, p['experts_shared'])
    o1 = _ref_experts(x1, p['experts_task1'])
    o2 = _ref_experts(x2, p['experts_task2'])
    g1 = _ref_gate_mix(x1, p['gate_task1_w'], p['gate_task1_b'], jnp.concatenate([o1, os_], 0))
    g2 = _ref_gate_mix(x2, p['gate_task2_w'], p['gate_task2_b'], jnp.concatenate([o2, os_], 0))
    if if_last:
        return [g1, g2]
    gs = _ref_gate_mix(xs, p['gate_shared_w'], p['gate_shared_b'], jnp.concatenate([o1, o2, os_], 0))
    return [gs, g1, g2]


def _ref_ple(params, x):
    outs = _ref_cgc(params['cgc_layer1'], [x, x, x], False)
    n = len(params['cgc_layers'])
    for i, lp in enumerate(params['cgc_layers']):
        outs = _ref_cgc(lp, outs, i == n - 1)
    return [_ref_tower(outs[0], params['tower1']), _ref_tower(outs[1], params['tower2'])]


# ----------------------------- main ------------------------------------------

if __name__ == "__main__":
    # Small, self-consistent configuration.  The torch module requires
    # experts_hidden == 32 (hard-coded CGC input size of stacked layers) and
    # experts_out == CGC-output-dim feeding the towers; pick 32 for both.
    num_CGC_layers = 2
    batch = 8
    input_size = 16
    num_specific_experts = 2
    num_shared_experts = 2
    experts_out = 32
    experts_hidden = 32
    towers_hidden = 16

    root = jax.random.PRNGKey(0)
    kx, kp = jax.random.split(root)
    x = jax.random.normal(kx, (batch, input_size), jnp.float32)

    params = init_ple(kp, num_CGC_layers, input_size, num_specific_experts,
                      num_shared_experts, experts_out, experts_hidden, towers_hidden)

    y1, y2 = ple_forward(params, x,
                         num_spec=num_specific_experts,
                         num_shared=num_shared_experts,
                         experts_hidden=experts_hidden)
    jax.block_until_ready(y1)
    jax.block_until_ready(y2)

    r1, r2 = _ref_ple(params, x)
    np.testing.assert_allclose(np.asarray(y1), np.asarray(r1), rtol=5e-4, atol=1e-5)
    np.testing.assert_allclose(np.asarray(y2), np.asarray(r2), rtol=5e-4, atol=1e-5)
    assert y1.shape == (batch, 1) and y2.shape == (batch, 1)

    print("KERNEL_OK")
</pallas_src>

<mosaic_0001>
module attributes {stable_mosaic.version = 11 : i64} {
  func.func @kernel(%arg0: memref<8x16xf32, #tpu.memory_space<vmem>>, %arg1: memref<1x64xf32, #tpu.memory_space<vmem>>, %arg2: memref<1x64xf32, #tpu.memory_space<vmem>>, %arg3: memref<16x64xf32, #tpu.memory_space<vmem>>, %arg4: memref<64x64xf32, #tpu.memory_space<vmem>>, %arg5: memref<1x64xf32, #tpu.memory_space<vmem>>, %arg6: memref<1x64xf32, #tpu.memory_space<vmem>>, %arg7: memref<16x64xf32, #tpu.memory_space<vmem>>, %arg8: memref<64x64xf32, #tpu.memory_space<vmem>>, %arg9: memref<1x64xf32, #tpu.memory_space<vmem>>, %arg10: memref<1x64xf32, #tpu.memory_space<vmem>>, %arg11: memref<16x64xf32, #tpu.memory_space<vmem>>, %arg12: memref<64x64xf32, #tpu.memory_space<vmem>>, %arg13: memref<1x6xf32, #tpu.memory_space<vmem>>, %arg14: memref<16x6xf32, #tpu.memory_space<vmem>>, %arg15: memref<1x4xf32, #tpu.memory_space<vmem>>, %arg16: memref<16x4xf32, #tpu.memory_space<vmem>>, %arg17: memref<1x4xf32, #tpu.memory_space<vmem>>, %arg18: memref<16x4xf32, #tpu.memory_space<vmem>>, %arg19: memref<1x64xf32, #tpu.memory_space<vmem>>, %arg20: memref<1x64xf32, #tpu.memory_space<vmem>>, %arg21: memref<32x64xf32, #tpu.memory_space<vmem>>, %arg22: memref<64x64xf32, #tpu.memory_space<vmem>>, %arg23: memref<1x64xf32, #tpu.memory_space<vmem>>, %arg24: memref<1x64xf32, #tpu.memory_space<vmem>>, %arg25: memref<32x64xf32, #tpu.memory_space<vmem>>, %arg26: memref<64x64xf32, #tpu.memory_space<vmem>>, %arg27: memref<1x64xf32, #tpu.memory_space<vmem>>, %arg28: memref<1x64xf32, #tpu.memory_space<vmem>>, %arg29: memref<32x64xf32, #tpu.memory_space<vmem>>, %arg30: memref<64x64xf32, #tpu.memory_space<vmem>>, %arg31: memref<1x6xf32, #tpu.memory_space<vmem>>, %arg32: memref<32x6xf32, #tpu.memory_space<vmem>>, %arg33: memref<1x4xf32, #tpu.memory_space<vmem>>, %arg34: memref<32x4xf32, #tpu.memory_space<vmem>>, %arg35: memref<1x4xf32, #tpu.memory_space<vmem>>, %arg36: memref<32x4xf32, #tpu.memory_space<vmem>>, %arg37: memref<1x64xf32, #tpu.memory_space<vmem>>, %arg38: memref<1x64xf32, #tpu.memory_space<vmem>>, %arg39: memref<32x64xf32, #tpu.memory_space<vmem>>, %arg40: memref<64x64xf32, #tpu.memory_space<vmem>>, %arg41: memref<1x64xf32, #tpu.memory_space<vmem>>, %arg42: memref<1x64xf32, #tpu.memory_space<vmem>>, %arg43: memref<32x64xf32, #tpu.memory_space<vmem>>, %arg44: memref<64x64xf32, #tpu.memory_space<vmem>>, %arg45: memref<1x64xf32, #tpu.memory_space<vmem>>, %arg46: memref<1x64xf32, #tpu.memory_space<vmem>>, %arg47: memref<32x64xf32, #tpu.memory_space<vmem>>, %arg48: memref<64x64xf32, #tpu.memory_space<vmem>>, %arg49: memref<1x6xf32, #tpu.memory_space<vmem>>, %arg50: memref<32x6xf32, #tpu.memory_space<vmem>>, %arg51: memref<1x4xf32, #tpu.memory_space<vmem>>, %arg52: memref<32x4xf32, #tpu.memory_space<vmem>>, %arg53: memref<1x4xf32, #tpu.memory_space<vmem>>, %arg54: memref<32x4xf32, #tpu.memory_space<vmem>>, %arg55: memref<1x16xf32, #tpu.memory_space<vmem>>, %arg56: memref<1x1xf32, #tpu.memory_space<vmem>>, %arg57: memref<32x16xf32, #tpu.memory_space<vmem>>, %arg58: memref<16x1xf32, #tpu.memory_space<vmem>>, %arg59: memref<1x16xf32, #tpu.memory_space<vmem>>, %arg60: memref<1x1xf32, #tpu.memory_space<vmem>>, %arg61: memref<32x16xf32, #tpu.memory_space<vmem>>, %arg62: memref<16x1xf32, #tpu.memory_space<vmem>>, %arg63: memref<8x2xf32, #tpu.memory_space<vmem>>) attributes {dimension_semantics = [], scalar_prefetch = 0 : i64, scratch_operands = 0 : i64, tpu.core_type = #tpu.core_type<tc>} {
    %c0 = arith.constant 0 : index
    %c0_0 = arith.constant 0 : index
    %0 = vector.load %arg0[%c0, %c0_0] : memref<8x16xf32, #tpu.memory_space<vmem>>, vector<8x16xf32>
    %c0_1 = arith.constant 0 : index
    %c0_2 = arith.constant 0 : index
    %1 = vector.load %arg3[%c0_1, %c0_2] : memref<16x64xf32, #tpu.memory_space<vmem>>, vector<16x64xf32>
    %cst = arith.constant dense<0.000000e+00> : vector<8x64xf32>
    %2 = tpu.matmul %0, %1, %cst {dimension_numbers = #tpu.dot_dimension_numbers<[1], [0], [0], [1], [0, 0, 1, 1], [], []>} : vector<8x16xf32>, vector<16x64xf32>, vector<8x64xf32> -> vector<8x64xf32>
    %c0_3 = arith.constant 0 : index
    %c0_4 = arith.constant 0 : index
    %3 = vector.load %arg1[%c0_3, %c0_4] : memref<1x64xf32, #tpu.memory_space<vmem>>, vector<1x64xf32>
    %4 = vector.broadcast %3 : vector<1x64xf32> to vector<8x64xf32>
    %5 = arith.addf %2, %4 : vector<8x64xf32>
    %cst_5 = arith.constant 0.000000e+00 : f32
    %6 = vector.broadcast %cst_5 : f32 to vector<8x64xf32>
    %7 = arith.maximumf %5, %6 : vector<8x64xf32>
    %c0_6 = arith.constant 0 : index
    %c0_7 = arith.constant 0 : index
    %8 = vector.load %arg4[%c0_6, %c0_7] : memref<64x64xf32, #tpu.memory_space<vmem>>, vector<64x64xf32>
    %cst_8 = arith.constant dense<0.000000e+00> : vector<8x64xf32>
    %9 = tpu.matmul %7, %8, %cst_8 {dimension_numbers = #tpu.dot_dimension_numbers<[1], [0], [0], [1], [0, 0, 1, 1], [], []>} : vector<8x64xf32>, vector<64x64xf32>, vector<8x64xf32> -> vector<8x64xf32>
    %c0_9 = arith.constant 0 : index
    %c0_10 = arith.constant 0 : index
    %10 = vector.load %arg2[%c0_9, %c0_10] : memref<1x64xf32, #tpu.memory_space<vmem>>, vector<1x64xf32>
    %11 = vector.broadcast %10 : vector<1x64xf32> to vector<8x64xf32>
    %12 = arith.addf %9, %11 : vector<8x64xf32>
    %13 = vector.extract_strided_slice %12 {offsets = [0, 0], sizes = [8, 32], strides = [1, 1]} : vector<8x64xf32> to vector<8x32xf32>
    %14 = vector.extract_strided_slice %12 {offsets = [0, 32], sizes = [8, 32], strides = [1, 1]} : vector<8x64xf32> to vector<8x32xf32>
    %c0_11 = arith.constant 0 : index
    %c0_12 = arith.constant 0 : index
    %15 = vector.load %arg7[%c0_11, %c0_12] : memref<16x64xf32, #tpu.memory_space<vmem>>, vector<16x64xf32>
    %cst_13 = arith.constant dense<0.000000e+00> : vector<8x64xf32>
    %16 = tpu.matmul %0, %15, %cst_13 {dimension_numbers = #tpu.dot_dimension_numbers<[1], [0], [0], [1], [0, 0, 1, 1], [], []>} : vector<8x16xf32>, vector<16x64xf32>, vector<8x64xf32> -> vector<8x64xf32>
    %c0_14 = arith.constant 0 : index
    %c0_15 = arith.constant 0 : index
    %17 = vector.load %arg5[%c0_14, %c0_15] : memref<1x64xf32, #tpu.memory_space<vmem>>, vector<1x64xf32>
    %18 = vector.broadcast %17 : vector<1x64xf32> to vector<8x64xf32>
    %19 = arith.addf %16, %18 : vector<8x64xf32>
    %cst_16 = arith.constant 0.000000e+00 : f32
    %20 = vector.broadcast %cst_16 : f32 to vector<8x64xf32>
    %21 = arith.maximumf %19, %20 : vector<8x64xf32>
    %c0_17 = arith.constant 0 : index
    %c0_18 = arith.constant 0 : index
    %22 = vector.load %arg8[%c0_17, %c0_18] : memref<64x64xf32, #tpu.memory_space<vmem>>, vector<64x64xf32>
    %cst_19 = arith.constant dense<0.000000e+00> : vector<8x64xf32>
    %23 = tpu.matmul %21, %22, %cst_19 {dimension_numbers = #tpu.dot_dimension_numbers<[1], [0], [0], [1], [0, 0, 1, 1], [], []>} : vector<8x64xf32>, vector<64x64xf32>, vector<8x64xf32> -> vector<8x64xf32>
    %c0_20 = arith.constant 0 : index
    %c0_21 = arith.constant 0 : index
    %24 = vector.load %arg6[%c0_20, %c0_21] : memref<1x64xf32, #tpu.memory_space<vmem>>, vector<1x64xf32>
    %25 = vector.broadcast %24 : vector<1x64xf32> to vector<8x64xf32>
    %26 = arith.addf %23, %25 : vector<8x64xf32>
    %27 = vector.extract_strided_slice %26 {offsets = [0, 0], sizes = [8, 32], strides = [1, 1]} : vector<8x64xf32> to vector<8x32xf32>
    %28 = vector.extract_strided_slice %26 {offsets = [0, 32], sizes = [8, 32], strides = [1, 1]} : vector<8x64xf32> to vector<8x32xf32>
    %c0_22 = arith.constant 0 : index
    %c0_23 = arith.constant 0 : index
    %29 = vector.load %arg11[%c0_22, %c0_23] : memref<16x64xf32, #tpu.memory_space<vmem>>, vector<16x64xf32>
    %cst_24 = arith.constant dense<0.000000e+00> : vector<8x64xf32>
    %30 = tpu.matmul %0, %29, %cst_24 {dimension_numbers = #tpu.dot_dimension_numbers<[1], [0], [0], [1], [0, 0, 1, 1], [], []>} : vector<8x16xf32>, vector<16x64xf32>, vector<8x64xf32> -> vector<8x64xf32>
    %c0_25 = arith.constant 0 : index
    %c0_26 = arith.constant 0 : index
    %31 = vector.load %arg9[%c0_25, %c0_26] : memref<1x64xf32, #tpu.memory_space<vmem>>, vector<1x64xf32>
    %32 = vector.broadcast %31 : vector<1x64xf32> to vector<8x64xf32>
    %33 = arith.addf %30, %32 : vector<8x64xf32>
    %cst_27 = arith.constant 0.000000e+00 : f32
    %34 = vector.broadcast %cst_27 : f32 to vector<8x64xf32>
    %35 = arith.maximumf %33, %34 : vector<8x64xf32>
    %c0_28 = arith.constant 0 : index
    %c0_29 = arith.constant 0 : index
    %36 = vector.load %arg12[%c0_28, %c0_29] : memref<64x64xf32, #tpu.memory_space<vmem>>, vector<64x64xf32>
    %cst_30 = arith.constant dense<0.000000e+00> : vector<8x64xf32>
    %37 = tpu.matmul %35, %36, %cst_30 {dimension_numbers = #tpu.dot_dimension_numbers<[1], [0], [0], [1], [0, 0, 1, 1], [], []>} : vector<8x64xf32>, vector<64x64xf32>, vector<8x64xf32> -> vector<8x64xf32>
    %c0_31 = arith.constant 0 : index
    %c0_32 = arith.constant 0 : index
    %38 = vector.load %arg10[%c0_31, %c0_32] : memref<1x64xf32, #tpu.memory_space<vmem>>, vector<1x64xf32>
    %39 = vector.broadcast %38 : vector<1x64xf32> to vector<8x64xf32>
    %40 = arith.addf %37, %39 : vector<8x64xf32>
    %41 = vector.extract_strided_slice %40 {offsets = [0, 0], sizes = [8, 32], strides = [1, 1]} : vector<8x64xf32> to vector<8x32xf32>
    %42 = vector.extract_strided_slice %40 {offsets = [0, 32], sizes = [8, 32], strides = [1, 1]} : vector<8x64xf32> to vector<8x32xf32>
    %c0_33 = arith.constant 0 : index
    %c0_34 = arith.constant 0 : index
    %43 = vector.load %arg16[%c0_33, %c0_34] : memref<16x4xf32, #tpu.memory_space<vmem>>, vector<16x4xf32>
    %cst_35 = arith.constant dense<0.000000e+00> : vector<8x4xf32>
    %44 = tpu.matmul %0, %43, %cst_35 {dimension_numbers = #tpu.dot_dimension_numbers<[1], [0], [0], [1], [0, 0, 1, 1], [], []>} : vector<8x16xf32>, vector<16x4xf32>, vector<8x4xf32> -> vector<8x4xf32>
    %c0_36 = arith.constant 0 : index
    %c0_37 = arith.constant 0 : index
    %45 = vector.load %arg15[%c0_36, %c0_37] : memref<1x4xf32, #tpu.memory_space<vmem>>, vector<1x4xf32>
    %46 = vector.broadcast %45 : vector<1x4xf32> to vector<8x4xf32>
    %47 = arith.addf %44, %46 : vector<8x4xf32>
    %cst_38 = arith.constant dense<0xFF800000> : vector<8xf32>
    %48 = vector.multi_reduction <maximumf>, %47, %cst_38 [1] : vector<8x4xf32> to vector<8xf32>
    %49 = vector.shape_cast %48 : vector<8xf32> to vector<8x1xf32>
    %50 = vector.broadcast %49 : vector<8x1xf32> to vector<8x4xf32>
    %51 = arith.subf %47, %50 : vector<8x4xf32>
    %52 = math.exp %51 : vector<8x4xf32>
    %cst_39 = arith.constant dense<0.000000e+00> : vector<8xf32>
    %53 = vector.multi_reduction <add>, %52, %cst_39 [1] : vector<8x4xf32> to vector<8xf32>
    %54 = vector.shape_cast %53 : vector<8xf32> to vector<8x1xf32>
    %55 = vector.broadcast %54 : vector<8x1xf32> to vector<8x4xf32>
    %56 = arith.divf %52, %55 : vector<8x4xf32>
    %57 = vector.extract_strided_slice %56 {offsets = [0, 0], sizes = [8, 1], strides = [1, 1]} : vector<8x4xf32> to vector<8x1xf32>
    %58 = vector.broadcast %57 : vector<8x1xf32> to vector<8x32xf32>
    %59 = arith.mulf %27, %58 : vector<8x32xf32>
    %60 = vector.extract_strided_slice %56 {offsets = [0, 1], sizes = [8, 1], strides = [1, 1]} : vector<8x4xf32> to vector<8x1xf32>
    %61 = vector.broadcast %60 : vector<8x1xf32> to vector<8x32xf32>
    %62 = arith.mulf %28, %61 : vector<8x32xf32>
    %63 = arith.addf %59, %62 : vector<8x32xf32>
    %64 = vector.extract_strided_slice %56 {offsets = [0, 2], sizes = [8, 1], strides = [1, 1]} : vector<8x4xf32> to vector<8x1xf32>
    %65 = vector.broadcast %64 : vector<8x1xf32> to vector<8x32xf32>
    %66 = arith.mulf %13, %65 : vector<8x32xf32>
    %67 = arith.addf %63, %66 : vector<8x32xf32>
    %68 = vector.extract_strided_slice %56 {offsets = [0, 3], sizes = [8, 1], strides = [1, 1]} : vector<8x4xf32> to vector<8x1xf32>
    %69 = vector.broadcast %68 : vector<8x1xf32> to vector<8x32xf32>
    %70 = arith.mulf %14, %69 : vector<8x32xf32>
    %71 = arith.addf %67, %70 : vector<8x32xf32>
    %c0_40 = arith.constant 0 : index
    %c0_41 = arith.constant 0 : index
    %72 = vector.load %arg18[%c0_40, %c0_41] : memref<16x4xf32, #tpu.memory_space<vmem>>, vector<16x4xf32>
    %cst_42 = arith.constant dense<0.000000e+00> : vector<8x4xf32>
    %73 = tpu.matmul %0, %72, %cst_42 {dimension_numbers = #tpu.dot_dimension_numbers<[1], [0], [0], [1], [0, 0, 1, 1], [], []>} : vector<8x16xf32>, vector<16x4xf32>, vector<8x4xf32> -> vector<8x4xf32>
    %c0_43 = arith.constant 0 : index
    %c0_44 = arith.constant 0 : index
    %74 = vector.load %arg17[%c0_43, %c0_44] : memref<1x4xf32, #tpu.memory_space<vmem>>, vector<1x4xf32>
    %75 = vector.broadcast %74 : vector<1x4xf32> to vector<8x4xf32>
    %76 = arith.addf %73, %75 : vector<8x4xf32>
    %cst_45 = arith.constant dense<0xFF800000> : vector<8xf32>
    %77 = vector.multi_reduction <maximumf>, %76, %cst_45 [1] : vector<8x4xf32> to vector<8xf32>
    %78 = vector.shape_cast %77 : vector<8xf32> to vector<8x1xf32>
    %79 = vector.broadcast %78 : vector<8x1xf32> to vector<8x4xf32>
    %80 = arith.subf %76, %79 : vector<8x4xf32>
    %81 = math.exp %80 : vector<8x4xf32>
    %cst_46 = arith.constant dense<0.000000e+00> : vector<8xf32>
    %82 = vector.multi_reduction <add>, %81, %cst_46 [1] : vector<8x4xf32> to vector<8xf32>
    %83 = vector.shape_cast %82 : vector<8xf32> to vector<8x1xf32>
    %84 = vector.broadcast %83 : vector<8x1xf32> to vector<8x4xf32>
    %85 = arith.divf %81, %84 : vector<8x4xf32>
    %86 = vector.extract_strided_slice %85 {offsets = [0, 0], sizes = [8, 1], strides = [1, 1]} : vector<8x4xf32> to vector<8x1xf32>
    %87 = vector.broadcast %86 : vector<8x1xf32> to vector<8x32xf32>
    %88 = arith.mulf %41, %87 : vector<8x32xf32>
    %89 = vector.extract_strided_slice %85 {offsets = [0, 1], sizes = [8, 1], strides = [1, 1]} : vector<8x4xf32> to vector<8x1xf32>
    %90 = vector.broadcast %89 : vector<8x1xf32> to vector<8x32xf32>
    %91 = arith.mulf %42, %90 : vector<8x32xf32>
    %92 = arith.addf %88, %91 : vector<8x32xf32>
    %93 = vector.extract_strided_slice %85 {offsets = [0, 2], sizes = [8, 1], strides = [1, 1]} : vector<8x4xf32> to vector<8x1xf32>
    %94 = vector.broadcast %93 : vector<8x1xf32> to vector<8x32xf32>
    %95 = arith.mulf %13, %94 : vector<8x32xf32>
    %96 = arith.addf %92, %95 : vector<8x32xf32>
    %97 = vector.extract_strided_slice %85 {offsets = [0, 3], sizes = [8, 1], strides = [1, 1]} : vector<8x4xf32> to vector<8x1xf32>
    %98 = vector.broadcast %97 : vector<8x1xf32> to vector<8x32xf32>
    %99 = arith.mulf %14, %98 : vector<8x32xf32>
    %100 = arith.addf %96, %99 : vector<8x32xf32>
    %c0_47 = arith.constant 0 : index
    %c0_48 = arith.constant 0 : index
    %101 = vector.load %arg14[%c0_47, %c0_48] : memref<16x6xf32, #tpu.memory_space<vmem>>, vector<16x6xf32>
    %cst_49 = arith.constant dense<0.000000e+00> : vector<8x6xf32>
    %102 = tpu.matmul %0, %101, %cst_49 {dimension_numbers = #tpu.dot_dimension_numbers<[1], [0], [0], [1], [0, 0, 1, 1], [], []>} : vector<8x16xf32>, vector<16x6xf32>, vector<8x6xf32> -> vector<8x6xf32>
    %c0_50 = arith.constant 0 : index
    %c0_51 = arith.constant 0 : index
    %103 = vector.load %arg13[%c0_50, %c0_51] : memref<1x6xf32, #tpu.memory_space<vmem>>, vector<1x6xf32>
    %104 = vector.broadcast %103 : vector<1x6xf32> to vector<8x6xf32>
    %105 = arith.addf %102, %104 : vector<8x6xf32>
    %cst_52 = arith.constant dense<0xFF800000> : vector<8xf32>
    %106 = vector.multi_reduction <maximumf>, %105, %cst_52 [1] : vector<8x6xf32> to vector<8xf32>
    %107 = vector.shape_cast %106 : vector<8xf32> to vector<8x1xf32>
    %108 = vector.broadcast %107 : vector<8x1xf32> to vector<8x6xf32>
    %109 = arith.subf %105, %108 : vector<8x6xf32>
    %110 = math.exp %109 : vector<8x6xf32>
    %cst_53 = arith.constant dense<0.000000e+00> : vector<8xf32>
    %111 = vector.multi_reduction <add>, %110, %cst_53 [1] : vector<8x6xf32> to vector<8xf32>
    %112 = vector.shape_cast %111 : vector<8xf32> to vector<8x1xf32>
    %113 = vector.broadcast %112 : vector<8x1xf32> to vector<8x6xf32>
    %114 = arith.divf %110, %113 : vector<8x6xf32>
    %115 = vector.extract_strided_slice %114 {offsets = [0, 0], sizes = [8, 1], strides = [1, 1]} : vector<8x6xf32> to vector<8x1xf32>
    %116 = vector.broadcast %115 : vector<8x1xf32> to vector<8x32xf32>
    %117 = arith.mulf %27, %116 : vector<8x32xf32>
    %118 = vector.extract_strided_slice %114 {offsets = [0, 1], sizes = [8, 1], strides = [1, 1]} : vector<8x6xf32> to vector<8x1xf32>
    %119 = vector.broadcast %118 : vector<8x1xf32> to vector<8x32xf32>
    %120 = arith.mulf %28, %119 : vector<8x32xf32>
    %121 = arith.addf %117, %120 : vector<8x32xf32>
    %122 = vector.extract_strided_slice %114 {offsets = [0, 2], sizes = [8, 1], strides = [1, 1]} : vector<8x6xf32> to vector<8x1xf32>
    %123 = vector.broadcast %122 : vector<8x1xf32> to vector<8x32xf32>
    %124 = arith.mulf %41, %123 : vector<8x32xf32>
    %125 = arith.addf %121, %124 : vector<8x32xf32>
    %126 = vector.extract_strided_slice %114 {offsets = [0, 3], sizes = [8, 1], strides = [1, 1]} : vector<8x6xf32> to vector<8x1xf32>
    %127 = vector.broadcast %126 : vector<8x1xf32> to vector<8x32xf32>
    %128 = arith.mulf %42, %127 : vector<8x32xf32>
    %129 = arith.addf %125, %128 : vector<8x32xf32>
    %130 = vector.extract_strided_slice %114 {offsets = [0, 4], sizes = [8, 1], strides = [1, 1]} : vector<8x6xf32> to vector<8x1xf32>
    %131 = vector.broadcast %130 : vector<8x1xf32> to vector<8x32xf32>
    %132 = arith.mulf %13, %131 : vector<8x32xf32>
    %133 = arith.addf %129, %132 : vector<8x32xf32>
    %134 = vector.extract_strided_slice %114 {offsets = [0, 5], sizes = [8, 1], strides = [1, 1]} : vector<8x6xf32> to vector<8x1xf32>
    %135 = vector.broadcast %134 : vector<8x1xf32> to vector<8x32xf32>
    %136 = arith.mulf %14, %135 : vector<8x32xf32>
    %137 = arith.addf %133, %136 : vector<8x32xf32>
    %c0_54 = arith.constant 0 : index
    %c0_55 = arith.constant 0 : index
    %138 = vector.load %arg21[%c0_54, %c0_55] : memref<32x64xf32, #tpu.memory_space<vmem>>, vector<32x64xf32>
    %cst_56 = arith.constant dense<0.000000e+00> : vector<8x64xf32>
    %139 = tpu.matmul %137, %138, %cst_56 {dimension_numbers = #tpu.dot_dimension_numbers<[1], [0], [0], [1], [0, 0, 1, 1], [], []>} : vector<8x32xf32>, vector<32x64xf32>, vector<8x64xf32> -> vector<8x64xf32>
    %c0_57 = arith.constant 0 : index
    %c0_58 = arith.constant 0 : index
    %140 = vector.load %arg19[%c0_57, %c0_58] : memref<1x64xf32, #tpu.memory_space<vmem>>, vector<1x64xf32>
    %141 = vector.broadcast %140 : vector<1x64xf32> to vector<8x64xf32>
    %142 = arith.addf %139, %141 : vector<8x64xf32>
    %cst_59 = arith.constant 0.000000e+00 : f32
    %143 = vector.broadcast %cst_59 : f32 to vector<8x64xf32>
    %144 = arith.maximumf %142, %143 : vector<8x64xf32>
    %c0_60 = arith.constant 0 : index
    %c0_61 = arith.constant 0 : index
    %145 = vector.load %arg22[%c0_60, %c0_61] : memref<64x64xf32, #tpu.memory_space<vmem>>, vector<64x64xf32>
    %cst_62 = arith.constant dense<0.000000e+00> : vector<8x64xf32>
    %146 = tpu.matmul %144, %145, %cst_62 {dimension_numbers = #tpu.dot_dimension_numbers<[1], [0], [0], [1], [0, 0, 1, 1], [], []>} : vector<8x64xf32>, vector<64x64xf32>, vector<8x64xf32> -> vector<8x64xf32>
    %c0_63 = arith.constant 0 : index
    %c0_64 = arith.constant 0 : index
    %147 = vector.load %arg20[%c0_63, %c0_64] : memref<1x64xf32, #tpu.memory_space<vmem>>, vector<1x64xf32>
    %148 = vector.broadcast %147 : vector<1x64xf32> to vector<8x64xf32>
    %149 = arith.addf %146, %148 : vector<8x64xf32>
    %150 = vector.extract_strided_slice %149 {offsets = [0, 0], sizes = [8, 32], strides = [1, 1]} : vector<8x64xf32> to vector<8x32xf32>
    %151 = vector.extract_strided_slice %149 {offsets = [0, 32], sizes = [8, 32], strides = [1, 1]} : vector<8x64xf32> to vector<8x32xf32>
    %c0_65 = arith.constant 0 : index
    %c0_66 = arith.constant 0 : index
    %152 = vector.load %arg25[%c0_65, %c0_66] : memref<32x64xf32, #tpu.memory_space<vmem>>, vector<32x64xf32>
    %cst_67 = arith.constant dense<0.000000e+00> : vector<8x64xf32>
    %153 = tpu.matmul %71, %152, %cst_67 {dimension_numbers = #tpu.dot_dimension_numbers<[1], [0], [0], [1], [0, 0, 1, 1], [], []>} : vector<8x32xf32>, vector<32x64xf32>, vector<8x64xf32> -> vector<8x64xf32>
    %c0_68 = arith.constant 0 : index
    %c0_69 = arith.constant 0 : index
    %154 = vector.load %arg23[%c0_68, %c0_69] : memref<1x64xf32, #tpu.memory_space<vmem>>, vector<1x64xf32>
    %155 = vector.broadcast %154 : vector<1x64xf32> to vector<8x64xf32>
    %156 = arith.addf %153, %155 : vector<8x64xf32>
    %cst_70 = arith.constant 0.000000e+00 : f32
    %157 = vector.broadcast %cst_70 : f32 to vector<8x64xf32>
    %158 = arith.maximumf %156, %157 : vector<8x64xf32>
    %c0_71 = arith.constant 0 : index
    %c0_72 = arith.constant 0 : index
    %159 = vector.load %arg26[%c0_71, %c0_72] : memref<64x64xf32, #tpu.memory_space<vmem>>, vector<64x64xf32>
    %cst_73 = arith.constant dense<0.000000e+00> : vector<8x64xf32>
    %160 = tpu.matmul %158, %159, %cst_73 {dimension_numbers = #tpu.dot_dimension_numbers<[1], [0], [0], [1], [0, 0, 1, 1], [], []>} : vector<8x64xf32>, vector<64x64xf32>, vector<8x64xf32> -> vector<8x64xf32>
    %c0_74 = arith.constant 0 : index
    %c0_75 = arith.constant 0 : index
    %161 = vector.load %arg24[%c0_74, %c0_75] : memref<1x64xf32, #tpu.memory_space<vmem>>, vector<1x64xf32>
    %162 = vector.broadcast %161 : vector<1x64xf32> to vector<8x64xf32>
    %163 = arith.addf %160, %162 : vector<8x64xf32>
    %164 = vector.extract_strided_slice %163 {offsets = [0, 0], sizes = [8, 32], strides = [1, 1]} : vector<8x64xf32> to vector<8x32xf32>
    %165 = vector.extract_strided_slice %163 {offsets = [0, 32], sizes = [8, 32], strides = [1, 1]} : vector<8x64xf32> to vector<8x32xf32>
    %c0_76 = arith.constant 0 : index
    %c0_77 = arith.constant 0 : index
    %166 = vector.load %arg29[%c0_76, %c0_77] : memref<32x64xf32, #tpu.memory_space<vmem>>, vector<32x64xf32>
    %cst_78 = arith.constant dense<0.000000e+00> : vector<8x64xf32>
    %167 = tpu.matmul %100, %166, %cst_78 {dimension_numbers = #tpu.dot_dimension_numbers<[1], [0], [0], [1], [0, 0, 1, 1], [], []>} : vector<8x32xf32>, vector<32x64xf32>, vector<8x64xf32> -> vector<8x64xf32>
    %c0_79 = arith.constant 0 : index
    %c0_80 = arith.constant 0 : index
    %168 = vector.load %arg27[%c0_79, %c0_80] : memref<1x64xf32, #tpu.memory_space<vmem>>, vector<1x64xf32>
    %169 = vector.broadcast %168 : vector<1x64xf32> to vector<8x64xf32>
    %170 = arith.addf %167, %169 : vector<8x64xf32>
    %cst_81 = arith.constant 0.000000e+00 : f32
    %171 = vector.broadcast %cst_81 : f32 to vector<8x64xf32>
    %172 = arith.maximumf %170, %171 : vector<8x64xf32>
    %c0_82 = arith.constant 0 : index
    %c0_83 = arith.constant 0 : index
    %173 = vector.load %arg30[%c0_82, %c0_83] : memref<64x64xf32, #tpu.memory_space<vmem>>, vector<64x64xf32>
    %cst_84 = arith.constant dense<0.000000e+00> : vector<8x64xf32>
    %174 = tpu.matmul %172, %173, %cst_84 {dimension_numbers = #tpu.dot_dimension_numbers<[1], [0], [0], [1], [0, 0, 1, 1], [], []>} : vector<8x64xf32>, vector<64x64xf32>, vector<8x64xf32> -> vector<8x64xf32>
    %c0_85 = arith.constant 0 : index
    %c0_86 = arith.constant 0 : index
    %175 = vector.load %arg28[%c0_85, %c0_86] : memref<1x64xf32, #tpu.memory_space<vmem>>, vector<1x64xf32>
    %176 = vector.broadcast %175 : vector<1x64xf32> to vector<8x64xf32>
    %177 = arith.addf %174, %176 : vector<8x64xf32>
    %178 = vector.extract_strided_slice %177 {offsets = [0, 0], sizes = [8, 32], strides = [1, 1]} : vector<8x64xf32> to vector<8x32xf32>
    %179 = vector.extract_strided_slice %177 {offsets = [0, 32], sizes = [8, 32], strides = [1, 1]} : vector<8x64xf32> to vector<8x32xf32>
    %c0_87 = arith.constant 0 : index
    %c0_88 = arith.constant 0 : index
    %180 = vector.load %arg34[%c0_87, %c0_88] : memref<32x4xf32, #tpu.memory_space<vmem>>, vector<32x4xf32>
    %cst_89 = arith.constant dense<0.000000e+00> : vector<8x4xf32>
    %181 = tpu.matmul %71, %180, %cst_89 {dimension_numbers = #tpu.dot_dimension_numbers<[1], [0], [0], [1], [0, 0, 1, 1], [], []>} : vector<8x32xf32>, vector<32x4xf32>, vector<8x4xf32> -> vector<8x4xf32>
    %c0_90 = arith.constant 0 : index
    %c0_91 = arith.constant 0 : index
    %182 = vector.load %arg33[%c0_90, %c0_91] : memref<1x4xf32, #tpu.memory_space<vmem>>, vector<1x4xf32>
    %183 = vector.broadcast %182 : vector<1x4xf32> to vector<8x4xf32>
    %184 = arith.addf %181, %183 : vector<8x4xf32>
    %cst_92 = arith.constant dense<0xFF800000> : vector<8xf32>
    %185 = vector.multi_reduction <maximumf>, %184, %cst_92 [1] : vector<8x4xf32> to vector<8xf32>
    %186 = vector.shape_cast %185 : vector<8xf32> to vector<8x1xf32>
    %187 = vector.broadcast %186 : vector<8x1xf32> to vector<8x4xf32>
    %188 = arith.subf %184, %187 : vector<8x4xf32>
    %189 = math.exp %188 : vector<8x4xf32>
    %cst_93 = arith.constant dense<0.000000e+00> : vector<8xf32>
    %190 = vector.multi_reduction <add>, %189, %cst_93 [1] : vector<8x4xf32> to vector<8xf32>
    %191 = vector.shape_cast %190 : vector<8xf32> to vector<8x1xf32>
    %192 = vector.broadcast %191 : vector<8x1xf32> to vector<8x4xf32>
    %193 = arith.divf %189, %192 : vector<8x4xf32>
    %194 = vector.extract_strided_slice %193 {offsets = [0, 0], sizes = [8, 1], strides = [1, 1]} : vector<8x4xf32> to vector<8x1xf32>
    %195 = vector.broadcast %194 : vector<8x1xf32> to vector<8x32xf32>
    %196 = arith.mulf %164, %195 : vector<8x32xf32>
    %197 = vector.extract_strided_slice %193 {offsets = [0, 1], sizes = [8, 1], strides = [1, 1]} : vector<8x4xf32> to vector<8x1xf32>
    %198 = vector.broadcast %197 : vector<8x1xf32> to vector<8x32xf32>
    %199 = arith.mulf %165, %198 : vector<8x32xf32>
    %200 = arith.addf %196, %199 : vector<8x32xf32>
    %201 = vector.extract_strided_slice %193 {offsets = [0, 2], sizes = [8, 1], strides = [1, 1]} : vector<8x4xf32> to vector<8x1xf32>
    %202 = vector.broadcast %201 : vector<8x1xf32> to vector<8x32xf32>
    %203 = arith.mulf %150, %202 : vector<8x32xf32>
    %204 = arith.addf %200, %203 : vector<8x32xf32>
    %205 = vector.extract_strided_slice %193 {offsets = [0, 3], sizes = [8, 1], strides = [1, 1]} : vector<8x4xf32> to vector<8x1xf32>
    %206 = vector.broadcast %205 : vector<8x1xf32> to vector<8x32xf32>
    %207 = arith.mulf %151, %206 : vector<8x32xf32>
    %208 = arith.addf %204, %207 : vector<8x32xf32>
    %c0_94 = arith.constant 0 : index
    %c0_95 = arith.constant 0 : index
    %209 = vector.load %arg36[%c0_94, %c0_95] : memref<32x4xf32, #tpu.memory_space<vmem>>, vector<32x4xf32>
    %cst_96 = arith.constant dense<0.000000e+00> : vector<8x4xf32>
    %210 = tpu.matmul %100, %209, %cst_96 {dimension_numbers = #tpu.dot_dimension_numbers<[1], [0], [0], [1], [0, 0, 1, 1], [], []>} : vector<8x32xf32>, vector<32x4xf32>, vector<8x4xf32> -> vector<8x4xf32>
    %c0_97 = arith.constant 0 : index
    %c0_98 = arith.constant 0 : index
    %211 = vector.load %arg35[%c0_97, %c0_98] : memref<1x4xf32, #tpu.memory_space<vmem>>, vector<1x4xf32>
    %212 = vector.broadcast %211 : vector<1x4xf32> to vector<8x4xf32>
    %213 = arith.addf %210, %212 : vector<8x4xf32>
    %cst_99 = arith.constant dense<0xFF800000> : vector<8xf32>
    %214 = vector.multi_reduction <maximumf>, %213, %cst_99 [1] : vector<8x4xf32> to vector<8xf32>
    %215 = vector.shape_cast %214 : vector<8xf32> to vector<8x1xf32>
    %216 = vector.broadcast %215 : vector<8x1xf32> to vector<8x4xf32>
    %217 = arith.subf %213, %216 : vector<8x4xf32>
    %218 = math.exp %217 : vector<8x4xf32>
    %cst_100 = arith.constant dense<0.000000e+00> : vector<8xf32>
    %219 = vector.multi_reduction <add>, %218, %cst_100 [1] : vector<8x4xf32> to vector<8xf32>
    %220 = vector.shape_cast %219 : vector<8xf32> to vector<8x1xf32>
    %221 = vector.broadcast %220 : vector<8x1xf32> to vector<8x4xf32>
    %222 = arith.divf %218, %221 : vector<8x4xf32>
    %223 = vector.extract_strided_slice %222 {offsets = [0, 0], sizes = [8, 1], strides = [1, 1]} : vector<8x4xf32> to vector<8x1xf32>
    %224 = vector.broadcast %223 : vector<8x1xf32> to vector<8x32xf32>
    %225 = arith.mulf %178, %224 : vector<8x32xf32>
    %226 = vector.extract_strided_slice %222 {offsets = [0, 1], sizes = [8, 1], strides = [1, 1]} : vector<8x4xf32> to vector<8x1xf32>
    %227 = vector.broadcast %226 : vector<8x1xf32> to vector<8x32xf32>
    %228 = arith.mulf %179, %227 : vector<8x32xf32>
    %229 = arith.addf %225, %228 : vector<8x32xf32>
    %230 = vector.extract_strided_slice %222 {offsets = [0, 2], sizes = [8, 1], strides = [1, 1]} : vector<8x4xf32> to vector<8x1xf32>
    %231 = vector.broadcast %230 : vector<8x1xf32> to vector<8x32xf32>
    %232 = arith.mulf %150, %231 : vector<8x32xf32>
    %233 = arith.addf %229, %232 : vector<8x32xf32>
    %234 = vector.extract_strided_slice %222 {offsets = [0, 3], sizes = [8, 1], strides = [1, 1]} : vector<8x4xf32> to vector<8x1xf32>
    %235 = vector.broadcast %234 : vector<8x1xf32> to vector<8x32xf32>
    %236 = arith.mulf %151, %235 : vector<8x32xf32>
    %237 = arith.addf %233, %236 : vector<8x32xf32>
    %c0_101 = arith.constant 0 : index
    %c0_102 = arith.constant 0 : index
    %238 = vector.load %arg32[%c0_101, %c0_102] : memref<32x6xf32, #tpu.memory_space<vmem>>, vector<32x6xf32>
    %cst_103 = arith.constant dense<0.000000e+00> : vector<8x6xf32>
    %239 = tpu.matmul %137, %238, %cst_103 {dimension_numbers = #tpu.dot_dimension_numbers<[1], [0], [0], [1], [0, 0, 1, 1], [], []>} : vector<8x32xf32>, vector<32x6xf32>, vector<8x6xf32> -> vector<8x6xf32>
    %c0_104 = arith.constant 0 : index
    %c0_105 = arith.constant 0 : index
    %240 = vector.load %arg31[%c0_104, %c0_105] : memref<1x6xf32, #tpu.memory_space<vmem>>, vector<1x6xf32>
    %241 = vector.broadcast %240 : vector<1x6xf32> to vector<8x6xf32>
    %242 = arith.addf %239, %241 : vector<8x6xf32>
    %cst_106 = arith.constant dense<0xFF800000> : vector<8xf32>
    %243 = vector.multi_reduction <maximumf>, %242, %cst_106 [1] : vector<8x6xf32> to vector<8xf32>
    %244 = vector.shape_cast %243 : vector<8xf32> to vector<8x1xf32>
    %245 = vector.broadcast %244 : vector<8x1xf32> to vector<8x6xf32>
    %246 = arith.subf %242, %245 : vector<8x6xf32>
    %247 = math.exp %246 : vector<8x6xf32>
    %cst_107 = arith.constant dense<0.000000e+00> : vector<8xf32>
    %248 = vector.multi_reduction <add>, %247, %cst_107 [1] : vector<8x6xf32> to vector<8xf32>
    %249 = vector.shape_cast %248 : vector<8xf32> to vector<8x1xf32>
    %250 = vector.broadcast %249 : vector<8x1xf32> to vector<8x6xf32>
    %251 = arith.divf %247, %250 : vector<8x6xf32>
    %252 = vector.extract_strided_slice %251 {offsets = [0, 0], sizes = [8, 1], strides = [1, 1]} : vector<8x6xf32> to vector<8x1xf32>
    %253 = vector.broadcast %252 : vector<8x1xf32> to vector<8x32xf32>
    %254 = arith.mulf %164, %253 : vector<8x32xf32>
    %255 = vector.extract_strided_slice %251 {offsets = [0, 1], sizes = [8, 1], strides = [1, 1]} : vector<8x6xf32> to vector<8x1xf32>
    %256 = vector.broadcast %255 : vector<8x1xf32> to vector<8x32xf32>
    %257 = arith.mulf %165, %256 : vector<8x32xf32>
    %258 = arith.addf %254, %257 : vector<8x32xf32>
    %259 = vector.extract_strided_slice %251 {offsets = [0, 2], sizes = [8, 1], strides = [1, 1]} : vector<8x6xf32> to vector<8x1xf32>
    %260 = vector.broadcast %259 : vector<8x1xf32> to vector<8x32xf32>
    %261 = arith.mulf %178, %260 : vector<8x32xf32>
    %262 = arith.addf %258, %261 : vector<8x32xf32>
    %263 = vector.extract_strided_slice %251 {offsets = [0, 3], sizes = [8, 1], strides = [1, 1]} : vector<8x6xf32> to vector<8x1xf32>
    %264 = vector.broadcast %263 : vector<8x1xf32> to vector<8x32xf32>
    %265 = arith.mulf %179, %264 : vector<8x32xf32>
    %266 = arith.addf %262, %265 : vector<8x32xf32>
    %267 = vector.extract_strided_slice %251 {offsets = [0, 4], sizes = [8, 1], strides = [1, 1]} : vector<8x6xf32> to vector<8x1xf32>
    %268 = vector.broadcast %267 : vector<8x1xf32> to vector<8x32xf32>
    %269 = arith.mulf %150, %268 : vector<8x32xf32>
    %270 = arith.addf %266, %269 : vector<8x32xf32>
    %271 = vector.extract_strided_slice %251 {offsets = [0, 5], sizes = [8, 1], strides = [1, 1]} : vector<8x6xf32> to vector<8x1xf32>
    %272 = vector.broadcast %271 : vector<8x1xf32> to vector<8x32xf32>
    %273 = arith.mulf %151, %272 : vector<8x32xf32>
    %274 = arith.addf %270, %273 : vector<8x32xf32>
    %c0_108 = arith.constant 0 : index
    %c0_109 = arith.constant 0 : index
    %275 = vector.load %arg39[%c0_108, %c0_109] : memref<32x64xf32, #tpu.memory_space<vmem>>, vector<32x64xf32>
    %cst_110 = arith.constant dense<0.000000e+00> : vector<8x64xf32>
    %276 = tpu.matmul %274, %275, %cst_110 {dimension_numbers = #tpu.dot_dimension_numbers<[1], [0], [0], [1], [0, 0, 1, 1], [], []>} : vector<8x32xf32>, vector<32x64xf32>, vector<8x64xf32> -> vector<8x64xf32>
    %c0_111 = arith.constant 0 : index
    %c0_112 = arith.constant 0 : index
    %277 = vector.load %arg37[%c0_111, %c0_112] : memref<1x64xf32, #tpu.memory_space<vmem>>, vector<1x64xf32>
    %278 = vector.broadcast %277 : vector<1x64xf32> to vector<8x64xf32>
    %279 = arith.addf %276, %278 : vector<8x64xf32>
    %cst_113 = arith.constant 0.000000e+00 : f32
    %280 = vector.broadcast %cst_113 : f32 to vector<8x64xf32>
    %281 = arith.maximumf %279, %280 : vector<8x64xf32>
    %c0_114 = arith.constant 0 : index
    %c0_115 = arith.constant 0 : index
    %282 = vector.load %arg40[%c0_114, %c0_115] : memref<64x64xf32, #tpu.memory_space<vmem>>, vector<64x64xf32>
    %cst_116 = arith.constant dense<0.000000e+00> : vector<8x64xf32>
    %283 = tpu.matmul %281, %282, %cst_116 {dimension_numbers = #tpu.dot_dimension_numbers<[1], [0], [0], [1], [0, 0, 1, 1], [], []>} : vector<8x64xf32>, vector<64x64xf32>, vector<8x64xf32> -> vector<8x64xf32>
    %c0_117 = arith.constant 0 : index
    %c0_118 = arith.constant 0 : index
    %284 = vector.load %arg38[%c0_117, %c0_118] : memref<1x64xf32, #tpu.memory_space<vmem>>, vector<1x64xf32>
    %285 = vector.broadcast %284 : vector<1x64xf32> to vector<8x64xf32>
    %286 = arith.addf %283, %285 : vector<8x64xf32>
    %287 = vector.extract_strided_slice %286 {offsets = [0, 0], sizes = [8, 32], strides = [1, 1]} : vector<8x64xf32> to vector<8x32xf32>
    %288 = vector.extract_strided_slice %286 {offsets = [0, 32], sizes = [8, 32], strides = [1, 1]} : vector<8x64xf32> to vector<8x32xf32>
    %c0_119 = arith.constant 0 : index
    %c0_120 = arith.constant 0 : index
    %289 = vector.load %arg43[%c0_119, %c0_120] : memref<32x64xf32, #tpu.memory_space<vmem>>, vector<32x64xf32>
    %cst_121 = arith.constant dense<0.000000e+00> : vector<8x64xf32>
    %290 = tpu.matmul %208, %289, %cst_121 {dimension_numbers = #tpu.dot_dimension_numbers<[1], [0], [0], [1], [0, 0, 1, 1], [], []>} : vector<8x32xf32>, vector<32x64xf32>, vector<8x64xf32> -> vector<8x64xf32>
    %c0_122 = arith.constant 0 : index
    %c0_123 = arith.constant 0 : index
    %291 = vector.load %arg41[%c0_122, %c0_123] : memref<1x64xf32, #tpu.memory_space<vmem>>, vector<1x64xf32>
    %292 = vector.broadcast %291 : vector<1x64xf32> to vector<8x64xf32>
    %293 = arith.addf %290, %292 : vector<8x64xf32>
    %cst_124 = arith.constant 0.000000e+00 : f32
    %294 = vector.broadcast %cst_124 : f32 to vector<8x64xf32>
    %295 = arith.maximumf %293, %294 : vector<8x64xf32>
    %c0_125 = arith.constant 0 : index
    %c0_126 = arith.constant 0 : index
    %296 = vector.load %arg44[%c0_125, %c0_126] : memref<64x64xf32, #tpu.memory_space<vmem>>, vector<64x64xf32>
    %cst_127 = arith.constant dense<0.000000e+00> : vector<8x64xf32>
    %297 = tpu.matmul %295, %296, %cst_127 {dimension_numbers = #tpu.dot_dimension_numbers<[1], [0], [0], [1], [0, 0, 1, 1], [], []>} : vector<8x64xf32>, vector<64x64xf32>, vector<8x64xf32> -> vector<8x64xf32>
    %c0_128 = arith.constant 0 : index
    %c0_129 = arith.constant 0 : index
    %298 = vector.load %arg42[%c0_128, %c0_129] : memref<1x64xf32, #tpu.memory_space<vmem>>, vector<1x64xf32>
    %299 = vector.broadcast %298 : vector<1x64xf32> to vector<8x64xf32>
    %300 = arith.addf %297, %299 : vector<8x64xf32>
    %301 = vector.extract_strided_slice %300 {offsets = [0, 0], sizes = [8, 32], strides = [1, 1]} : vector<8x64xf32> to vector<8x32xf32>
    %302 = vector.extract_strided_slice %300 {offsets = [0, 32], sizes = [8, 32], strides = [1, 1]} : vector<8x64xf32> to vector<8x32xf32>
    %c0_130 = arith.constant 0 : index
    %c0_131 = arith.constant 0 : index
    %303 = vector.load %arg47[%c0_130, %c0_131] : memref<32x64xf32, #tpu.memory_space<vmem>>, vector<32x64xf32>
    %cst_132 = arith.constant dense<0.000000e+00> : vector<8x64xf32>
    %304 = tpu.matmul %237, %303, %cst_132 {dimension_numbers = #tpu.dot_dimension_numbers<[1], [0], [0], [1], [0, 0, 1, 1], [], []>} : vector<8x32xf32>, vector<32x64xf32>, vector<8x64xf32> -> vector<8x64xf32>
    %c0_133 = arith.constant 0 : index
    %c0_134 = arith.constant 0 : index
    %305 = vector.load %arg45[%c0_133, %c0_134] : memref<1x64xf32, #tpu.memory_space<vmem>>, vector<1x64xf32>
    %306 = vector.broadcast %305 : vector<1x64xf32> to vector<8x64xf32>
    %307 = arith.addf %304, %306 : vector<8x64xf32>
    %cst_135 = arith.constant 0.000000e+00 : f32
    %308 = vector.broadcast %cst_135 : f32 to vector<8x64xf32>
    %309 = arith.maximumf %307, %308 : vector<8x64xf32>
    %c0_136 = arith.constant 0 : index
    %c0_137 = arith.constant 0 : index
    %310 = vector.load %arg48[%c0_136, %c0_137] : memref<64x64xf32, #tpu.memory_space<vmem>>, vector<64x64xf32>
    %cst_138 = arith.constant dense<0.000000e+00> : vector<8x64xf32>
    %311 = tpu.matmul %309, %310, %cst_138 {dimension_numbers = #tpu.dot_dimension_numbers<[1], [0], [0], [1], [0, 0, 1, 1], [], []>} : vector<8x64xf32>, vector<64x64xf32>, vector<8x64xf32> -> vector<8x64xf32>
    %c0_139 = arith.constant 0 : index
    %c0_140 = arith.constant 0 : index
    %312 = vector.load %arg46[%c0_139, %c0_140] : memref<1x64xf32, #tpu.memory_space<vmem>>, vector<1x64xf32>
    %313 = vector.broadcast %312 : vector<1x64xf32> to vector<8x64xf32>
    %314 = arith.addf %311, %313 : vector<8x64xf32>
    %315 = vector.extract_strided_slice %314 {offsets = [0, 0], sizes = [8, 32], strides = [1, 1]} : vector<8x64xf32> to vector<8x32xf32>
    %316 = vector.extract_strided_slice %314 {offsets = [0, 32], sizes = [8, 32], strides = [1, 1]} : vector<8x64xf32> to vector<8x32xf32>
    %c0_141 = arith.constant 0 : index
    %c0_142 = arith.constant 0 : index
    %317 = vector.load %arg52[%c0_141, %c0_142] : memref<32x4xf32, #tpu.memory_space<vmem>>, vector<32x4xf32>
    %cst_143 = arith.constant dense<0.000000e+00> : vector<8x4xf32>
    %318 = tpu.matmul %208, %317, %cst_143 {dimension_numbers = #tpu.dot_dimension_numbers<[1], [0], [0], [1], [0, 0, 1, 1], [], []>} : vector<8x32xf32>, vector<32x4xf32>, vector<8x4xf32> -> vector<8x4xf32>
    %c0_144 = arith.constant 0 : index
    %c0_145 = arith.constant 0 : index
    %319 = vector.load %arg51[%c0_144, %c0_145] : memref<1x4xf32, #tpu.memory_space<vmem>>, vector<1x4xf32>
    %320 = vector.broadcast %319 : vector<1x4xf32> to vector<8x4xf32>
    %321 = arith.addf %318, %320 : vector<8x4xf32>
    %cst_146 = arith.constant dense<0xFF800000> : vector<8xf32>
    %322 = vector.multi_reduction <maximumf>, %321, %cst_146 [1] : vector<8x4xf32> to vector<8xf32>
    %323 = vector.shape_cast %322 : vector<8xf32> to vector<8x1xf32>
    %324 = vector.broadcast %323 : vector<8x1xf32> to vector<8x4xf32>
    %325 = arith.subf %321, %324 : vector<8x4xf32>
    %326 = math.exp %325 : vector<8x4xf32>
    %cst_147 = arith.constant dense<0.000000e+00> : vector<8xf32>
    %327 = vector.multi_reduction <add>, %326, %cst_147 [1] : vector<8x4xf32> to vector<8xf32>
    %328 = vector.shape_cast %327 : vector<8xf32> to vector<8x1xf32>
    %329 = vector.broadcast %328 : vector<8x1xf32> to vector<8x4xf32>
    %330 = arith.divf %326, %329 : vector<8x4xf32>
    %331 = vector.extract_strided_slice %330 {offsets = [0, 0], sizes = [8, 1], strides = [1, 1]} : vector<8x4xf32> to vector<8x1xf32>
    %332 = vector.broadcast %331 : vector<8x1xf32> to vector<8x32xf32>
    %333 = arith.mulf %301, %332 : vector<8x32xf32>
    %334 = vector.extract_strided_slice %330 {offsets = [0, 1], sizes = [8, 1], strides = [1, 1]} : vector<8x4xf32> to vector<8x1xf32>
    %335 = vector.broadcast %334 : vector<8x1xf32> to vector<8x32xf32>
    %336 = arith.mulf %302, %335 : vector<8x32xf32>
    %337 = arith.addf %333, %336 : vector<8x32xf32>
    %338 = vector.extract_strided_slice %330 {offsets = [0, 2], sizes = [8, 1], strides = [1, 1]} : vector<8x4xf32> to vector<8x1xf32>
    %339 = vector.broadcast %338 : vector<8x1xf32> to vector<8x32xf32>
    %340 = arith.mulf %287, %339 : vector<8x32xf32>
    %341 = arith.addf %337, %340 : vector<8x32xf32>
    %342 = vector.extract_strided_slice %330 {offsets = [0, 3], sizes = [8, 1], strides = [1, 1]} : vector<8x4xf32> to vector<8x1xf32>
    %343 = vector.broadcast %342 : vector<8x1xf32> to vector<8x32xf32>
    %344 = arith.mulf %288, %343 : vector<8x32xf32>
    %345 = arith.addf %341, %344 : vector<8x32xf32>
    %c0_148 = arith.constant 0 : index
    %c0_149 = arith.constant 0 : index
    %346 = vector.load %arg54[%c0_148, %c0_149] : memref<32x4xf32, #tpu.memory_space<vmem>>, vector<32x4xf32>
    %cst_150 = arith.constant dense<0.000000e+00> : vector<8x4xf32>
    %347 = tpu.matmul %237, %346, %cst_150 {dimension_numbers = #tpu.dot_dimension_numbers<[1], [0], [0], [1], [0, 0, 1, 1], [], []>} : vector<8x32xf32>, vector<32x4xf32>, vector<8x4xf32> -> vector<8x4xf32>
    %c0_151 = arith.constant 0 : index
    %c0_152 = arith.constant 0 : index
    %348 = vector.load %arg53[%c0_151, %c0_152] : memref<1x4xf32, #tpu.memory_space<vmem>>, vector<1x4xf32>
    %349 = vector.broadcast %348 : vector<1x4xf32> to vector<8x4xf32>
    %350 = arith.addf %347, %349 : vector<8x4xf32>
    %cst_153 = arith.constant dense<0xFF800000> : vector<8xf32>
    %351 = vector.multi_reduction <maximumf>, %350, %cst_153 [1] : vector<8x4xf32> to vector<8xf32>
    %352 = vector.shape_cast %351 : vector<8xf32> to vector<8x1xf32>
    %353 = vector.broadcast %352 : vector<8x1xf32> to vector<8x4xf32>
    %354 = arith.subf %350, %353 : vector<8x4xf32>
    %355 = math.exp %354 : vector<8x4xf32>
    %cst_154 = arith.constant dense<0.000000e+00> : vector<8xf32>
    %356 = vector.multi_reduction <add>, %355, %cst_154 [1] : vector<8x4xf32> to vector<8xf32>
    %357 = vector.shape_cast %356 : vector<8xf32> to vector<8x1xf32>
    %358 = vector.broadcast %357 : vector<8x1xf32> to vector<8x4xf32>
    %359 = arith.divf %355, %358 : vector<8x4xf32>
    %360 = vector.extract_strided_slice %359 {offsets = [0, 0], sizes = [8, 1], strides = [1, 1]} : vector<8x4xf32> to vector<8x1xf32>
    %361 = vector.broadcast %360 : vector<8x1xf32> to vector<8x32xf32>
    %362 = arith.mulf %315, %361 : vector<8x32xf32>
    %363 = vector.extract_strided_slice %359 {offsets = [0, 1], sizes = [8, 1], strides = [1, 1]} : vector<8x4xf32> to vector<8x1xf32>
    %364 = vector.broadcast %363 : vector<8x1xf32> to vector<8x32xf32>
    %365 = arith.mulf %316, %364 : vector<8x32xf32>
    %366 = arith.addf %362, %365 : vector<8x32xf32>
    %367 = vector.extract_strided_slice %359 {offsets = [0, 2], sizes = [8, 1], strides = [1, 1]} : vector<8x4xf32> to vector<8x1xf32>
    %368 = vector.broadcast %367 : vector<8x1xf32> to vector<8x32xf32>
    %369 = arith.mulf %287, %368 : vector<8x32xf32>
    %370 = arith.addf %366, %369 : vector<8x32xf32>
    %371 = vector.extract_strided_slice %359 {offsets = [0, 3], sizes = [8, 1], strides = [1, 1]} : vector<8x4xf32> to vector<8x1xf32>
    %372 = vector.broadcast %371 : vector<8x1xf32> to vector<8x32xf32>
    %373 = arith.mulf %288, %372 : vector<8x32xf32>
    %374 = arith.addf %370, %373 : vector<8x32xf32>
    %c0_155 = arith.constant 0 : index
    %c0_156 = arith.constant 0 : index
    %375 = vector.load %arg57[%c0_155, %c0_156] : memref<32x16xf32, #tpu.memory_space<vmem>>, vector<32x16xf32>
    %cst_157 = arith.constant dense<0.000000e+00> : vector<8x16xf32>
    %376 = tpu.matmul %345, %375, %cst_157 {dimension_numbers = #tpu.dot_dimension_numbers<[1], [0], [0], [1], [0, 0, 1, 1], [], []>} : vector<8x32xf32>, vector<32x16xf32>, vector<8x16xf32> -> vector<8x16xf32>
    %c0_158 = arith.constant 0 : index
    %c0_159 = arith.constant 0 : index
    %377 = vector.load %arg55[%c0_158, %c0_159] : memref<1x16xf32, #tpu.memory_space<vmem>>, vector<1x16xf32>
    %378 = vector.broadcast %377 : vector<1x16xf32> to vector<8x16xf32>
    %379 = arith.addf %376, %378 : vector<8x16xf32>
    %cst_160 = arith.constant 0.000000e+00 : f32
    %380 = vector.broadcast %cst_160 : f32 to vector<8x16xf32>
    %381 = arith.maximumf %379, %380 : vector<8x16xf32>
    %c0_161 = arith.constant 0 : index
    %c0_162 = arith.constant 0 : index
    %382 = vector.load %arg58[%c0_161, %c0_162] : memref<16x1xf32, #tpu.memory_space<vmem>>, vector<16x1xf32>
    %cst_163 = arith.constant dense<0.000000e+00> : vector<8x1xf32>
    %383 = tpu.matmul %381, %382, %cst_163 {dimension_numbers = #tpu.dot_dimension_numbers<[1], [0], [0], [1], [0, 0, 1, 1], [], []>} : vector<8x16xf32>, vector<16x1xf32>, vector<8x1xf32> -> vector<8x1xf32>
    %c0_164 = arith.constant 0 : index
    %c0_165 = arith.constant 0 : index
    %384 = vector.load %arg56[%c0_164, %c0_165] : memref<1x1xf32, #tpu.memory_space<vmem>>, vector<1x1xf32>
    %385 = vector.broadcast %384 : vector<1x1xf32> to vector<8x1xf32>
    %386 = arith.addf %383, %385 : vector<8x1xf32>
    %cst_166 = arith.constant 0.000000e+00 : f32
    %387 = vector.broadcast %cst_166 : f32 to vector<8x1xf32>
    %388 = arith.subf %387, %386 : vector<8x1xf32>
    %389 = math.exp %388 : vector<8x1xf32>
    %cst_167 = arith.constant 1.000000e+00 : f32
    %390 = vector.broadcast %cst_167 : f32 to vector<8x1xf32>
    %391 = arith.addf %390, %389 : vector<8x1xf32>
    %cst_168 = arith.constant 1.000000e+00 : f32
    %392 = vector.broadcast %cst_168 : f32 to vector<8x1xf32>
    %393 = arith.divf %392, %391 : vector<8x1xf32>
    %c0_169 = arith.constant 0 : index
    %c0_170 = arith.constant 0 : index
    %394 = vector.load %arg61[%c0_169, %c0_170] : memref<32x16xf32, #tpu.memory_space<vmem>>, vector<32x16xf32>
    %cst_171 = arith.constant dense<0.000000e+00> : vector<8x16xf32>
    %395 = tpu.matmul %374, %394, %cst_171 {dimension_numbers = #tpu.dot_dimension_numbers<[1], [0], [0], [1], [0, 0, 1, 1], [], []>} : vector<8x32xf32>, vector<32x16xf32>, vector<8x16xf32> -> vector<8x16xf32>
    %c0_172 = arith.constant 0 : index
    %c0_173 = arith.constant 0 : index
    %396 = vector.load %arg59[%c0_172, %c0_173] : memref<1x16xf32, #tpu.memory_space<vmem>>, vector<1x16xf32>
    %397 = vector.broadcast %396 : vector<1x16xf32> to vector<8x16xf32>
    %398 = arith.addf %395, %397 : vector<8x16xf32>
    %cst_174 = arith.constant 0.000000e+00 : f32
    %399 = vector.broadcast %cst_174 : f32 to vector<8x16xf32>
    %400 = arith.maximumf %398, %399 : vector<8x16xf32>
    %c0_175 = arith.constant 0 : index
    %c0_176 = arith.constant 0 : index
    %401 = vector.load %arg62[%c0_175, %c0_176] : memref<16x1xf32, #tpu.memory_space<vmem>>, vector<16x1xf32>
    %cst_177 = arith.constant dense<0.000000e+00> : vector<8x1xf32>
    %402 = tpu.matmul %400, %401, %cst_177 {dimension_numbers = #tpu.dot_dimension_numbers<[1], [0], [0], [1], [0, 0, 1, 1], [], []>} : vector<8x16xf32>, vector<16x1xf32>, vector<8x1xf32> -> vector<8x1xf32>
    %c0_178 = arith.constant 0 : index
    %c0_179 = arith.constant 0 : index
    %403 = vector.load %arg60[%c0_178, %c0_179] : memref<1x1xf32, #tpu.memory_space<vmem>>, vector<1x1xf32>
    %404 = vector.broadcast %403 : vector<1x1xf32> to vector<8x1xf32>
    %405 = arith.addf %402, %404 : vector<8x1xf32>
    %cst_180 = arith.constant 0.000000e+00 : f32
    %406 = vector.broadcast %cst_180 : f32 to vector<8x1xf32>
    %407 = arith.subf %406, %405 : vector<8x1xf32>
    %408 = math.exp %407 : vector<8x1xf32>
    %cst_181 = arith.constant 1.000000e+00 : f32
    %409 = vector.broadcast %cst_181 : f32 to vector<8x1xf32>
    %410 = arith.addf %409, %408 : vector<8x1xf32>
    %cst_182 = arith.constant 1.000000e+00 : f32
    %411 = vector.broadcast %cst_182 : f32 to vector<8x1xf32>
    %412 = arith.divf %411, %410 : vector<8x1xf32>
    %413 = tpu.concatenate %393, %412 in 1 : vector<8x1xf32>, vector<8x1xf32> -> vector<8x2xf32>
    %c0_183 = arith.constant 0 : index
    %c0_184 = arith.constant 0 : index
    %414 = vector.load %arg63[%c0_183, %c0_184] : memref<8x2xf32, #tpu.memory_space<vmem>>, vector<8x2xf32>
    tpu.vector_store %arg63[%c0_183, %c0_184], %413 {strides = array<i32>} : memref<8x2xf32, #tpu.memory_space<vmem>>, vector<8x2xf32>,
    return
  }
}

</mosaic_0001>

<llo_original>
// kernel: tpu_custom_call.1
$region0: #{tpu_custom_call.1}
  #allocation0 [shape = 'u32[]', space=smem, size = 0x4, offset = 0x4, fixed_abs, tag = 'smem constant byte address 0x4 - core index']
  #allocation1 [shape = 'u32[144,128]{1,0:T(1,128)}', space=vmem, size = 0x12000, scoped, tag = 'internal scratch']
  #allocation2 [shape = 'f32[1,1]{1,0:T(1,128)S(1)}', space=vmem, size = 0x200, scoped, tag = 'scoped memory for tpu_custom_call.1']
  #allocation3 [shape = 'f32[1,1]{1,0:T(1,128)S(1)}', space=vmem, size = 0x200, scoped, tag = 'scoped memory for tpu_custom_call.1']
  %s0 = inlined_call_operand.smem [shape: u32[64], index: -1, kind: input, shape index: {}]
  %s1 = sld [smem:[%s0]]
  %s2 = scalar_lea.smem %s0, 1
  %s3 = sld [smem:[%s2]]
  %s4 = scalar_lea.smem %s0, 2
  %s5 = sld [smem:[%s4]]
  %s6 = scalar_lea.smem %s0, 3
  %s7 = sld [smem:[%s6]]
  %s8 = scalar_lea.smem %s0, 4
  %s9 = sld [smem:[%s8]]
  %s10 = scalar_lea.smem %s0, 5
  %s11 = sld [smem:[%s10]]
  %s12 = scalar_lea.smem %s0, 6
  %s13 = sld [smem:[%s12]]
  %s14 = scalar_lea.smem %s0, 7
  %s15 = sld [smem:[%s14]]
  %s16 = scalar_lea.smem %s0, 8
  %s17 = sld [smem:[%s16]]
  %s18 = scalar_lea.smem %s0, 9
  %s19 = sld [smem:[%s18]]
  %s20 = scalar_lea.smem %s0, 10
  %s21 = sld [smem:[%s20]]
  %s22 = scalar_lea.smem %s0, 11
  %s23 = sld [smem:[%s22]]
  %s24 = scalar_lea.smem %s0, 12
  %s25 = sld [smem:[%s24]]
  %s26 = scalar_lea.smem %s0, 13
  %s27 = sld [smem:[%s26]]
  %s28 = scalar_lea.smem %s0, 14
  %s29 = sld [smem:[%s28]]
  %s30 = scalar_lea.smem %s0, 15
  %s31 = sld [smem:[%s30]]
  %s32 = scalar_lea.smem %s0, 16
  %s33 = sld [smem:[%s32]]
  %s34 = scalar_lea.smem %s0, 17
  %s35 = sld [smem:[%s34]]
  %s36 = scalar_lea.smem %s0, 18
  %s37 = sld [smem:[%s36]]
  %s38 = scalar_lea.smem %s0, 19
  %s39 = sld [smem:[%s38]]
  %s40 = scalar_lea.smem %s0, 20
  %s41 = sld [smem:[%s40]]
  %s42 = scalar_lea.smem %s0, 21
  %s43 = sld [smem:[%s42]]
  %s44 = scalar_lea.smem %s0, 22
  %s45 = sld [smem:[%s44]]
  %s46 = scalar_lea.smem %s0, 23
  %s47 = sld [smem:[%s46]]
  %s48 = scalar_lea.smem %s0, 24
  %s49 = sld [smem:[%s48]]
  %s50 = scalar_lea.smem %s0, 25
  %s51 = sld [smem:[%s50]]
  %s52 = scalar_lea.smem %s0, 26
  %s53 = sld [smem:[%s52]]
  %s54 = scalar_lea.smem %s0, 27
  %s55 = sld [smem:[%s54]]
  %s56 = scalar_lea.smem %s0, 28
  %s57 = sld [smem:[%s56]]
  %s58 = scalar_lea.smem %s0, 29
  %s59 = sld [smem:[%s58]]
  %s60 = scalar_lea.smem %s0, 30
  %s61 = sld [smem:[%s60]]
  %s62 = scalar_lea.smem %s0, 31
  %s63 = sld [smem:[%s62]]
  %s64 = scalar_lea.smem %s0, 32
  %s65 = sld [smem:[%s64]]
  %s66 = scalar_lea.smem %s0, 33
  %s67 = sld [smem:[%s66]]
  %s68 = scalar_lea.smem %s0, 34
  %s69 = sld [smem:[%s68]]
  %s70 = scalar_lea.smem %s0, 35
  %s71 = sld [smem:[%s70]]
  %s72 = scalar_lea.smem %s0, 36
  %s73 = sld [smem:[%s72]]
  %s74 = scalar_lea.smem %s0, 37
  %s75 = sld [smem:[%s74]]
  %s76 = scalar_lea.smem %s0, 38
  %s77 = sld [smem:[%s76]]
  %s78 = scalar_lea.smem %s0, 39
  %s79 = sld [smem:[%s78]]
  %s80 = scalar_lea.smem %s0, 40
  %s81 = sld [smem:[%s80]]
  %s82 = scalar_lea.smem %s0, 41
  %s83 = sld [smem:[%s82]]
  %s84 = scalar_lea.smem %s0, 42
  %s85 = sld [smem:[%s84]]
  %s86 = scalar_lea.smem %s0, 43
  %s87 = sld [smem:[%s86]]
  %s88 = scalar_lea.smem %s0, 44
  %s89 = sld [smem:[%s88]]
  %s90 = scalar_lea.smem %s0, 45
  %s91 = sld [smem:[%s90]]
  %s92 = scalar_lea.smem %s0, 46
  %s93 = sld [smem:[%s92]]
  %s94 = scalar_lea.smem %s0, 47
  %s95 = sld [smem:[%s94]]
  %s96 = scalar_lea.smem %s0, 48
  %s97 = sld [smem:[%s96]]
  %s98 = scalar_lea.smem %s0, 49
  %s99 = sld [smem:[%s98]]
  %s100 = scalar_lea.smem %s0, 50
  %s101 = sld [smem:[%s100]]
  %s102 = scalar_lea.smem %s0, 51
  %s103 = sld [smem:[%s102]]
  %s104 = scalar_lea.smem %s0, 52
  %s105 = sld [smem:[%s104]]
  %s106 = scalar_lea.smem %s0, 53
  %s107 = sld [smem:[%s106]]
  %s108 = scalar_lea.smem %s0, 54
  %s109 = sld [smem:[%s108]]
  %s110 = scalar_lea.smem %s0, 55
  %s111 = sld [smem:[%s110]]
  %s112 = scalar_lea.smem %s0, 56
  %s113 = sld [smem:[%s112]]
  %s114 = scalar_lea.smem %s0, 57
  %s115 = sld [smem:[%s114]]
  %s116 = scalar_lea.smem %s0, 58
  %s117 = sld [smem:[%s116]]
  %s118 = scalar_lea.smem %s0, 59
  %s119 = sld [smem:[%s118]]
  %s120 = scalar_lea.smem %s0, 60
  %s121 = sld [smem:[%s120]]
  %s122 = scalar_lea.smem %s0, 61
  %s123 = sld [smem:[%s122]]
  %s124 = scalar_lea.smem %s0, 62
  %s125 = sld [smem:[%s124]]
  %s126 = scalar_lea.smem %s0, 63
  %s127 = sld [smem:[%s126]]
  %s128 = sld [smem:[#allocation0]]
  $region406: #{tpu_custom_call.1} parent=0
    _
  %s130 = ssub.s32 1, %s128
  %s131 = scalar_select 0, %s130, %s128
  %v132 = vstv %s113
  %133 = vst [vmem:[#allocation2] sm:$0x1] %v132
  %v134 = vstv %s121
  %135 = vst [vmem:[#allocation3] sm:$0x1] %v134
  $region1: #{tpu_custom_call.1} parent=0
    #allocation4 [shape = 'u8[4096]{0}', space=vmem, size = 0x1000, scoped, tag = 'input window, operand 0, single buffered']
    #allocation5 [shape = 's32[1]{0}', space=sflag, size = 0x4, scoped, tag = 'scoped memory for tpu_custom_call.1']
    #allocation6 [shape = 'u8[512]{0}', space=vmem, size = 0x400, scoped, tag = 'input window, operand 1, single buffered']
    #allocation7 [shape = 's32[1]{0}', space=sflag, size = 0x4, scoped, tag = 'scoped memory for tpu_custom_call.1']
    #allocation8 [shape = 'u8[512]{0}', space=vmem, size = 0x400, scoped, tag = 'input window, operand 2, single buffered']
    #allocation9 [shape = 'u8[8192]{0}', space=vmem, size = 0x2000, scoped, tag = 'input window, operand 3, single buffered']
    #allocation10 [shape = 's32[1]{0}', space=sflag, size = 0x4, scoped, tag = 'scoped memory for tpu_custom_call.1']
    #allocation11 [shape = 'u8[512]{0}', space=vmem, size = 0x400, scoped, tag = 'input window, operand 5, single buffered']
    #allocation12 [shape = 'u8[512]{0}', space=vmem, size = 0x400, scoped, tag = 'input window, operand 6, single buffered']
    #allocation13 [shape = 's32[1]{0}', space=sflag, size = 0x4, scoped, tag = 'scoped memory for tpu_custom_call.1']
    #allocation14 [shape = 'u8[8192]{0}', space=vmem, size = 0x2000, scoped, tag = 'input window, operand 7, single buffered']
    #allocation15 [shape = 'u8[512]{0}', space=vmem, size = 0x400, scoped, tag = 'input window, operand 9, single buffered']
    #allocation16 [shape = 's32[1]{0}', space=sflag, size = 0x4, scoped, tag = 'scoped memory for tpu_custom_call.1']
    #allocation17 [shape = 'u8[512]{0}', space=vmem, size = 0x400, scoped, tag = 'input window, operand 10, single buffered']
    #allocation18 [shape = 'u8[8192]{0}', space=vmem, size = 0x2000, scoped, tag = 'input window, operand 11, single buffered']
    #allocation19 [shape = 's32[1]{0}', space=sflag, size = 0x4, scoped, tag = 'scoped memory for tpu_custom_call.1']
    #allocation20 [shape = 'u8[512]{0}', space=vmem, size = 0x400, scoped, tag = 'input window, operand 13, single buffered']
    #allocation21 [shape = 'u8[512]{0}', space=vmem, size = 0x400, scoped, tag = 'input window, operand 15, single buffered']
    #allocation22 [shape = 's32[1]{0}', space=sflag, size = 0x4, scoped, tag = 'scoped memory for tpu_custom_call.1']
    #allocation23 [shape = 'u8[512]{0}', space=vmem, size = 0x400, scoped, tag = 'input window, operand 17, single buffered']
    #allocation24 [shape = 'u8[512]{0}', space=vmem, size = 0x400, scoped, tag = 'input window, operand 19, single buffered']
    #allocation25 [shape = 's32[1]{0}', space=sflag, size = 0x4, scoped, tag = 'scoped memory for tpu_custom_call.1']
    #allocation26 [shape = 'u8[512]{0}', space=vmem, size = 0x400, scoped, tag = 'input window, operand 20, single buffered']
    #allocation27 [shape = 'u8[16384]{0}', space=vmem, size = 0x4000, scoped, tag = 'input window, operand 21, single buffered']
    #allocation28 [shape = 's32[1]{0}', space=sflag, size = 0x4, scoped, tag = 'scoped memory for tpu_custom_call.1']
    #allocation29 [shape = 'u8[512]{0}', space=vmem, size = 0x400, scoped, tag = 'input window, operand 23, single buffered']
    #allocation30 [shape = 'u8[512]{0}', space=vmem, size = 0x400, scoped, tag = 'input window, operand 24, single buffered']
    #allocation31 [shape = 's32[1]{0}', space=sflag, size = 0x4, scoped, tag = 'scoped memory for tpu_custom_call.1']
    #allocation32 [shape = 'u8[16384]{0}', space=vmem, size = 0x4000, scoped, tag = 'input window, operand 25, single buffered']
    #allocation33 [shape = 'u8[512]{0}', space=vmem, size = 0x400, scoped, tag = 'input window, operand 27, single buffered']
    #allocation34 [shape = 's32[1]{0}', space=sflag, size = 0x4, scoped, tag = 'scoped memory for tpu_custom_call.1']
    #allocation35 [shape = 'u8[512]{0}', space=vmem, size = 0x400, scoped, tag = 'input window, operand 28, single buffered']
    #allocation36 [shape = 'u8[16384]{0}', space=vmem, size = 0x4000, scoped, tag = 'input window, operand 29, single buffered']
    #allocation37 [shape = 's32[1]{0}', space=sflag, size = 0x4, scoped, tag = 'scoped memory for tpu_custom_call.1']
    #allocation38 [shape = 'u8[512]{0}', space=vmem, size = 0x400, scoped, tag = 'input window, operand 31, single buffered']
    #allocation39 [shape = 'u8[512]{0}', space=vmem, size = 0x400, scoped, tag = 'input window, operand 33, single buffered']
    #allocation40 [shape = 's32[1]{0}', space=sflag, size = 0x4, scoped, tag = 'scoped memory for tpu_custom_call.1']
    #allocation41 [shape = 'u8[512]{0}', space=vmem, size = 0x400, scoped, tag = 'input window, operand 35, single buffered']
    #allocation42 [shape = 'u8[512]{0}', space=vmem, size = 0x400, scoped, tag = 'input window, operand 37, single buffered']
    #allocation43 [shape = 's32[1]{0}', space=sflag, size = 0x4, scoped, tag = 'scoped memory for tpu_custom_call.1']
    #allocation44 [shape = 'u8[512]{0}', space=vmem, size = 0x400, scoped, tag = 'input window, operand 38, single buffered']
    #allocation45 [shape = 'u8[16384]{0}', space=vmem, size = 0x4000, scoped, tag = 'input window, operand 39, single buffered']
    #allocation46 [shape = 's32[1]{0}', space=sflag, size = 0x4, scoped, tag = 'scoped memory for tpu_custom_call.1']
    #allocation47 [shape = 'u8[512]{0}', space=vmem, size = 0x400, scoped, tag = 'input window, operand 41, single buffered']
    #allocation48 [shape = 'u8[512]{0}', space=vmem, size = 0x400, scoped, tag = 'input window, operand 42, single buffered']
    #allocation49 [shape = 's32[1]{0}', space=sflag, size = 0x4, scoped, tag = 'scoped memory for tpu_custom_call.1']
    #allocation50 [shape = 'u8[16384]{0}', space=vmem, size = 0x4000, scoped, tag = 'input window, operand 43, single buffered']
    #allocation51 [shape = 'u8[512]{0}', space=vmem, size = 0x400, scoped, tag = 'input window, operand 45, single buffered']
    #allocation52 [shape = 's32[1]{0}', space=sflag, size = 0x4, scoped, tag = 'scoped memory for tpu_custom_call.1']
    #allocation53 [shape = 'u8[512]{0}', space=vmem, size = 0x400, scoped, tag = 'input window, operand 46, single buffered']
    #allocation54 [shape = 'u8[16384]{0}', space=vmem, size = 0x4000, scoped, tag = 'input window, operand 47, single buffered']
    #allocation55 [shape = 's32[1]{0}', space=sflag, size = 0x4, scoped, tag = 'scoped memory for tpu_custom_call.1']
    #allocation56 [shape = 'u8[512]{0}', space=vmem, size = 0x400, scoped, tag = 'input window, operand 49, single buffered']
    #allocation57 [shape = 'u8[512]{0}', space=vmem, size = 0x400, scoped, tag = 'input window, operand 51, single buffered']
    #allocation58 [shape = 's32[1]{0}', space=sflag, size = 0x4, scoped, tag = 'scoped memory for tpu_custom_call.1']
    %136 = vsyncpa [#allocation5], 0
    %137 = vsyncpa [#allocation7], 0
    %138 = vsyncpa [#allocation10], 0
    %139 = vsyncpa [#allocation13], 0
    %140 = vsyncpa [#allocation16], 0
    %141 = vsyncpa [#allocation19], 0
    %142 = vsyncpa [#allocation22], 0
    %143 = vsyncpa [#allocation25], 0
    %144 = vsyncpa [#allocation28], 0
    %145 = vsyncpa [#allocation31], 0
    %146 = vsyncpa [#allocation34], 0
    %147 = vsyncpa [#allocation37], 0
    %148 = vsyncpa [#allocation40], 0
    %149 = vsyncpa [#allocation43], 0
    %150 = vsyncpa [#allocation46], 0
    %151 = vsyncpa [#allocation49], 0
    %152 = vsyncpa [#allocation52], 0
    %153 = vsyncpa [#allocation55], 0
    %154 = vsyncpa [#allocation58], 0
    // Predicated region
    $region2: #{tpu_custom_call.1} parent=1 // pred_check
      _
    $region3: #{tpu_custom_call.1} parent=1 // pred_check_branch
      %156 = sbr.rel (0) target = $region5
    $region4: #{tpu_custom_call.1} parent=1 // pred_region
      %s158 = ssub.s32 128, 128
      %159 = vsyncadd [#allocation5], %s158
      %s161 = sshll.u32 [#allocation4], 4
      %s162 = int_to_ptr.vmem [resolvable:$true] %s161
      %164 = dma.hbm_to_vmem [thread:$0]  %s1, 128, %s162, [#allocation5]
    $region5: #{tpu_custom_call.1} parent=1 // pred_fallthru
      _
    // Predicated region
    $region6: #{tpu_custom_call.1} parent=1 // pred_check
      _
    $region7: #{tpu_custom_call.1} parent=1 // pred_check_branch
      %166 = sbr.rel (0) target = $region9
    $region8: #{tpu_custom_call.1} parent=1 // pred_region
      %s168 = ssub.s32 16, 16
      %169 = vsyncadd [#allocation7], %s168
      %s171 = sshll.u32 [#allocation6], 4
      %s172 = int_to_ptr.vmem [resolvable:$true] %s171
      %174 = dma.hbm_to_vmem [thread:$0]  %s3, 16, %s172, [#allocation7]
    $region9: #{tpu_custom_call.1} parent=1 // pred_fallthru
      _
    // Predicated region
    $region10: #{tpu_custom_call.1} parent=1 // pred_check
      _
    $region11: #{tpu_custom_call.1} parent=1 // pred_check_branch
      %176 = sbr.rel (0) target = $region13
    $region12: #{tpu_custom_call.1} parent=1 // pred_region
      %s178 = ssub.s32 16, 16
      %179 = vsyncadd [#allocation7], %s178
      %s181 = sshll.u32 [#allocation8], 4
      %s182 = int_to_ptr.vmem [resolvable:$true] %s181
      %184 = dma.hbm_to_vmem [thread:$0]  %s5, 16, %s182, [#allocation7]
    $region13: #{tpu_custom_call.1} parent=1 // pred_fallthru
      _
    // Predicated region
    $region14: #{tpu_custom_call.1} parent=1 // pred_check
      _
    $region15: #{tpu_custom_call.1} parent=1 // pred_check_branch
      %186 = sbr.rel (0) target = $region17
    $region16: #{tpu_custom_call.1} parent=1 // pred_region
      %s188 = ssub.s32 256, 256
      %189 = vsyncadd [#allocation10], %s188
      %s190 = sshll.u32 [#allocation9], 4
      %s191 = int_to_ptr.vmem [resolvable:$true] %s190
      %196 = dma.hbm_to_vmem [thread:$0]  %s7, 256, %s191, [#allocation10], 128, 128, 8
    $region17: #{tpu_custom_call.1} parent=1 // pred_fallthru
      _
    // Predicated region
    $region18: #{tpu_custom_call.1} parent=1 // pred_check
      _
    $region19: #{tpu_custom_call.1} parent=1 // pred_check_branch
      %198 = sbr.rel (0) target = $region21
    $region20: #{tpu_custom_call.1} parent=1 // pred_region
      _
    $region21: #{tpu_custom_call.1} parent=1 // pred_fallthru
      _
    // Predicated region
    $region22: #{tpu_custom_call.1} parent=1 // pred_check
      _
    $region23: #{tpu_custom_call.1} parent=1 // pred_check_branch
      %200 = sbr.rel (0) target = $region25
    $region24: #{tpu_custom_call.1} parent=1 // pred_region
      %s202 = ssub.s32 16, 16
      %203 = vsyncadd [#allocation10], %s202
      %s205 = sshll.u32 [#allocation11], 4
      %s206 = int_to_ptr.vmem [resolvable:$true] %s205
      %208 = dma.hbm_to_vmem [thread:$0]  %s11, 16, %s206, [#allocation10]
    $region25: #{tpu_custom_call.1} parent=1 // pred_fallthru
      _
    // Predicated region
    $region26: #{tpu_custom_call.1} parent=1 // pred_check
      _
    $region27: #{tpu_custom_call.1} parent=1 // pred_check_branch
      %210 = sbr.rel (0) target = $region29
    $region28: #{tpu_custom_call.1} parent=1 // pred_region
      %s212 = ssub.s32 16, 16
      %213 = vsyncadd [#allocation13], %s212
      %s215 = sshll.u32 [#allocation12], 4
      %s216 = int_to_ptr.vmem [resolvable:$true] %s215
      %218 = dma.hbm_to_vmem [thread:$0]  %s13, 16, %s216, [#allocation13]
    $region29: #{tpu_custom_call.1} parent=1 // pred_fallthru
      _
    // Predicated region
    $region30: #{tpu_custom_call.1} parent=1 // pred_check
      _
    $region31: #{tpu_custom_call.1} parent=1 // pred_check_branch
      %220 = sbr.rel (0) target = $region33
    $region32: #{tpu_custom_call.1} parent=1 // pred_region
      %s222 = ssub.s32 256, 256
      %223 = vsyncadd [#allocation13], %s222
      %s224 = sshll.u32 [#allocation14], 4
      %s225 = int_to_ptr.vmem [resolvable:$true] %s224
      %230 = dma.hbm_to_vmem [thread:$0]  %s15, 256, %s225, [#allocation13], 128, 128, 8
    $region33: #{tpu_custom_call.1} parent=1 // pred_fallthru
      _
    // Predicated region
    $region34: #{tpu_custom_call.1} parent=1 // pred_check
      _
    $region35: #{tpu_custom_call.1} parent=1 // pred_check_branch
      %232 = sbr.rel (0) target = $region37
    $region36: #{tpu_custom_call.1} parent=1 // pred_region
      _
    $region37: #{tpu_custom_call.1} parent=1 // pred_fallthru
      _
    // Predicated region
    $region38: #{tpu_custom_call.1} parent=1 // pred_check
      _
    $region39: #{tpu_custom_call.1} parent=1 // pred_check_branch
      %234 = sbr.rel (0) target = $region41
    $region40: #{tpu_custom_call.1} parent=1 // pred_region
      %s236 = ssub.s32 16, 16
      %237 = vsyncadd [#allocation16], %s236
      %s239 = sshll.u32 [#allocation15], 4
      %s240 = int_to_ptr.vmem [resolvable:$true] %s239
      %242 = dma.hbm_to_vmem [thread:$0]  %s19, 16, %s240, [#allocation16]
    $region41: #{tpu_custom_call.1} parent=1 // pred_fallthru
      _
    // Predicated region
    $region42: #{tpu_custom_call.1} parent=1 // pred_check
      _
    $region43: #{tpu_custom_call.1} parent=1 // pred_check_branch
      %244 = sbr.rel (0) target = $region45
    $region44: #{tpu_custom_call.1} parent=1 // pred_region
      %s246 = ssub.s32 16, 16
      %247 = vsyncadd [#allocation16], %s246
      %s249 = sshll.u32 [#allocation17], 4
      %s250 = int_to_ptr.vmem [resolvable:$true] %s249
      %252 = dma.hbm_to_vmem [thread:$0]  %s21, 16, %s250, [#allocation16]
    $region45: #{tpu_custom_call.1} parent=1 // pred_fallthru
      _
    // Predicated region
    $region46: #{tpu_custom_call.1} parent=1 // pred_check
      _
    $region47: #{tpu_custom_call.1} parent=1 // pred_check_branch
      %254 = sbr.rel (0) target = $region49
    $region48: #{tpu_custom_call.1} parent=1 // pred_region
      %s256 = ssub.s32 256, 256
      %257 = vsyncadd [#allocation19], %s256
      %s258 = sshll.u32 [#allocation18], 4
      %s259 = int_to_ptr.vmem [resolvable:$true] %s258
      %264 = dma.hbm_to_vmem [thread:$0]  %s23, 256, %s259, [#allocation19], 128, 128, 8
    $region49: #{tpu_custom_call.1} parent=1 // pred_fallthru
      _
    // Predicated region
    $region50: #{tpu_custom_call.1} parent=1 // pred_check
      _
    $region51: #{tpu_custom_call.1} parent=1 // pred_check_branch
      %266 = sbr.rel (0) target = $region53
    $region52: #{tpu_custom_call.1} parent=1 // pred_region
      _
    $region53: #{tpu_custom_call.1} parent=1 // pred_fallthru
      _
    // Predicated region
    $region54: #{tpu_custom_call.1} parent=1 // pred_check
      _
    $region55: #{tpu_custom_call.1} parent=1 // pred_check_branch
      %268 = sbr.rel (0) target = $region57
    $region56: #{tpu_custom_call.1} parent=1 // pred_region
      %s270 = ssub.s32 16, 16
      %271 = vsyncadd [#allocation19], %s270
      %s273 = sshll.u32 [#allocation20], 4
      %s274 = int_to_ptr.vmem [resolvable:$true] %s273
      %276 = dma.hbm_to_vmem [thread:$0]  %s27, 16, %s274, [#allocation19]
    $region57: #{tpu_custom_call.1} parent=1 // pred_fallthru
      _
    // Predicated region
    $region58: #{tpu_custom_call.1} parent=1 // pred_check
      _
    $region59: #{tpu_custom_call.1} parent=1 // pred_check_branch
      %278 = sbr.rel (0) target = $region61
    $region60: #{tpu_custom_call.1} parent=1 // pred_region
      _
    $region61: #{tpu_custom_call.1} parent=1 // pred_fallthru
      _
    // Predicated region
    $region62: #{tpu_custom_call.1} parent=1 // pred_check
      _
    $region63: #{tpu_custom_call.1} parent=1 // pred_check_branch
      %280 = sbr.rel (0) target = $region65
    $region64: #{tpu_custom_call.1} parent=1 // pred_region
      %s282 = ssub.s32 16, 16
      %283 = vsyncadd [#allocation22], %s282
      %s285 = sshll.u32 [#allocation21], 4
      %s286 = int_to_ptr.vmem [resolvable:$true] %s285
      %288 = dma.hbm_to_vmem [thread:$0]  %s31, 16, %s286, [#allocation22]
    $region65: #{tpu_custom_call.1} parent=1 // pred_fallthru
      _
    // Predicated region
    $region66: #{tpu_custom_call.1} parent=1 // pred_check
      _
    $region67: #{tpu_custom_call.1} parent=1 // pred_check_branch
      %290 = sbr.rel (0) target = $region69
    $region68: #{tpu_custom_call.1} parent=1 // pred_region
      _
    $region69: #{tpu_custom_call.1} parent=1 // pred_fallthru
      _
    // Predicated region
    $region70: #{tpu_custom_call.1} parent=1 // pred_check
      _
    $region71: #{tpu_custom_call.1} parent=1 // pred_check_branch
      %292 = sbr.rel (0) target = $region73
    $region72: #{tpu_custom_call.1} parent=1 // pred_region
      %s294 = ssub.s32 16, 16
      %295 = vsyncadd [#allocation22], %s294
      %s297 = sshll.u32 [#allocation23], 4
      %s298 = int_to_ptr.vmem [resolvable:$true] %s297
      %300 = dma.hbm_to_vmem [thread:$0]  %s35, 16, %s298, [#allocation22]
    $region73: #{tpu_custom_call.1} parent=1 // pred_fallthru
      _
    // Predicated region
    $region74: #{tpu_custom_call.1} parent=1 // pred_check
      _
    $region75: #{tpu_custom_call.1} parent=1 // pred_check_branch
      %302 = sbr.rel (0) target = $region77
    $region76: #{tpu_custom_call.1} parent=1 // pred_region
      _
    $region77: #{tpu_custom_call.1} parent=1 // pred_fallthru
      _
    // Predicated region
    $region78: #{tpu_custom_call.1} parent=1 // pred_check
      _
    $region79: #{tpu_custom_call.1} parent=1 // pred_check_branch
      %304 = sbr.rel (0) target = $region81
    $region80: #{tpu_custom_call.1} parent=1 // pred_region
      %s306 = ssub.s32 16, 16
      %307 = vsyncadd [#allocation25], %s306
      %s309 = sshll.u32 [#allocation24], 4
      %s310 = int_to_ptr.vmem [resolvable:$true] %s309
      %312 = dma.hbm_to_vmem [thread:$0]  %s39, 16, %s310, [#allocation25]
    $region81: #{tpu_custom_call.1} parent=1 // pred_fallthru
      _
    // Predicated region
    $region82: #{tpu_custom_call.1} parent=1 // pred_check
      _
    $region83: #{tpu_custom_call.1} parent=1 // pred_check_branch
      %314 = sbr.rel (0) target = $region85
    $region84: #{tpu_custom_call.1} parent=1 // pred_region
      %s316 = ssub.s32 16, 16
      %317 = vsyncadd [#allocation25], %s316
      %s319 = sshll.u32 [#allocation26], 4
      %s320 = int_to_ptr.vmem [resolvable:$true] %s319
      %322 = dma.hbm_to_vmem [thread:$0]  %s41, 16, %s320, [#allocation25]
    $region85: #{tpu_custom_call.1} parent=1 // pred_fallthru
      _
    // Predicated region
    $region86: #{tpu_custom_call.1} parent=1 // pred_check
      _
    $region87: #{tpu_custom_call.1} parent=1 // pred_check_branch
      %324 = sbr.rel (0) target = $region89
    $region88: #{tpu_custom_call.1} parent=1 // pred_region
      %s326 = ssub.s32 512, 512
      %327 = vsyncadd [#allocation28], %s326
      %s328 = sshll.u32 [#allocation27], 4
      %s329 = int_to_ptr.vmem [resolvable:$true] %s328
      %334 = dma.hbm_to_vmem [thread:$0]  %s43, 512, %s329, [#allocation28], 128, 128, 8
    $region89: #{tpu_custom_call.1} parent=1 // pred_fallthru
      _
    // Predicated region
    $region90: #{tpu_custom_call.1} parent=1 // pred_check
      _
    $region91: #{tpu_custom_call.1} parent=1 // pred_check_branch
      %336 = sbr.rel (0) target = $region93
    $region92: #{tpu_custom_call.1} parent=1 // pred_region
      _
    $region93: #{tpu_custom_call.1} parent=1 // pred_fallthru
      _
    // Predicated region
    $region94: #{tpu_custom_call.1} parent=1 // pred_check
      _
    $region95: #{tpu_custom_call.1} parent=1 // pred_check_branch
      %338 = sbr.rel (0) target = $region97
    $region96: #{tpu_custom_call.1} parent=1 // pred_region
      %s340 = ssub.s32 16, 16
      %341 = vsyncadd [#allocation28], %s340
      %s343 = sshll.u32 [#allocation29], 4
      %s344 = int_to_ptr.vmem [resolvable:$true] %s343
      %346 = dma.hbm_to_vmem [thread:$0]  %s47, 16, %s344, [#allocation28]
    $region97: #{tpu_custom_call.1} parent=1 // pred_fallthru
      _
    // Predicated region
    $region98: #{tpu_custom_call.1} parent=1 // pred_check
      _
    $region99: #{tpu_custom_call.1} parent=1 // pred_check_branch
      %348 = sbr.rel (0) target = $region101
    $region100: #{tpu_custom_call.1} parent=1 // pred_region
      %s350 = ssub.s32 16, 16
      %351 = vsyncadd [#allocation31], %s350
      %s353 = sshll.u32 [#allocation30], 4
      %s354 = int_to_ptr.vmem [resolvable:$true] %s353
      %356 = dma.hbm_to_vmem [thread:$0]  %s49, 16, %s354, [#allocation31]
    $region101: #{tpu_custom_call.1} parent=1 // pred_fallthru
      _
    // Predicated region
    $region102: #{tpu_custom_call.1} parent=1 // pred_check
      _
    $region103: #{tpu_custom_call.1} parent=1 // pred_check_branch
      %358 = sbr.rel (0) target = $region105
    $region104: #{tpu_custom_call.1} parent=1 // pred_region
      %s360 = ssub.s32 512, 512
      %361 = vsyncadd [#allocation31], %s360
      %s362 = sshll.u32 [#allocation32], 4
      %s363 = int_to_ptr.vmem [resolvable:$true] %s362
      %368 = dma.hbm_to_vmem [thread:$0]  %s51, 512, %s363, [#allocation31], 128, 128, 8
    $region105: #{tpu_custom_call.1} parent=1 // pred_fallthru
      _
    // Predicated region
    $region106: #{tpu_custom_call.1} parent=1 // pred_check
      _
    $region107: #{tpu_custom_call.1} parent=1 // pred_check_branch
      %370 = sbr.rel (0) target = $region109
    $region108: #{tpu_custom_call.1} parent=1 // pred_region
      _
    $region109: #{tpu_custom_call.1} parent=1 // pred_fallthru
      _
    // Predicated region
    $region110: #{tpu_custom_call.1} parent=1 // pred_check
      _
    $region111: #{tpu_custom_call.1} parent=1 // pred_check_branch
      %372 = sbr.rel (0) target = $region113
    $region112: #{tpu_custom_call.1} parent=1 // pred_region
      %s374 = ssub.s32 16, 16
      %375 = vsyncadd [#allocation34], %s374
      %s377 = sshll.u32 [#allocation33], 4
      %s378 = int_to_ptr.vmem [resolvable:$true] %s377
      %380 = dma.hbm_to_vmem [thread:$0]  %s55, 16, %s378, [#allocation34]
    $region113: #{tpu_custom_call.1} parent=1 // pred_fallthru
      _
    // Predicated region
    $region114: #{tpu_custom_call.1} parent=1 // pred_check
      _
    $region115: #{tpu_custom_call.1} parent=1 // pred_check_branch
      %382 = sbr.rel (0) target = $region117
    $region116: #{tpu_custom_call.1} parent=1 // pred_region
      %s384 = ssub.s32 16, 16
      %385 = vsyncadd [#allocation34], %s384
      %s387 = sshll.u32 [#allocation35], 4
      %s388 = int_to_ptr.vmem [resolvable:$true] %s387
      %390 = dma.hbm_to_vmem [thread:$0]  %s57, 16, %s388, [#allocation34]
    $region117: #{tpu_custom_call.1} parent=1 // pred_fallthru
      _
    // Predicated region
    $region118: #{tpu_custom_call.1} parent=1 // pred_check
      _
    $region119: #{tpu_custom_call.1} parent=1 // pred_check_branch
      %392 = sbr.rel (0) target = $region121
    $region120: #{tpu_custom_call.1} parent=1 // pred_region
      %s394 = ssub.s32 512, 512
      %395 = vsyncadd [#allocation37], %s394
      %s396 = sshll.u32 [#allocation36], 4
      %s397 = int_to_ptr.vmem [resolvable:$true] %s396
      %402 = dma.hbm_to_vmem [thread:$0]  %s59, 512, %s397, [#allocation37], 128, 128, 8
    $region121: #{tpu_custom_call.1} parent=1 // pred_fallthru
      _
    // Predicated region
    $region122: #{tpu_custom_call.1} parent=1 // pred_check
      _
    $region123: #{tpu_custom_call.1} parent=1 // pred_check_branch
      %404 = sbr.rel (0) target = $region125
    $region124: #{tpu_custom_call.1} parent=1 // pred_region
      _
    $region125: #{tpu_custom_call.1} parent=1 // pred_fallthru
      _
    // Predicated region
    $region126: #{tpu_custom_call.1} parent=1 // pred_check
      _
    $region127: #{tpu_custom_call.1} parent=1 // pred_check_branch
      %406 = sbr.rel (0) target = $region129
    $region128: #{tpu_custom_call.1} parent=1 // pred_region
      %s408 = ssub.s32 16, 16
      %409 = vsyncadd [#allocation37], %s408
      %s411 = sshll.u32 [#allocation38], 4
      %s412 = int_to_ptr.vmem [resolvable:$true] %s411
      %414 = dma.hbm_to_vmem [thread:$0]  %s63, 16, %s412, [#allocation37]
    $region129: #{tpu_custom_call.1} parent=1 // pred_fallthru
      _
    // Predicated region
    $region130: #{tpu_custom_call.1} parent=1 // pred_check
      _
    $region131: #{tpu_custom_call.1} parent=1 // pred_check_branch
      %416 = sbr.rel (0) target = $region133
    $region132: #{tpu_custom_call.1} parent=1 // pred_region
      _
    $region133: #{tpu_custom_call.1} parent=1 // pred_fallthru
      _
    // Predicated region
    $region134: #{tpu_custom_call.1} parent=1 // pred_check
      _
    $region135: #{tpu_custom_call.1} parent=1 // pred_check_branch
      %418 = sbr.rel (0) target = $region137
    $region136: #{tpu_custom_call.1} parent=1 // pred_region
      %s420 = ssub.s32 16, 16
      %421 = vsyncadd [#allocation40], %s420
      %s423 = sshll.u32 [#allocation39], 4
      %s424 = int_to_ptr.vmem [resolvable:$true] %s423
      %426 = dma.hbm_to_vmem [thread:$0]  %s67, 16, %s424, [#allocation40]
    $region137: #{tpu_custom_call.1} parent=1 // pred_fallthru
      _
    // Predicated region
    $region138: #{tpu_custom_call.1} parent=1 // pred_check
      _
    $region139: #{tpu_custom_call.1} parent=1 // pred_check_branch
      %428 = sbr.rel (0) target = $region141
    $region140: #{tpu_custom_call.1} parent=1 // pred_region
      _
    $region141: #{tpu_custom_call.1} parent=1 // pred_fallthru
      _
    // Predicated region
    $region142: #{tpu_custom_call.1} parent=1 // pred_check
      _
    $region143: #{tpu_custom_call.1} parent=1 // pred_check_branch
      %430 = sbr.rel (0) target = $region145
    $region144: #{tpu_custom_call.1} parent=1 // pred_region
      %s432 = ssub.s32 16, 16
      %433 = vsyncadd [#allocation40], %s432
      %s435 = sshll.u32 [#allocation41], 4
      %s436 = int_to_ptr.vmem [resolvable:$true] %s435
      %438 = dma.hbm_to_vmem [thread:$0]  %s71, 16, %s436, [#allocation40]
    $region145: #{tpu_custom_call.1} parent=1 // pred_fallthru
      _
    // Predicated region
    $region146: #{tpu_custom_call.1} parent=1 // pred_check
      _
    $region147: #{tpu_custom_call.1} parent=1 // pred_check_branch
      %440 = sbr.rel (0) target = $region149
    $region148: #{tpu_custom_call.1} parent=1 // pred_region
      _
    $region149: #{tpu_custom_call.1} parent=1 // pred_fallthru
      _
    // Predicated region
    $region150: #{tpu_custom_call.1} parent=1 // pred_check
      _
    $region151: #{tpu_custom_call.1} parent=1 // pred_check_branch
      %442 = sbr.rel (0) target = $region153
    $region152: #{tpu_custom_call.1} parent=1 // pred_region
      %s444 = ssub.s32 16, 16
      %445 = vsyncadd [#allocation43], %s444
      %s447 = sshll.u32 [#allocation42], 4
      %s448 = int_to_ptr.vmem [resolvable:$true] %s447
      %450 = dma.hbm_to_vmem [thread:$0]  %s75, 16, %s448, [#allocation43]
    $region153: #{tpu_custom_call.1} parent=1 // pred_fallthru
      _
    // Predicated region
    $region154: #{tpu_custom_call.1} parent=1 // pred_check
      _
    $region155: #{tpu_custom_call.1} parent=1 // pred_check_branch
      %452 = sbr.rel (0) target = $region157
    $region156: #{tpu_custom_call.1} parent=1 // pred_region
      %s454 = ssub.s32 16, 16
      %455 = vsyncadd [#allocation43], %s454
      %s457 = sshll.u32 [#allocation44], 4
      %s458 = int_to_ptr.vmem [resolvable:$true] %s457
      %460 = dma.hbm_to_vmem [thread:$0]  %s77, 16, %s458, [#allocation43]
    $region157: #{tpu_custom_call.1} parent=1 // pred_fallthru
      _
    // Predicated region
    $region158: #{tpu_custom_call.1} parent=1 // pred_check
      _
    $region159: #{tpu_custom_call.1} parent=1 // pred_check_branch
      %462 = sbr.rel (0) target = $region161
    $region160: #{tpu_custom_call.1} parent=1 // pred_region
      %s464 = ssub.s32 512, 512
      %465 = vsyncadd [#allocation46], %s464
      %s466 = sshll.u32 [#allocation45], 4
      %s467 = int_to_ptr.vmem [resolvable:$true] %s466
      %472 = dma.hbm_to_vmem [thread:$0]  %s79, 512, %s467, [#allocation46], 128, 128, 8
    $region161: #{tpu_custom_call.1} parent=1 // pred_fallthru
      _
    // Predicated region
    $region162: #{tpu_custom_call.1} parent=1 // pred_check
      _
    $region163: #{tpu_custom_call.1} parent=1 // pred_check_branch
      %474 = sbr.rel (0) target = $region165
    $region164: #{tpu_custom_call.1} parent=1 // pred_region
      _
    $region165: #{tpu_custom_call.1} parent=1 // pred_fallthru
      _
    // Predicated region
    $region166: #{tpu_custom_call.1} parent=1 // pred_check
      _
    $region167: #{tpu_custom_call.1} parent=1 // pred_check_branch
      %476 = sbr.rel (0) target = $region169
    $region168: #{tpu_custom_call.1} parent=1 // pred_region
      %s478 = ssub.s32 16, 16
      %479 = vsyncadd [#allocation46], %s478
      %s481 = sshll.u32 [#allocation47], 4
      %s482 = int_to_ptr.vmem [resolvable:$true] %s481
      %484 = dma.hbm_to_vmem [thread:$0]  %s83, 16, %s482, [#allocation46]
    $region169: #{tpu_custom_call.1} parent=1 // pred_fallthru
      _
    // Predicated region
    $region170: #{tpu_custom_call.1} parent=1 // pred_check
      _
    $region171: #{tpu_custom_call.1} parent=1 // pred_check_branch
      %486 = sbr.rel (0) target = $region173
    $region172: #{tpu_custom_call.1} parent=1 // pred_region
      %s488 = ssub.s32 16, 16
      %489 = vsyncadd [#allocation49], %s488
      %s491 = sshll.u32 [#allocation48], 4
      %s492 = int_to_ptr.vmem [resolvable:$true] %s491
      %494 = dma.hbm_to_vmem [thread:$0]  %s85, 16, %s492, [#allocation49]
    $region173: #{tpu_custom_call.1} parent=1 // pred_fallthru
      _
    // Predicated region
    $region174: #{tpu_custom_call.1} parent=1 // pred_check
      _
    $region175: #{tpu_custom_call.1} parent=1 // pred_check_branch
      %496 = sbr.rel (0) target = $region177
    $region176: #{tpu_custom_call.1} parent=1 // pred_region
      %s498 = ssub.s32 512, 512
      %499 = vsyncadd [#allocation49], %s498
      %s500 = sshll.u32 [#allocation50], 4
      %s501 = int_to_ptr.vmem [resolvable:$true] %s500
      %506 = dma.hbm_to_vmem [thread:$0]  %s87, 512, %s501, [#allocation49], 128, 128, 8
    $region177: #{tpu_custom_call.1} parent=1 // pred_fallthru
      _
    // Predicated region
    $region178: #{tpu_custom_call.1} parent=1 // pred_check
      _
    $region179: #{tpu_custom_call.1} parent=1 // pred_check_branch
      %508 = sbr.rel (0) target = $region181
    $region180: #{tpu_custom_call.1} parent=1 // pred_region
      _
    $region181: #{tpu_custom_call.1} parent=1 // pred_fallthru
      _
    // Predicated region
    $region182: #{tpu_custom_call.1} parent=1 // pred_check
      _
    $region183: #{tpu_custom_call.1} parent=1 // pred_check_branch
      %510 = sbr.rel (0) target = $region185
    $region184: #{tpu_custom_call.1} parent=1 // pred_region
      %s512 = ssub.s32 16, 16
      %513 = vsyncadd [#allocation52], %s512
      %s515 = sshll.u32 [#allocation51], 4
      %s516 = int_to_ptr.vmem [resolvable:$true] %s515
      %518 = dma.hbm_to_vmem [thread:$0]  %s91, 16, %s516, [#allocation52]
    $region185: #{tpu_custom_call.1} parent=1 // pred_fallthru
      _
    // Predicated region
    $region186: #{tpu_custom_call.1} parent=1 // pred_check
      _
    $region187: #{tpu_custom_call.1} parent=1 // pred_check_branch
      %520 = sbr.rel (0) target = $region189
    $region188: #{tpu_custom_call.1} parent=1 // pred_region
      %s522 = ssub.s32 16, 16
      %523 = vsyncadd [#allocation52], %s522
      %s525 = sshll.u32 [#allocation53], 4
      %s526 = int_to_ptr.vmem [resolvable:$true] %s525
      %528 = dma.hbm_to_vmem [thread:$0]  %s93, 16, %s526, [#allocation52]
    $region189: #{tpu_custom_call.1} parent=1 // pred_fallthru
      _
    // Predicated region
    $region190: #{tpu_custom_call.1} parent=1 // pred_check
      _
    $region191: #{tpu_custom_call.1} parent=1 // pred_check_branch
      %530 = sbr.rel (0) target = $region193
    $region192: #{tpu_custom_call.1} parent=1 // pred_region
      %s532 = ssub.s32 512, 512
      %533 = vsyncadd [#allocation55], %s532
      %s534 = sshll.u32 [#allocation54], 4
      %s535 = int_to_ptr.vmem [resolvable:$true] %s534
      %540 = dma.hbm_to_vmem [thread:$0]  %s95, 512, %s535, [#allocation55], 128, 128, 8
    $region193: #{tpu_custom_call.1} parent=1 // pred_fallthru
      _
    // Predicated region
    $region194: #{tpu_custom_call.1} parent=1 // pred_check
      _
    $region195: #{tpu_custom_call.1} parent=1 // pred_check_branch
      %542 = sbr.rel (0) target = $region197
    $region196: #{tpu_custom_call.1} parent=1 // pred_region
      _
    $region197: #{tpu_custom_call.1} parent=1 // pred_fallthru
      _
    // Predicated region
    $region198: #{tpu_custom_call.1} parent=1 // pred_check
      _
    $region199: #{tpu_custom_call.1} parent=1 // pred_check_branch
      %544 = sbr.rel (0) target = $region201
    $region200: #{tpu_custom_call.1} parent=1 // pred_region
      %s546 = ssub.s32 16, 16
      %547 = vsyncadd [#allocation55], %s546
      %s549 = sshll.u32 [#allocation56], 4
      %s550 = int_to_ptr.vmem [resolvable:$true] %s549
      %552 = dma.hbm_to_vmem [thread:$0]  %s99, 16, %s550, [#allocation55]
    $region201: #{tpu_custom_call.1} parent=1 // pred_fallthru
      _
    // Predicated region
    $region202: #{tpu_custom_call.1} parent=1 // pred_check
      _
    $region203: #{tpu_custom_call.1} parent=1 // pred_check_branch
      %554 = sbr.rel (0) target = $region205
    $region204: #{tpu_custom_call.1} parent=1 // pred_region
      _
    $region205: #{tpu_custom_call.1} parent=1 // pred_fallthru
      _
    // Predicated region
    $region206: #{tpu_custom_call.1} parent=1 // pred_check
      _
    $region207: #{tpu_custom_call.1} parent=1 // pred_check_branch
      %556 = sbr.rel (0) target = $region209
    $region208: #{tpu_custom_call.1} parent=1 // pred_region
      %s558 = ssub.s32 16, 16
      %559 = vsyncadd [#allocation58], %s558
      %s561 = sshll.u32 [#allocation57], 4
      %s562 = int_to_ptr.vmem [resolvable:$true] %s561
      %564 = dma.hbm_to_vmem [thread:$0]  %s103, 16, %s562, [#allocation58]
    $region209: #{tpu_custom_call.1} parent=1 // pred_fallthru
      _
    // Predicated region
    $region210: #{tpu_custom_call.1} parent=1 // pred_check
      _
    $region211: #{tpu_custom_call.1} parent=1 // pred_check_branch
      %566 = sbr.rel (0) target = $region213
    $region212: #{tpu_custom_call.1} parent=1 // pred_region
      _
    $region213: #{tpu_custom_call.1} parent=1 // pred_fallthru
      _
    // Predicated region
    $region214: #{tpu_custom_call.1} parent=1 // pred_check
      _
    $region215: #{tpu_custom_call.1} parent=1 // pred_check_branch
      %568 = sbr.rel (0) target = $region217
    $region216: #{tpu_custom_call.1} parent=1 // pred_region
      _
    $region217: #{tpu_custom_call.1} parent=1 // pred_fallthru
      _
    // Predicated region
    $region218: #{tpu_custom_call.1} parent=1 // pred_check
      _
    $region219: #{tpu_custom_call.1} parent=1 // pred_check_branch
      %570 = sbr.rel (0) target = $region221
    $region220: #{tpu_custom_call.1} parent=1 // pred_region
      _
    $region221: #{tpu_custom_call.1} parent=1 // pred_fallthru
      _
    // Predicated region
    $region222: #{tpu_custom_call.1} parent=1 // pred_check
      _
    $region223: #{tpu_custom_call.1} parent=1 // pred_check_branch
      %572 = sbr.rel (0) target = $region225
    $region224: #{tpu_custom_call.1} parent=1 // pred_region
      _
    $region225: #{tpu_custom_call.1} parent=1 // pred_fallthru
      _
    // Predicated region
    $region226: #{tpu_custom_call.1} parent=1 // pred_check
      _
    $region227: #{tpu_custom_call.1} parent=1 // pred_check_branch
      %574 = sbr.rel (0) target = $region229
    $region228: #{tpu_custom_call.1} parent=1 // pred_region
      _
    $region229: #{tpu_custom_call.1} parent=1 // pred_fallthru
      _
    // Predicated region
    $region230: #{tpu_custom_call.1} parent=1 // pred_check
      _
    $region231: #{tpu_custom_call.1} parent=1 // pred_check_branch
      %576 = sbr.rel (0) target = $region233
    $region232: #{tpu_custom_call.1} parent=1 // pred_region
      _
    $region233: #{tpu_custom_call.1} parent=1 // pred_fallthru
      _
    // Predicated region
    $region234: #{tpu_custom_call.1} parent=1 // pred_check
      _
    $region235: #{tpu_custom_call.1} parent=1 // pred_check_branch
      %578 = sbr.rel (0) target = $region237
    $region236: #{tpu_custom_call.1} parent=1 // pred_region
      _
    $region237: #{tpu_custom_call.1} parent=1 // pred_fallthru
      _
    // Predicated region
    $region238: #{tpu_custom_call.1} parent=1 // pred_check
      _
    $region239: #{tpu_custom_call.1} parent=1 // pred_check_branch
      %580 = sbr.rel (0) target = $region241
    $region240: #{tpu_custom_call.1} parent=1 // pred_region
      _
    $region241: #{tpu_custom_call.1} parent=1 // pred_fallthru
      _
    // Predicated region
    $region242: #{tpu_custom_call.1} parent=1 // pred_check
      _
    $region243: #{tpu_custom_call.1} parent=1 // pred_check_branch
      %582 = sbr.rel (0) target = $region245
    $region244: #{tpu_custom_call.1} parent=1 // pred_region
      _
    $region245: #{tpu_custom_call.1} parent=1 // pred_fallthru
      _
    // Predicated region
    $region246: #{tpu_custom_call.1} parent=1 // pred_check
      _
    $region247: #{tpu_custom_call.1} parent=1 // pred_check_branch
      %584 = sbr.rel (0) target = $region249
    $region248: #{tpu_custom_call.1} parent=1 // pred_region
      _
    $region249: #{tpu_custom_call.1} parent=1 // pred_fallthru
      _
    // Predicated region
    $region250: #{tpu_custom_call.1} parent=1 // pred_check
      _
    $region251: #{tpu_custom_call.1} parent=1 // pred_check_branch
      %586 = sbr.rel (0) target = $region253
    $region252: #{tpu_custom_call.1} parent=1 // pred_region
      _
    $region253: #{tpu_custom_call.1} parent=1 // pred_fallthru
      _
    // Predicated region
    $region254: #{tpu_custom_call.1} parent=1 // pred_check
      _
    $region255: #{tpu_custom_call.1} parent=1 // pred_check_branch
      %588 = sbr.rel (0) target = $region257
    $region256: #{tpu_custom_call.1} parent=1 // pred_region
      %589 = dma.done [#allocation5], 128
    $region257: #{tpu_custom_call.1} parent=1 // pred_fallthru
      _
    // Predicated region
    $region258: #{tpu_custom_call.1} parent=1 // pred_check
      _
    $region259: #{tpu_custom_call.1} parent=1 // pred_check_branch
      %591 = sbr.rel (0) target = $region261
    $region260: #{tpu_custom_call.1} parent=1 // pred_region
      %592 = dma.done [#allocation7], 16
    $region261: #{tpu_custom_call.1} parent=1 // pred_fallthru
      _
    // Predicated region
    $region262: #{tpu_custom_call.1} parent=1 // pred_check
      _
    $region263: #{tpu_custom_call.1} parent=1 // pred_check_branch
      %594 = sbr.rel (0) target = $region265
    $region264: #{tpu_custom_call.1} parent=1 // pred_region
      %595 = dma.done [#allocation7], 16
    $region265: #{tpu_custom_call.1} parent=1 // pred_fallthru
      _
    // Predicated region
    $region266: #{tpu_custom_call.1} parent=1 // pred_check
      _
    $region267: #{tpu_custom_call.1} parent=1 // pred_check_branch
      %597 = sbr.rel (0) target = $region269
    $region268: #{tpu_custom_call.1} parent=1 // pred_region
      %598 = dma.done [#allocation10], 256
    $region269: #{tpu_custom_call.1} parent=1 // pred_fallthru
      _
    // Predicated region
    $region270: #{tpu_custom_call.1} parent=1 // pred_check
      _
    $region271: #{tpu_custom_call.1} parent=1 // pred_check_branch
      %600 = sbr.rel (0) target = $region273
    $region272: #{tpu_custom_call.1} parent=1 // pred_region
      %601 = dma.done [#allocation10], 16
    $region273: #{tpu_custom_call.1} parent=1 // pred_fallthru
      _
    // Predicated region
    $region274: #{tpu_custom_call.1} parent=1 // pred_check
      _
    $region275: #{tpu_custom_call.1} parent=1 // pred_check_branch
      %603 = sbr.rel (0) target = $region277
    $region276: #{tpu_custom_call.1} parent=1 // pred_region
      %604 = dma.done [#allocation13], 16
    $region277: #{tpu_custom_call.1} parent=1 // pred_fallthru
      _
    // Predicated region
    $region278: #{tpu_custom_call.1} parent=1 // pred_check
      _
    $region279: #{tpu_custom_call.1} parent=1 // pred_check_branch
      %606 = sbr.rel (0) target = $region281
    $region280: #{tpu_custom_call.1} parent=1 // pred_region
      %607 = dma.done [#allocation13], 256
    $region281: #{tpu_custom_call.1} parent=1 // pred_fallthru
      _
    // Predicated region
    $region282: #{tpu_custom_call.1} parent=1 // pred_check
      _
    $region283: #{tpu_custom_call.1} parent=1 // pred_check_branch
      %609 = sbr.rel (0) target = $region285
    $region284: #{tpu_custom_call.1} parent=1 // pred_region
      %610 = dma.done [#allocation16], 16
    $region285: #{tpu_custom_call.1} parent=1 // pred_fallthru
      _
    // Predicated region
    $region286: #{tpu_custom_call.1} parent=1 // pred_check
      _
    $region287: #{tpu_custom_call.1} parent=1 // pred_check_branch
      %612 = sbr.rel (0) target = $region289
    $region288: #{tpu_custom_call.1} parent=1 // pred_region
      %613 = dma.done [#allocation16], 16
    $region289: #{tpu_custom_call.1} parent=1 // pred_fallthru
      _
    // Predicated region
    $region290: #{tpu_custom_call.1} parent=1 // pred_check
      _
    $region291: #{tpu_custom_call.1} parent=1 // pred_check_branch
      %615 = sbr.rel (0) target = $region293
    $region292: #{tpu_custom_call.1} parent=1 // pred_region
      %616 = dma.done [#allocation19], 256
    $region293: #{tpu_custom_call.1} parent=1 // pred_fallthru
      _
    // Predicated region
    $region294: #{tpu_custom_call.1} parent=1 // pred_check
      _
    $region295: #{tpu_custom_call.1} parent=1 // pred_check_branch
      %618 = sbr.rel (0) target = $region297
    $region296: #{tpu_custom_call.1} parent=1 // pred_region
      %619 = dma.done [#allocation19], 16
    $region297: #{tpu_custom_call.1} parent=1 // pred_fallthru
      _
    // Predicated region
    $region298: #{tpu_custom_call.1} parent=1 // pred_check
      _
    $region299: #{tpu_custom_call.1} parent=1 // pred_check_branch
      %621 = sbr.rel (0) target = $region301
    $region300: #{tpu_custom_call.1} parent=1 // pred_region
      %622 = dma.done [#allocation22], 16
    $region301: #{tpu_custom_call.1} parent=1 // pred_fallthru
      _
    // Predicated region
    $region302: #{tpu_custom_call.1} parent=1 // pred_check
      _
    $region303: #{tpu_custom_call.1} parent=1 // pred_check_branch
      %624 = sbr.rel (0) target = $region305
    $region304: #{tpu_custom_call.1} parent=1 // pred_region
      %625 = dma.done [#allocation22], 16
    $region305: #{tpu_custom_call.1} parent=1 // pred_fallthru
      _
    // Predicated region
    $region306: #{tpu_custom_call.1} parent=1 // pred_check
      _
    $region307: #{tpu_custom_call.1} parent=1 // pred_check_branch
      %627 = sbr.rel (0) target = $region309
    $region308: #{tpu_custom_call.1} parent=1 // pred_region
      %628 = dma.done [#allocation25], 16
    $region309: #{tpu_custom_call.1} parent=1 // pred_fallthru
      _
    // Predicated region
    $region310: #{tpu_custom_call.1} parent=1 // pred_check
      _
    $region311: #{tpu_custom_call.1} parent=1 // pred_check_branch
      %630 = sbr.rel (0) target = $region313
    $region312: #{tpu_custom_call.1} parent=1 // pred_region
      %631 = dma.done [#allocation25], 16
    $region313: #{tpu_custom_call.1} parent=1 // pred_fallthru
      _
    // Predicated region
    $region314: #{tpu_custom_call.1} parent=1 // pred_check
      _
    $region315: #{tpu_custom_call.1} parent=1 // pred_check_branch
      %633 = sbr.rel (0) target = $region317
    $region316: #{tpu_custom_call.1} parent=1 // pred_region
      %634 = dma.done [#allocation28], 512
    $region317: #{tpu_custom_call.1} parent=1 // pred_fallthru
      _
    // Predicated region
    $region318: #{tpu_custom_call.1} parent=1 // pred_check
      _
    $region319: #{tpu_custom_call.1} parent=1 // pred_check_branch
      %636 = sbr.rel (0) target = $region321
    $region320: #{tpu_custom_call.1} parent=1 // pred_region
      %637 = dma.done [#allocation28], 16
    $region321: #{tpu_custom_call.1} parent=1 // pred_fallthru
      _
    // Predicated region
    $region322: #{tpu_custom_call.1} parent=1 // pred_check
      _
    $region323: #{tpu_custom_call.1} parent=1 // pred_check_branch
      %639 = sbr.rel (0) target = $region325
    $region324: #{tpu_custom_call.1} parent=1 // pred_region
      %640 = dma.done [#allocation31], 16
    $region325: #{tpu_custom_call.1} parent=1 // pred_fallthru
      _
    // Predicated region
    $region326: #{tpu_custom_call.1} parent=1 // pred_check
      _
    $region327: #{tpu_custom_call.1} parent=1 // pred_check_branch
      %642 = sbr.rel (0) target = $region329
    $region328: #{tpu_custom_call.1} parent=1 // pred_region
      %643 = dma.done [#allocation31], 512
    $region329: #{tpu_custom_call.1} parent=1 // pred_fallthru
      _
    // Predicated region
    $region330: #{tpu_custom_call.1} parent=1 // pred_check
      _
    $region331: #{tpu_custom_call.1} parent=1 // pred_check_branch
      %645 = sbr.rel (0) target = $region333
    $region332: #{tpu_custom_call.1} parent=1 // pred_region
      %646 = dma.done [#allocation34], 16
    $region333: #{tpu_custom_call.1} parent=1 // pred_fallthru
      _
    // Predicated region
    $region334: #{tpu_custom_call.1} parent=1 // pred_check
      _
    $region335: #{tpu_custom_call.1} parent=1 // pred_check_branch
      %648 = sbr.rel (0) target = $region337
    $region336: #{tpu_custom_call.1} parent=1 // pred_region
      %649 = dma.done [#allocation34], 16
    $region337: #{tpu_custom_call.1} parent=1 // pred_fallthru
      _
    // Predicated region
    $region338: #{tpu_custom_call.1} parent=1 // pred_check
      _
    $region339: #{tpu_custom_call.1} parent=1 // pred_check_branch
      %651 = sbr.rel (0) target = $region341
    $region340: #{tpu_custom_call.1} parent=1 // pred_region
      %652 = dma.done [#allocation37], 512
    $region341: #{tpu_custom_call.1} parent=1 // pred_fallthru
      _
    // Predicated region
    $region342: #{tpu_custom_call.1} parent=1 // pred_check
      _
    $region343: #{tpu_custom_call.1} parent=1 // pred_check_branch
      %654 = sbr.rel (0) target = $region345
    $region344: #{tpu_custom_call.1} parent=1 // pred_region
      %655 = dma.done [#allocation37], 16
    $region345: #{tpu_custom_call.1} parent=1 // pred_fallthru
      _
    // Predicated region
    $region346: #{tpu_custom_call.1} parent=1 // pred_check
      _
    $region347: #{tpu_custom_call.1} parent=1 // pred_check_branch
      %657 = sbr.rel (0) target = $region349
    $region348: #{tpu_custom_call.1} parent=1 // pred_region
      %658 = dma.done [#allocation40], 16
    $region349: #{tpu_custom_call.1} parent=1 // pred_fallthru
      _
    // Predicated region
    $region350: #{tpu_custom_call.1} parent=1 // pred_check
      _
    $region351: #{tpu_custom_call.1} parent=1 // pred_check_branch
      %660 = sbr.rel (0) target = $region353
    $region352: #{tpu_custom_call.1} parent=1 // pred_region
      %661 = dma.done [#allocation40], 16
    $region353: #{tpu_custom_call.1} parent=1 // pred_fallthru
      _
    // Predicated region
    $region354: #{tpu_custom_call.1} parent=1 // pred_check
      _
    $region355: #{tpu_custom_call.1} parent=1 // pred_check_branch
      %663 = sbr.rel (0) target = $region357
    $region356: #{tpu_custom_call.1} parent=1 // pred_region
      %664 = dma.done [#allocation43], 16
    $region357: #{tpu_custom_call.1} parent=1 // pred_fallthru
      _
    // Predicated region
    $region358: #{tpu_custom_call.1} parent=1 // pred_check
      _
    $region359: #{tpu_custom_call.1} parent=1 // pred_check_branch
      %666 = sbr.rel (0) target = $region361
    $region360: #{tpu_custom_call.1} parent=1 // pred_region
      %667 = dma.done [#allocation43], 16
    $region361: #{tpu_custom_call.1} parent=1 // pred_fallthru
      _
    // Predicated region
    $region362: #{tpu_custom_call.1} parent=1 // pred_check
      _
    $region363: #{tpu_custom_call.1} parent=1 // pred_check_branch
      %669 = sbr.rel (0) target = $region365
    $region364: #{tpu_custom_call.1} parent=1 // pred_region
      %670 = dma.done [#allocation46], 512
    $region365: #{tpu_custom_call.1} parent=1 // pred_fallthru
      _
    // Predicated region
    $region366: #{tpu_custom_call.1} parent=1 // pred_check
      _
    $region367: #{tpu_custom_call.1} parent=1 // pred_check_branch
      %672 = sbr.rel (0) target = $region369
    $region368: #{tpu_custom_call.1} parent=1 // pred_region
      %673 = dma.done [#allocation46], 16
    $region369: #{tpu_custom_call.1} parent=1 // pred_fallthru
      _
    // Predicated region
    $region370: #{tpu_custom_call.1} parent=1 // pred_check
      _
    $region371: #{tpu_custom_call.1} parent=1 // pred_check_branch
      %675 = sbr.rel (0) target = $region373
    $region372: #{tpu_custom_call.1} parent=1 // pred_region
      %676 = dma.done [#allocation49], 16
    $region373: #{tpu_custom_call.1} parent=1 // pred_fallthru
      _
    // Predicated region
    $region374: #{tpu_custom_call.1} parent=1 // pred_check
      _
    $region375: #{tpu_custom_call.1} parent=1 // pred_check_branch
      %678 = sbr.rel (0) target = $region377
    $region376: #{tpu_custom_call.1} parent=1 // pred_region
      %679 = dma.done [#allocation49], 512
    $region377: #{tpu_custom_call.1} parent=1 // pred_fallthru
      _
    // Predicated region
    $region378: #{tpu_custom_call.1} parent=1 // pred_check
      _
    $region379: #{tpu_custom_call.1} parent=1 // pred_check_branch
      %681 = sbr.rel (0) target = $region381
    $region380: #{tpu_custom_call.1} parent=1 // pred_region
      %682 = dma.done [#allocation52], 16
    $region381: #{tpu_custom_call.1} parent=1 // pred_fallthru
      _
    // Predicated region
    $region382: #{tpu_custom_call.1} parent=1 // pred_check
      _
    $region383: #{tpu_custom_call.1} parent=1 // pred_check_branch
      %684 = sbr.rel (0) target = $region385
    $region384: #{tpu_custom_call.1} parent=1 // pred_region
      %685 = dma.done [#allocation52], 16
    $region385: #{tpu_custom_call.1} parent=1 // pred_fallthru
      _
    // Predicated region
    $region386: #{tpu_custom_call.1} parent=1 // pred_check
      _
    $region387: #{tpu_custom_call.1} parent=1 // pred_check_branch
      %687 = sbr.rel (0) target = $region389
    $region388: #{tpu_custom_call.1} parent=1 // pred_region
      %688 = dma.done [#allocation55], 512
    $region389: #{tpu_custom_call.1} parent=1 // pred_fallthru
      _
    // Predicated region
    $region390: #{tpu_custom_call.1} parent=1 // pred_check
      _
    $region391: #{tpu_custom_call.1} parent=1 // pred_check_branch
      %690 = sbr.rel (0) target = $region393
    $region392: #{tpu_custom_call.1} parent=1 // pred_region
      %691 = dma.done [#allocation55], 16
    $region393: #{tpu_custom_call.1} parent=1 // pred_fallthru
      _
    // Predicated region
    $region394: #{tpu_custom_call.1} parent=1 // pred_check
      _
    $region395: #{tpu_custom_call.1} parent=1 // pred_check_branch
      %693 = sbr.rel (0) target = $region397
    $region396: #{tpu_custom_call.1} parent=1 // pred_region
      %694 = dma.done [#allocation58], 16
    $region397: #{tpu_custom_call.1} parent=1 // pred_fallthru
      _
    %v695 = vld [vmem:[#allocation4] sm:$0xff]
    %v696 = vld [vmem:[#allocation9] sm:$0xff]
    %v697 = vld [vmem:[#allocation9 + $0x8] sm:$0xff]
    %v698 = vld [vmem:[#allocation6] sm:$0x1]
    %v700 = vlaneseq
    %v701 = vshrl.u32 %v700, 7
    %v702 = vsub.s32 0, %v701
    %v703 = vrot.slane %v698, %v702
    %vm705 = vcmask 130048
    %v707 = vsel %vm705, %v695, 0
    %709 = vmatprep.subr.mxu0 0.0
    %710 = vmatpush1.msra.mxu0 %v696
    %711 = vmatprep.subr.mxu0 0.0
    %712 = vmatpush1.msra.mxu0 %v697
    %713 = vmatprep.subr.mxu0 0.0
    %714 = vmatpush1.msra.mxu0 0.0
    %715 = vmatprep.subr.mxu0 0.0
    %716 = vmatpush1.msra.mxu0 0.0
    %717 = vmatprep.subr.mxu0 0.0
    %718 = vmatpush1.msra.mxu0 0.0
    %719 = vmatprep.subr.mxu0 0.0
    %720 = vmatpush1.msra.mxu0 0.0
    %721 = vmatprep.subr.mxu0 0.0
    %722 = vmatpush1.msra.mxu0 0.0
    %723 = vmatprep.subr.mxu0 0.0
    %724 = vmatpush1.msra.mxu0 0.0
    %725 = vmatprep.subr.mxu0 0.0
    %726 = vmatpush1.msra.mxu0 0.0
    %727 = vmatprep.subr.mxu0 0.0
    %728 = vmatpush1.msra.mxu0 0.0
    %729 = vmatprep.subr.mxu0 0.0
    %730 = vmatpush1.msra.mxu0 0.0
    %731 = vmatprep.subr.mxu0 0.0
    %732 = vmatpush1.msra.mxu0 0.0
    %733 = vmatprep.subr.mxu0 0.0
    %734 = vmatpush1.msra.mxu0 0.0
    %735 = vmatprep.subr.mxu0 0.0
    %736 = vmatpush1.msra.mxu0 0.0
    %737 = vmatprep.subr.mxu0 0.0
    %738 = vmatpush1.msra.mxu0 0.0
    %739 = vmatprep.subr.mxu0 0.0
    %740 = vmatpush1.msra.mxu0 0.0
    %741 = vmatprep.subr.mxu0 0.0
    %742 = vmatpush1.msra.mxu0 0.0
    %743 = vmatprep.subr.mxu0 0.0
    %744 = vmatpush1.msra.mxu0 0.0
    %745 = vmatprep.subr.mxu0 0.0
    %746 = vmatpush1.msra.mxu0 0.0
    %747 = vmatprep.subr.mxu0 0.0
    %748 = vmatpush1.msra.mxu0 0.0
    %749 = vmatprep.subr.mxu0 0.0
    %750 = vmatpush1.msra.mxu0 0.0
    %751 = vmatprep.subr.mxu0 0.0
    %752 = vmatpush1.msra.mxu0 0.0
    %753 = vmatprep.subr.mxu0 0.0
    %754 = vmatpush1.msra.mxu0 0.0
    %755 = vmatprep.subr.mxu0 0.0
    %756 = vmatpush1.msra.mxu0 0.0
    %757 = vmatprep.subr.mxu0 0.0
    %758 = vmatpush1.msra.mxu0 0.0
    %759 = vmatprep.subr.mxu0 0.0
    %760 = vmatpush1.msra.mxu0 0.0
    %761 = vmatprep.subr.mxu0 0.0
    %762 = vmatpush1.msra.mxu0 0.0
    %763 = vmatprep.subr.mxu0 0.0
    %764 = vmatpush1.msra.mxu0 0.0
    %765 = vmatprep.subr.mxu0 0.0
    %766 = vmatpush1.msra.mxu0 0.0
    %767 = vmatprep.subr.mxu0 0.0
    %768 = vmatpush1.msra.mxu0 0.0
    %769 = vmatprep.subr.mxu0 0.0
    %770 = vmatpush1.msra.mxu0 0.0
    %771 = vmatprep.subr.mxu0 0.0
    %772 = vmatpush1.msra.mxu0 0.0
    %773 = vmatprep.mubr.f32.mxu0 0.0
    %774 = vmatmul.mubr.f32.gmra.mrb[0].mxu0 %v707
    %v775 = vpop.f32.mrb[0].mxu0
    %v776 = vadd.f32 %v703, %v775
    %v777 = vpop.f32.mrb[0].mxu0
    %778 = vdwg.mxu0
    %v779 = vmax.f32 %v776, 0.0
    %v780 = vld [vmem:[%s9] sm:$0xff]
    %v781 = vld [vmem:[%s9 + $0x8] sm:$0xff]
    %v782 = vld [vmem:[%s9 + $0x10] sm:$0xff]
    %v783 = vld [vmem:[%s9 + $0x18] sm:$0xff]
    %v784 = vld [vmem:[%s9 + $0x20] sm:$0xff]
    %v785 = vld [vmem:[%s9 + $0x28] sm:$0xff]
    %v786 = vld [vmem:[%s9 + $0x30] sm:$0xff]
    %v787 = vld [vmem:[%s9 + $0x38] sm:$0xff]
    %v788 = vld [vmem:[#allocation8] sm:$0x1]
    %v790 = vlaneseq
    %v791 = vshrl.u32 %v790, 7
    %v792 = vsub.s32 0, %v791
    %v793 = vrot.slane %v788, %v792
    %vm795 = vcmask 523264
    %v797 = vsel %vm795, %v779, 0
    %799 = vmatprep.subr.mxu0 0.0
    %800 = vmatpush1.msra.mxu0 %v780
    %801 = vmatprep.subr.mxu0 0.0
    %802 = vmatpush1.msra.mxu0 %v781
    %803 = vmatprep.subr.mxu0 0.0
    %804 = vmatpush1.msra.mxu0 %v782
    %805 = vmatprep.subr.mxu0 0.0
    %806 = vmatpush1.msra.mxu0 %v783
    %807 = vmatprep.subr.mxu0 0.0
    %808 = vmatpush1.msra.mxu0 %v784
    %809 = vmatprep.subr.mxu0 0.0
    %810 = vmatpush1.msra.mxu0 %v785
    %811 = vmatprep.subr.mxu0 0.0
    %812 = vmatpush1.msra.mxu0 %v786
    %813 = vmatprep.subr.mxu0 0.0
    %814 = vmatpush1.msra.mxu0 %v787
    %815 = vmatprep.subr.mxu0 0.0
    %816 = vmatpush1.msra.mxu0 0.0
    %817 = vmatprep.subr.mxu0 0.0
    %818 = vmatpush1.msra.mxu0 0.0
    %819 = vmatprep.subr.mxu0 0.0
    %820 = vmatpush1.msra.mxu0 0.0
    %821 = vmatprep.subr.mxu0 0.0
    %822 = vmatpush1.msra.mxu0 0.0
    %823 = vmatprep.subr.mxu0 0.0
    %824 = vmatpush1.msra.mxu0 0.0
    %825 = vmatprep.subr.mxu0 0.0
    %826 = vmatpush1.msra.mxu0 0.0
    %827 = vmatprep.subr.mxu0 0.0
    %828 = vmatpush1.msra.mxu0 0.0
    %829 = vmatprep.subr.mxu0 0.0
    %830 = vmatpush1.msra.mxu0 0.0
    %831 = vmatprep.subr.mxu0 0.0
    %832 = vmatpush1.msra.mxu0 0.0
    %833 = vmatprep.subr.mxu0 0.0
    %834 = vmatpush1.msra.mxu0 0.0
    %835 = vmatprep.subr.mxu0 0.0
    %836 = vmatpush1.msra.mxu0 0.0
    %837 = vmatprep.subr.mxu0 0.0
    %838 = vmatpush1.msra.mxu0 0.0
    %839 = vmatprep.subr.mxu0 0.0
    %840 = vmatpush1.msra.mxu0 0.0
    %841 = vmatprep.subr.mxu0 0.0
    %842 = vmatpush1.msra.mxu0 0.0
    %843 = vmatprep.subr.mxu0 0.0
    %844 = vmatpush1.msra.mxu0 0.0
    %845 = vmatprep.subr.mxu0 0.0
    %846 = vmatpush1.msra.mxu0 0.0
    %847 = vmatprep.subr.mxu0 0.0
    %848 = vmatpush1.msra.mxu0 0.0
    %849 = vmatprep.subr.mxu0 0.0
    %850 = vmatpush1.msra.mxu0 0.0
    %851 = vmatprep.subr.mxu0 0.0
    %852 = vmatpush1.msra.mxu0 0.0
    %853 = vmatprep.subr.mxu0 0.0
    %854 = vmatpush1.msra.mxu0 0.0
    %855 = vmatprep.subr.mxu0 0.0
    %856 = vmatpush1.msra.mxu0 0.0
    %857 = vmatprep.subr.mxu0 0.0
    %858 = vmatpush1.msra.mxu0 0.0
    %859 = vmatprep.subr.mxu0 0.0
    %860 = vmatpush1.msra.mxu0 0.0
    %861 = vmatprep.subr.mxu0 0.0
    %862 = vmatpush1.msra.mxu0 0.0
    %863 = vmatprep.mubr.f32.mxu0 0.0
    %864 = vmatmul.mubr.f32.gmra.mrb[0].mxu0 %v797
    %v865 = vpop.f32.mrb[0].mxu0
    %v866 = vadd.f32 %v793, %v865
    %v867 = vpop.f32.mrb[0].mxu0
    %868 = vdwg.mxu0
    %v869 = vld [vmem:[#allocation14] sm:$0xff]
    %v870 = vld [vmem:[#allocation14 + $0x8] sm:$0xff]
    %v871 = vld [vmem:[#allocation11] sm:$0x1]
    %v873 = vlaneseq
    %v874 = vshrl.u32 %v873, 7
    %v875 = vsub.s32 0, %v874
    %v876 = vrot.slane %v871, %v875
    %878 = vmatprep.subr.mxu0 0.0
    %879 = vmatpush1.msra.mxu0 %v869
    %880 = vmatprep.subr.mxu0 0.0
    %881 = vmatpush1.msra.mxu0 %v870
    %882 = vmatprep.subr.mxu0 0.0
    %883 = vmatpush1.msra.mxu0 0.0
    %884 = vmatprep.subr.mxu0 0.0
    %885 = vmatpush1.msra.mxu0 0.0
    %886 = vmatprep.subr.mxu0 0.0
    %887 = vmatpush1.msra.mxu0 0.0
    %888 = vmatprep.subr.mxu0 0.0
    %889 = vmatpush1.msra.mxu0 0.0
    %890 = vmatprep.subr.mxu0 0.0
    %891 = vmatpush1.msra.mxu0 0.0
    %892 = vmatprep.subr.mxu0 0.0
    %893 = vmatpush1.msra.mxu0 0.0
    %894 = vmatprep.subr.mxu0 0.0
    %895 = vmatpush1.msra.mxu0 0.0
    %896 = vmatprep.subr.mxu0 0.0
    %897 = vmatpush1.msra.mxu0 0.0
    %898 = vmatprep.subr.mxu0 0.0
    %899 = vmatpush1.msra.mxu0 0.0
    %900 = vmatprep.subr.mxu0 0.0
    %901 = vmatpush1.msra.mxu0 0.0
    %902 = vmatprep.subr.mxu0 0.0
    %903 = vmatpush1.msra.mxu0 0.0
    %904 = vmatprep.subr.mxu0 0.0
    %905 = vmatpush1.msra.mxu0 0.0
    %906 = vmatprep.subr.mxu0 0.0
    %907 = vmatpush1.msra.mxu0 0.0
    %908 = vmatprep.subr.mxu0 0.0
    %909 = vmatpush1.msra.mxu0 0.0
    %910 = vmatprep.subr.mxu0 0.0
    %911 = vmatpush1.msra.mxu0 0.0
    %912 = vmatprep.subr.mxu0 0.0
    %913 = vmatpush1.msra.mxu0 0.0
    %914 = vmatprep.subr.mxu0 0.0
    %915 = vmatpush1.msra.mxu0 0.0
    %916 = vmatprep.subr.mxu0 0.0
    %917 = vmatpush1.msra.mxu0 0.0
    %918 = vmatprep.subr.mxu0 0.0
    %919 = vmatpush1.msra.mxu0 0.0
    %920 = vmatprep.subr.mxu0 0.0
    %921 = vmatpush1.msra.mxu0 0.0
    %922 = vmatprep.subr.mxu0 0.0
    %923 = vmatpush1.msra.mxu0 0.0
    %924 = vmatprep.subr.mxu0 0.0
    %925 = vmatpush1.msra.mxu0 0.0
    %926 = vmatprep.subr.mxu0 0.0
    %927 = vmatpush1.msra.mxu0 0.0
    %928 = vmatprep.subr.mxu0 0.0
    %929 = vmatpush1.msra.mxu0 0.0
    %930 = vmatprep.subr.mxu0 0.0
    %931 = vmatpush1.msra.mxu0 0.0
    %932 = vmatprep.subr.mxu0 0.0
    %933 = vmatpush1.msra.mxu0 0.0
    %934 = vmatprep.subr.mxu0 0.0
    %935 = vmatpush1.msra.mxu0 0.0
    %936 = vmatprep.subr.mxu0 0.0
    %937 = vmatpush1.msra.mxu0 0.0
    %938 = vmatprep.subr.mxu0 0.0
    %939 = vmatpush1.msra.mxu0 0.0
    %940 = vmatprep.subr.mxu0 0.0
    %941 = vmatpush1.msra.mxu0 0.0
    %942 = vmatprep.mubr.f32.mxu0 0.0
    %943 = vmatmul.mubr.f32.gmra.mrb[0].mxu0 %v707
    %v944 = vpop.f32.mrb[0].mxu0
    %v945 = vadd.f32 %v876, %v944
    %v946 = vpop.f32.mrb[0].mxu0
    %947 = vdwg.mxu0
    %v948 = vmax.f32 %v945, 0.0
    %v949 = vld [vmem:[%s17] sm:$0xff]
    %v950 = vld [vmem:[%s17 + $0x8] sm:$0xff]
    %v951 = vld [vmem:[%s17 + $0x10] sm:$0xff]
    %v952 = vld [vmem:[%s17 + $0x18] sm:$0xff]
    %v953 = vld [vmem:[%s17 + $0x20] sm:$0xff]
    %v954 = vld [vmem:[%s17 + $0x28] sm:$0xff]
    %v955 = vld [vmem:[%s17 + $0x30] sm:$0xff]
    %v956 = vld [vmem:[%s17 + $0x38] sm:$0xff]
    %v957 = vld [vmem:[#allocation12] sm:$0x1]
    %v959 = vlaneseq
    %v960 = vshrl.u32 %v959, 7
    %v961 = vsub.s32 0, %v960
    %v962 = vrot.slane %v957, %v961
    %v965 = vsel %vm795, %v948, 0
    %967 = vmatprep.subr.mxu0 0.0
    %968 = vmatpush1.msra.mxu0 %v949
    %969 = vmatprep.subr.mxu0 0.0
    %970 = vmatpush1.msra.mxu0 %v950
    %971 = vmatprep.subr.mxu0 0.0
    %972 = vmatpush1.msra.mxu0 %v951
    %973 = vmatprep.subr.mxu0 0.0
    %974 = vmatpush1.msra.mxu0 %v952
    %975 = vmatprep.subr.mxu0 0.0
    %976 = vmatpush1.msra.mxu0 %v953
    %977 = vmatprep.subr.mxu0 0.0
    %978 = vmatpush1.msra.mxu0 %v954
    %979 = vmatprep.subr.mxu0 0.0
    %980 = vmatpush1.msra.mxu0 %v955
    %981 = vmatprep.subr.mxu0 0.0
    %982 = vmatpush1.msra.mxu0 %v956
    %983 = vmatprep.subr.mxu0 0.0
    %984 = vmatpush1.msra.mxu0 0.0
    %985 = vmatprep.subr.mxu0 0.0
    %986 = vmatpush1.msra.mxu0 0.0
    %987 = vmatprep.subr.mxu0 0.0
    %988 = vmatpush1.msra.mxu0 0.0
    %989 = vmatprep.subr.mxu0 0.0
    %990 = vmatpush1.msra.mxu0 0.0
    %991 = vmatprep.subr.mxu0 0.0
    %992 = vmatpush1.msra.mxu0 0.0
    %993 = vmatprep.subr.mxu0 0.0
    %994 = vmatpush1.msra.mxu0 0.0
    %995 = vmatprep.subr.mxu0 0.0
    %996 = vmatpush1.msra.mxu0 0.0
    %997 = vmatprep.subr.mxu0 0.0
    %998 = vmatpush1.msra.mxu0 0.0
    %999 = vmatprep.subr.mxu0 0.0
    %1000 = vmatpush1.msra.mxu0 0.0
    %1001 = vmatprep.subr.mxu0 0.0
    %1002 = vmatpush1.msra.mxu0 0.0
    %1003 = vmatprep.subr.mxu0 0.0
    %1004 = vmatpush1.msra.mxu0 0.0
    %1005 = vmatprep.subr.mxu0 0.0
    %1006 = vmatpush1.msra.mxu0 0.0
    %1007 = vmatprep.subr.mxu0 0.0
    %1008 = vmatpush1.msra.mxu0 0.0
    %1009 = vmatprep.subr.mxu0 0.0
    %1010 = vmatpush1.msra.mxu0 0.0
    %1011 = vmatprep.subr.mxu0 0.0
    %1012 = vmatpush1.msra.mxu0 0.0
    %1013 = vmatprep.subr.mxu0 0.0
    %1014 = vmatpush1.msra.mxu0 0.0
    %1015 = vmatprep.subr.mxu0 0.0
    %1016 = vmatpush1.msra.mxu0 0.0
    %1017 = vmatprep.subr.mxu0 0.0
    %1018 = vmatpush1.msra.mxu0 0.0
    %1019 = vmatprep.subr.mxu0 0.0
    %1020 = vmatpush1.msra.mxu0 0.0
    %1021 = vmatprep.subr.mxu0 0.0
    %1022 = vmatpush1.msra.mxu0 0.0
    %1023 = vmatprep.subr.mxu0 0.0
    %1024 = vmatpush1.msra.mxu0 0.0
    %1025 = vmatprep.subr.mxu0 0.0
    %1026 = vmatpush1.msra.mxu0 0.0
    %1027 = vmatprep.subr.mxu0 0.0
    %1028 = vmatpush1.msra.mxu0 0.0
    %1029 = vmatprep.subr.mxu0 0.0
    %1030 = vmatpush1.msra.mxu0 0.0
    %1031 = vmatprep.mubr.f32.mxu0 0.0
    %1032 = vmatmul.mubr.f32.gmra.mrb[0].mxu0 %v965
    %v1033 = vpop.f32.mrb[0].mxu0
    %v1034 = vadd.f32 %v962, %v1033
    %v1035 = vpop.f32.mrb[0].mxu0
    %1036 = vdwg.mxu0
    %v1037 = vld [vmem:[#allocation18] sm:$0xff]
    %v1038 = vld [vmem:[#allocation18 + $0x8] sm:$0xff]
    %v1039 = vld [vmem:[#allocation15] sm:$0x1]
    %v1041 = vlaneseq
    %v1042 = vshrl.u32 %v1041, 7
    %v1043 = vsub.s32 0, %v1042
    %v1044 = vrot.slane %v1039, %v1043
    %1046 = vmatprep.subr.mxu0 0.0
    %1047 = vmatpush1.msra.mxu0 %v1037
    %1048 = vmatprep.subr.mxu0 0.0
    %1049 = vmatpush1.msra.mxu0 %v1038
    %1050 = vmatprep.subr.mxu0 0.0
    %1051 = vmatpush1.msra.mxu0 0.0
    %1052 = vmatprep.subr.mxu0 0.0
    %1053 = vmatpush1.msra.mxu0 0.0
    %1054 = vmatprep.subr.mxu0 0.0
    %1055 = vmatpush1.msra.mxu0 0.0
    %1056 = vmatprep.subr.mxu0 0.0
    %1057 = vmatpush1.msra.mxu0 0.0
    %1058 = vmatprep.subr.mxu0 0.0
    %1059 = vmatpush1.msra.mxu0 0.0
    %1060 = vmatprep.subr.mxu0 0.0
    %1061 = vmatpush1.msra.mxu0 0.0
    %1062 = vmatprep.subr.mxu0 0.0
    %1063 = vmatpush1.msra.mxu0 0.0
    %1064 = vmatprep.subr.mxu0 0.0
    %1065 = vmatpush1.msra.mxu0 0.0
    %1066 = vmatprep.subr.mxu0 0.0
    %1067 = vmatpush1.msra.mxu0 0.0
    %1068 = vmatprep.subr.mxu0 0.0
    %1069 = vmatpush1.msra.mxu0 0.0
    %1070 = vmatprep.subr.mxu0 0.0
    %1071 = vmatpush1.msra.mxu0 0.0
    %1072 = vmatprep.subr.mxu0 0.0
    %1073 = vmatpush1.msra.mxu0 0.0
    %1074 = vmatprep.subr.mxu0 0.0
    %1075 = vmatpush1.msra.mxu0 0.0
    %1076 = vmatprep.subr.mxu0 0.0
    %1077 = vmatpush1.msra.mxu0 0.0
    %1078 = vmatprep.subr.mxu0 0.0
    %1079 = vmatpush1.msra.mxu0 0.0
    %1080 = vmatprep.subr.mxu0 0.0
    %1081 = vmatpush1.msra.mxu0 0.0
    %1082 = vmatprep.subr.mxu0 0.0
    %1083 = vmatpush1.msra.mxu0 0.0
    %1084 = vmatprep.subr.mxu0 0.0
    %1085 = vmatpush1.msra.mxu0 0.0
    %1086 = vmatprep.subr.mxu0 0.0
    %1087 = vmatpush1.msra.mxu0 0.0
    %1088 = vmatprep.subr.mxu0 0.0
    %1089 = vmatpush1.msra.mxu0 0.0
    %1090 = vmatprep.subr.mxu0 0.0
    %1091 = vmatpush1.msra.mxu0 0.0
    %1092 = vmatprep.subr.mxu0 0.0
    %1093 = vmatpush1.msra.mxu0 0.0
    %1094 = vmatprep.subr.mxu0 0.0
    %1095 = vmatpush1.msra.mxu0 0.0
    %1096 = vmatprep.subr.mxu0 0.0
    %1097 = vmatpush1.msra.mxu0 0.0
    %1098 = vmatprep.subr.mxu0 0.0
    %1099 = vmatpush1.msra.mxu0 0.0
    %1100 = vmatprep.subr.mxu0 0.0
    %1101 = vmatpush1.msra.mxu0 0.0
    %1102 = vmatprep.subr.mxu0 0.0
    %1103 = vmatpush1.msra.mxu0 0.0
    %1104 = vmatprep.subr.mxu0 0.0
    %1105 = vmatpush1.msra.mxu0 0.0
    %1106 = vmatprep.subr.mxu0 0.0
    %1107 = vmatpush1.msra.mxu0 0.0
    %1108 = vmatprep.subr.mxu0 0.0
    %1109 = vmatpush1.msra.mxu0 0.0
    %1110 = vmatprep.mubr.f32.mxu0 0.0
    %1111 = vmatmul.mubr.f32.gmra.mrb[0].mxu0 %v707
    %v1112 = vpop.f32.mrb[0].mxu0
    %v1113 = vadd.f32 %v1044, %v1112
    %v1114 = vpop.f32.mrb[0].mxu0
    %1115 = vdwg.mxu0
    %v1116 = vmax.f32 %v1113, 0.0
    %v1117 = vld [vmem:[%s25] sm:$0xff]
    %v1118 = vld [vmem:[%s25 + $0x8] sm:$0xff]
    %v1119 = vld [vmem:[%s25 + $0x10] sm:$0xff]
    %v1120 = vld [vmem:[%s25 + $0x18] sm:$0xff]
    %v1121 = vld [vmem:[%s25 + $0x20] sm:$0xff]
    %v1122 = vld [vmem:[%s25 + $0x28] sm:$0xff]
    %v1123 = vld [vmem:[%s25 + $0x30] sm:$0xff]
    %v1124 = vld [vmem:[%s25 + $0x38] sm:$0xff]
    %v1125 = vld [vmem:[#allocation17] sm:$0x1]
    %v1127 = vlaneseq
    %v1128 = vshrl.u32 %v1127, 7
    %v1129 = vsub.s32 0, %v1128
    %v1130 = vrot.slane %v1125, %v1129
    %v1133 = vsel %vm795, %v1116, 0
    %1135 = vmatprep.subr.mxu0 0.0
    %1136 = vmatpush1.msra.mxu0 %v1117
    %1137 = vmatprep.subr.mxu0 0.0
    %1138 = vmatpush1.msra.mxu0 %v1118
    %1139 = vmatprep.subr.mxu0 0.0
    %1140 = vmatpush1.msra.mxu0 %v1119
    %1141 = vmatprep.subr.mxu0 0.0
    %1142 = vmatpush1.msra.mxu0 %v1120
    %1143 = vmatprep.subr.mxu0 0.0
    %1144 = vmatpush1.msra.mxu0 %v1121
    %1145 = vmatprep.subr.mxu0 0.0
    %1146 = vmatpush1.msra.mxu0 %v1122
    %1147 = vmatprep.subr.mxu0 0.0
    %1148 = vmatpush1.msra.mxu0 %v1123
    %1149 = vmatprep.subr.mxu0 0.0
    %1150 = vmatpush1.msra.mxu0 %v1124
    %1151 = vmatprep.subr.mxu0 0.0
    %1152 = vmatpush1.msra.mxu0 0.0
    %1153 = vmatprep.subr.mxu0 0.0
    %1154 = vmatpush1.msra.mxu0 0.0
    %1155 = vmatprep.subr.mxu0 0.0
    %1156 = vmatpush1.msra.mxu0 0.0
    %1157 = vmatprep.subr.mxu0 0.0
    %1158 = vmatpush1.msra.mxu0 0.0
    %1159 = vmatprep.subr.mxu0 0.0
    %1160 = vmatpush1.msra.mxu0 0.0
    %1161 = vmatprep.subr.mxu0 0.0
    %1162 = vmatpush1.msra.mxu0 0.0
    %1163 = vmatprep.subr.mxu0 0.0
    %1164 = vmatpush1.msra.mxu0 0.0
    %1165 = vmatprep.subr.mxu0 0.0
    %1166 = vmatpush1.msra.mxu0 0.0
    %1167 = vmatprep.subr.mxu0 0.0
    %1168 = vmatpush1.msra.mxu0 0.0
    %1169 = vmatprep.subr.mxu0 0.0
    %1170 = vmatpush1.msra.mxu0 0.0
    %1171 = vmatprep.subr.mxu0 0.0
    %1172 = vmatpush1.msra.mxu0 0.0
    %1173 = vmatprep.subr.mxu0 0.0
    %1174 = vmatpush1.msra.mxu0 0.0
    %1175 = vmatprep.subr.mxu0 0.0
    %1176 = vmatpush1.msra.mxu0 0.0
    %1177 = vmatprep.subr.mxu0 0.0
    %1178 = vmatpush1.msra.mxu0 0.0
    %1179 = vmatprep.subr.mxu0 0.0
    %1180 = vmatpush1.msra.mxu0 0.0
    %1181 = vmatprep.subr.mxu0 0.0
    %1182 = vmatpush1.msra.mxu0 0.0
    %1183 = vmatprep.subr.mxu0 0.0
    %1184 = vmatpush1.msra.mxu0 0.0
    %1185 = vmatprep.subr.mxu0 0.0
    %1186 = vmatpush1.msra.mxu0 0.0
    %1187 = vmatprep.subr.mxu0 0.0
    %1188 = vmatpush1.msra.mxu0 0.0
    %1189 = vmatprep.subr.mxu0 0.0
    %1190 = vmatpush1.msra.mxu0 0.0
    %1191 = vmatprep.subr.mxu0 0.0
    %1192 = vmatpush1.msra.mxu0 0.0
    %1193 = vmatprep.subr.mxu0 0.0
    %1194 = vmatpush1.msra.mxu0 0.0
    %1195 = vmatprep.subr.mxu0 0.0
    %1196 = vmatpush1.msra.mxu0 0.0
    %1197 = vmatprep.subr.mxu0 0.0
    %1198 = vmatpush1.msra.mxu0 0.0
    %1199 = vmatprep.mubr.f32.mxu0 0.0
    %1200 = vmatmul.mubr.f32.gmra.mrb[0].mxu0 %v1133
    %v1201 = vpop.f32.mrb[0].mxu0
    %v1202 = vadd.f32 %v1130, %v1201
    %v1203 = vpop.f32.mrb[0].mxu0
    %1204 = vdwg.mxu0
    %v1205 = vld [vmem:[%s33] sm:$0xff]
    %v1206 = vld [vmem:[%s33 + $0x8] sm:$0xff]
    %v1207 = vld [vmem:[#allocation21] sm:$0x1]
    %v1209 = vlaneseq
    %v1210 = vshrl.u32 %v1209, 7
    %v1211 = vsub.s32 0, %v1210
    %v1212 = vrot.slane %v1207, %v1211
    %1214 = vmatprep.subr.mxu0 0.0
    %1215 = vmatpush1.msra.mxu0 %v1205
    %1216 = vmatprep.subr.mxu0 0.0
    %1217 = vmatpush1.msra.mxu0 %v1206
    %1218 = vmatprep.subr.mxu0 0.0
    %1219 = vmatpush1.msra.mxu0 0.0
    %1220 = vmatprep.subr.mxu0 0.0
    %1221 = vmatpush1.msra.mxu0 0.0
    %1222 = vmatprep.subr.mxu0 0.0
    %1223 = vmatpush1.msra.mxu0 0.0
    %1224 = vmatprep.subr.mxu0 0.0
    %1225 = vmatpush1.msra.mxu0 0.0
    %1226 = vmatprep.subr.mxu0 0.0
    %1227 = vmatpush1.msra.mxu0 0.0
    %1228 = vmatprep.subr.mxu0 0.0
    %1229 = vmatpush1.msra.mxu0 0.0
    %1230 = vmatprep.subr.mxu0 0.0
    %1231 = vmatpush1.msra.mxu0 0.0
    %1232 = vmatprep.subr.mxu0 0.0
    %1233 = vmatpush1.msra.mxu0 0.0
    %1234 = vmatprep.subr.mxu0 0.0
    %1235 = vmatpush1.msra.mxu0 0.0
    %1236 = vmatprep.subr.mxu0 0.0
    %1237 = vmatpush1.msra.mxu0 0.0
    %1238 = vmatprep.subr.mxu0 0.0
    %1239 = vmatpush1.msra.mxu0 0.0
    %1240 = vmatprep.subr.mxu0 0.0
    %1241 = vmatpush1.msra.mxu0 0.0
    %1242 = vmatprep.subr.mxu0 0.0
    %1243 = vmatpush1.msra.mxu0 0.0
    %1244 = vmatprep.subr.mxu0 0.0
    %1245 = vmatpush1.msra.mxu0 0.0
    %1246 = vmatprep.subr.mxu0 0.0
    %1247 = vmatpush1.msra.mxu0 0.0
    %1248 = vmatprep.subr.mxu0 0.0
    %1249 = vmatpush1.msra.mxu0 0.0
    %1250 = vmatprep.subr.mxu0 0.0
    %1251 = vmatpush1.msra.mxu0 0.0
    %1252 = vmatprep.subr.mxu0 0.0
    %1253 = vmatpush1.msra.mxu0 0.0
    %1254 = vmatprep.subr.mxu0 0.0
    %1255 = vmatpush1.msra.mxu0 0.0
    %1256 = vmatprep.subr.mxu0 0.0
    %1257 = vmatpush1.msra.mxu0 0.0
    %1258 = vmatprep.subr.mxu0 0.0
    %1259 = vmatpush1.msra.mxu0 0.0
    %1260 = vmatprep.subr.mxu0 0.0
    %1261 = vmatpush1.msra.mxu0 0.0
    %1262 = vmatprep.subr.mxu0 0.0
    %1263 = vmatpush1.msra.mxu0 0.0
    %1264 = vmatprep.subr.mxu0 0.0
    %1265 = vmatpush1.msra.mxu0 0.0
    %1266 = vmatprep.subr.mxu0 0.0
    %1267 = vmatpush1.msra.mxu0 0.0
    %1268 = vmatprep.subr.mxu0 0.0
    %1269 = vmatpush1.msra.mxu0 0.0
    %1270 = vmatprep.subr.mxu0 0.0
    %1271 = vmatpush1.msra.mxu0 0.0
    %1272 = vmatprep.subr.mxu0 0.0
    %1273 = vmatpush1.msra.mxu0 0.0
    %1274 = vmatprep.subr.mxu0 0.0
    %1275 = vmatpush1.msra.mxu0 0.0
    %1276 = vmatprep.subr.mxu0 0.0
    %1277 = vmatpush1.msra.mxu0 0.0
    %1278 = vmatprep.mubr.f32.mxu0 0.0
    %1279 = vmatmul.mubr.f32.gmra.mrb[0].mxu0 %v707
    %v1280 = vpop.f32.mrb[0].mxu0
    %v1281 = vadd.f32 %v1212, %v1280
    %v1282 = vpop.f32.mrb[0].mxu0
    %1283 = vdwg.mxu0
    %vm1284 = vcmask 31744
    %v1285 = vsel %vm1284, %v1281, -inf
    %1286 = vmax.xlane.f32.xlu0 %v1285
    %v1287 = vpop.xlane.xlu0 %1286
    %v1288 = vsub.f32 %v1281, %v1287
    %v1289 = vmul.f32 %v1288, 1.442695
    %v1290 = vpow.pop %v1289
    %v1291 = vsel %vm1284, %v1290, 0.0
    %1292 = vadd.xlane.f32.xlu0 %v1291
    %v1293 = vpop.xlane.xlu0 %1292
    %v1294 = vrcp.pop %v1293
    %v1295 = vmul.f32 %v1290, %v1294
    %1297 = vset.pattern.permute.xlu0 0
    %1298 = vperm.xlu0 %1297, %v1295
    %v1299 = vpop.permute.xlu0 %1298
    %v1301 = vmul.f32 %v1034, %v1299
    %1302 = vset.pattern.permute.xlu0 1
    %1303 = vperm.xlu0 %1302, %v1295
    %v1304 = vpop.permute.xlu0 %1303
    %v1306 = vmul.f32 %v1034, %v1304
    %1308 = vrot.lane.b32.xlu0 %v1306, 96
    %v1309 = vpop.permute.xlu0 %1308
    %v1311 = vadd.f32 %v1301, %v1309
    %1312 = vset.pattern.permute.xlu0 2
    %1313 = vperm.xlu0 %1312, %v1295
    %v1314 = vpop.permute.xlu0 %1313
    %v1316 = vmul.f32 %v866, %v1314
    %v1317 = vadd.f32 %v1311, %v1316
    %1318 = vset.pattern.permute.xlu0 3
    %1319 = vperm.xlu0 %1318, %v1295
    %v1320 = vpop.permute.xlu0 %1319
    %v1322 = vmul.f32 %v866, %v1320
    %1324 = vrot.lane.b32.xlu0 %v1322, 96
    %v1325 = vpop.permute.xlu0 %1324
    %v1327 = vadd.f32 %v1317, %v1325
    %v1328 = vld [vmem:[%s37] sm:$0xff]
    %v1329 = vld [vmem:[%s37 + $0x8] sm:$0xff]
    %v1330 = vld [vmem:[#allocation23] sm:$0x1]
    %v1332 = vlaneseq
    %v1333 = vshrl.u32 %v1332, 7
    %v1334 = vsub.s32 0, %v1333
    %v1335 = vrot.slane %v1330, %v1334
    %1337 = vmatprep.subr.mxu0 0.0
    %1338 = vmatpush1.msra.mxu0 %v1328
    %1339 = vmatprep.subr.mxu0 0.0
    %1340 = vmatpush1.msra.mxu0 %v1329
    %1341 = vmatprep.subr.mxu0 0.0
    %1342 = vmatpush1.msra.mxu0 0.0
    %1343 = vmatprep.subr.mxu0 0.0
    %1344 = vmatpush1.msra.mxu0 0.0
    %1345 = vmatprep.subr.mxu0 0.0
    %1346 = vmatpush1.msra.mxu0 0.0
    %1347 = vmatprep.subr.mxu0 0.0
    %1348 = vmatpush1.msra.mxu0 0.0
    %1349 = vmatprep.subr.mxu0 0.0
    %1350 = vmatpush1.msra.mxu0 0.0
    %1351 = vmatprep.subr.mxu0 0.0
    %1352 = vmatpush1.msra.mxu0 0.0
    %1353 = vmatprep.subr.mxu0 0.0
    %1354 = vmatpush1.msra.mxu0 0.0
    %1355 = vmatprep.subr.mxu0 0.0
    %1356 = vmatpush1.msra.mxu0 0.0
    %1357 = vmatprep.subr.mxu0 0.0
    %1358 = vmatpush1.msra.mxu0 0.0
    %1359 = vmatprep.subr.mxu0 0.0
    %1360 = vmatpush1.msra.mxu0 0.0
    %1361 = vmatprep.subr.mxu0 0.0
    %1362 = vmatpush1.msra.mxu0 0.0
    %1363 = vmatprep.subr.mxu0 0.0
    %1364 = vmatpush1.msra.mxu0 0.0
    %1365 = vmatprep.subr.mxu0 0.0
    %1366 = vmatpush1.msra.mxu0 0.0
    %1367 = vmatprep.subr.mxu0 0.0
    %1368 = vmatpush1.msra.mxu0 0.0
    %1369 = vmatprep.subr.mxu0 0.0
    %1370 = vmatpush1.msra.mxu0 0.0
    %1371 = vmatprep.subr.mxu0 0.0
    %1372 = vmatpush1.msra.mxu0 0.0
    %1373 = vmatprep.subr.mxu0 0.0
    %1374 = vmatpush1.msra.mxu0 0.0
    %1375 = vmatprep.subr.mxu0 0.0
    %1376 = vmatpush1.msra.mxu0 0.0
    %1377 = vmatprep.subr.mxu0 0.0
    %1378 = vmatpush1.msra.mxu0 0.0
    %1379 = vmatprep.subr.mxu0 0.0
    %1380 = vmatpush1.msra.mxu0 0.0
    %1381 = vmatprep.subr.mxu0 0.0
    %1382 = vmatpush1.msra.mxu0 0.0
    %1383 = vmatprep.subr.mxu0 0.0
    %1384 = vmatpush1.msra.mxu0 0.0
    %1385 = vmatprep.subr.mxu0 0.0
    %1386 = vmatpush1.msra.mxu0 0.0
    %1387 = vmatprep.subr.mxu0 0.0
    %1388 = vmatpush1.msra.mxu0 0.0
    %1389 = vmatprep.subr.mxu0 0.0
    %1390 = vmatpush1.msra.mxu0 0.0
    %1391 = vmatprep.subr.mxu0 0.0
    %1392 = vmatpush1.msra.mxu0 0.0
    %1393 = vmatprep.subr.mxu0 0.0
    %1394 = vmatpush1.msra.mxu0 0.0
    %1395 = vmatprep.subr.mxu0 0.0
    %1396 = vmatpush1.msra.mxu0 0.0
    %1397 = vmatprep.subr.mxu0 0.0
    %1398 = vmatpush1.msra.mxu0 0.0
    %1399 = vmatprep.subr.mxu0 0.0
    %1400 = vmatpush1.msra.mxu0 0.0
    %1401 = vmatprep.mubr.f32.mxu0 0.0
    %1402 = vmatmul.mubr.f32.gmra.mrb[0].mxu0 %v707
    %v1403 = vpop.f32.mrb[0].mxu0
    %v1404 = vadd.f32 %v1335, %v1403
    %v1405 = vpop.f32.mrb[0].mxu0
    %1406 = vdwg.mxu0
    %v1407 = vsel %vm1284, %v1404, -inf
    %1408 = vmax.xlane.f32.xlu0 %v1407
    %v1409 = vpop.xlane.xlu0 %1408
    %v1410 = vsub.f32 %v1404, %v1409
    %v1411 = vmul.f32 %v1410, 1.442695
    %v1412 = vpow.pop %v1411
    %v1413 = vsel %vm1284, %v1412, 0.0
    %1414 = vadd.xlane.f32.xlu0 %v1413
    %v1415 = vpop.xlane.xlu0 %1414
    %v1416 = vrcp.pop %v1415
    %v1417 = vmul.f32 %v1412, %v1416
    %1419 = vset.pattern.permute.xlu0 0
    %1420 = vperm.xlu0 %1419, %v1417
    %v1421 = vpop.permute.xlu0 %1420
    %v1423 = vmul.f32 %v1202, %v1421
    %1424 = vset.pattern.permute.xlu0 1
    %1425 = vperm.xlu0 %1424, %v1417
    %v1426 = vpop.permute.xlu0 %1425
    %v1428 = vmul.f32 %v1202, %v1426
    %1430 = vrot.lane.b32.xlu0 %v1428, 96
    %v1431 = vpop.permute.xlu0 %1430
    %v1433 = vadd.f32 %v1423, %v1431
    %1434 = vset.pattern.permute.xlu0 2
    %1435 = vperm.xlu0 %1434, %v1417
    %v1436 = vpop.permute.xlu0 %1435
    %v1438 = vmul.f32 %v866, %v1436
    %v1439 = vadd.f32 %v1433, %v1438
    %1440 = vset.pattern.permute.xlu0 3
    %1441 = vperm.xlu0 %1440, %v1417
    %v1442 = vpop.permute.xlu0 %1441
    %v1444 = vmul.f32 %v866, %v1442
    %1446 = vrot.lane.b32.xlu0 %v1444, 96
    %v1447 = vpop.permute.xlu0 %1446
    %v1449 = vadd.f32 %v1439, %v1447
    %v1450 = vld [vmem:[%s29] sm:$0xff]
    %v1451 = vld [vmem:[%s29 + $0x8] sm:$0xff]
    %v1452 = vld [vmem:[#allocation20] sm:$0x1]
    %v1454 = vlaneseq
    %v1455 = vshrl.u32 %v1454, 7
    %v1456 = vsub.s32 0, %v1455
    %v1457 = vrot.slane %v1452, %v1456
    %1459 = vmatprep.subr.mxu0 0.0
    %1460 = vmatpush1.msra.mxu0 %v1450
    %1461 = vmatprep.subr.mxu0 0.0
    %1462 = vmatpush1.msra.mxu0 %v1451
    %1463 = vmatprep.subr.mxu0 0.0
    %1464 = vmatpush1.msra.mxu0 0.0
    %1465 = vmatprep.subr.mxu0 0.0
    %1466 = vmatpush1.msra.mxu0 0.0
    %1467 = vmatprep.subr.mxu0 0.0
    %1468 = vmatpush1.msra.mxu0 0.0
    %1469 = vmatprep.subr.mxu0 0.0
    %1470 = vmatpush1.msra.mxu0 0.0
    %1471 = vmatprep.subr.mxu0 0.0
    %1472 = vmatpush1.msra.mxu0 0.0
    %1473 = vmatprep.subr.mxu0 0.0
    %1474 = vmatpush1.msra.mxu0 0.0
    %1475 = vmatprep.subr.mxu0 0.0
    %1476 = vmatpush1.msra.mxu0 0.0
    %1477 = vmatprep.subr.mxu0 0.0
    %1478 = vmatpush1.msra.mxu0 0.0
    %1479 = vmatprep.subr.mxu0 0.0
    %1480 = vmatpush1.msra.mxu0 0.0
    %1481 = vmatprep.subr.mxu0 0.0
    %1482 = vmatpush1.msra.mxu0 0.0
    %1483 = vmatprep.subr.mxu0 0.0
    %1484 = vmatpush1.msra.mxu0 0.0
    %1485 = vmatprep.subr.mxu0 0.0
    %1486 = vmatpush1.msra.mxu0 0.0
    %1487 = vmatprep.subr.mxu0 0.0
    %1488 = vmatpush1.msra.mxu0 0.0
    %1489 = vmatprep.subr.mxu0 0.0
    %1490 = vmatpush1.msra.mxu0 0.0
    %1491 = vmatprep.subr.mxu0 0.0
    %1492 = vmatpush1.msra.mxu0 0.0
    %1493 = vmatprep.subr.mxu0 0.0
    %1494 = vmatpush1.msra.mxu0 0.0
    %1495 = vmatprep.subr.mxu0 0.0
    %1496 = vmatpush1.msra.mxu0 0.0
    %1497 = vmatprep.subr.mxu0 0.0
    %1498 = vmatpush1.msra.mxu0 0.0
    %1499 = vmatprep.subr.mxu0 0.0
    %1500 = vmatpush1.msra.mxu0 0.0
    %1501 = vmatprep.subr.mxu0 0.0
    %1502 = vmatpush1.msra.mxu0 0.0
    %1503 = vmatprep.subr.mxu0 0.0
    %1504 = vmatpush1.msra.mxu0 0.0
    %1505 = vmatprep.subr.mxu0 0.0
    %1506 = vmatpush1.msra.mxu0 0.0
    %1507 = vmatprep.subr.mxu0 0.0
    %1508 = vmatpush1.msra.mxu0 0.0
    %1509 = vmatprep.subr.mxu0 0.0
    %1510 = vmatpush1.msra.mxu0 0.0
    %1511 = vmatprep.subr.mxu0 0.0
    %1512 = vmatpush1.msra.mxu0 0.0
    %1513 = vmatprep.subr.mxu0 0.0
    %1514 = vmatpush1.msra.mxu0 0.0
    %1515 = vmatprep.subr.mxu0 0.0
    %1516 = vmatpush1.msra.mxu0 0.0
    %1517 = vmatprep.subr.mxu0 0.0
    %1518 = vmatpush1.msra.mxu0 0.0
    %1519 = vmatprep.subr.mxu0 0.0
    %1520 = vmatpush1.msra.mxu0 0.0
    %1521 = vmatprep.subr.mxu0 0.0
    %1522 = vmatpush1.msra.mxu0 0.0
    %1523 = vmatprep.mubr.f32.mxu0 0.0
    %1524 = vmatmul.mubr.f32.gmra.mrb[0].mxu0 %v707
    %v1525 = vpop.f32.mrb[0].mxu0
    %v1526 = vadd.f32 %v1457, %v1525
    %v1527 = vpop.f32.mrb[0].mxu0
    %1528 = vdwg.mxu0
    %vm1529 = vcmask 48128
    %v1530 = vsel %vm1529, %v1526, -inf
    %1531 = vmax.xlane.f32.xlu0 %v1530
    %v1532 = vpop.xlane.xlu0 %1531
    %v1533 = vsub.f32 %v1526, %v1532
    %v1534 = vmul.f32 %v1533, 1.442695
    %v1535 = vpow.pop %v1534
    %v1536 = vsel %vm1529, %v1535, 0.0
    %1537 = vadd.xlane.f32.xlu0 %v1536
    %v1538 = vpop.xlane.xlu0 %1537
    %v1539 = vrcp.pop %v1538
    %v1540 = vmul.f32 %v1535, %v1539
    %1542 = vset.pattern.permute.xlu0 0
    %1543 = vperm.xlu0 %1542, %v1540
    %v1544 = vpop.permute.xlu0 %1543
    %v1546 = vmul.f32 %v1034, %v1544
    %1547 = vset.pattern.permute.xlu0 1
    %1548 = vperm.xlu0 %1547, %v1540
    %v1549 = vpop.permute.xlu0 %1548
    %v1551 = vmul.f32 %v1034, %v1549
    %1553 = vrot.lane.b32.xlu0 %v1551, 96
    %v1554 = vpop.permute.xlu0 %1553
    %v1556 = vadd.f32 %v1546, %v1554
    %1557 = vset.pattern.permute.xlu0 2
    %1558 = vperm.xlu0 %1557, %v1540
    %v1559 = vpop.permute.xlu0 %1558
    %v1561 = vmul.f32 %v1202, %v1559
    %v1562 = vadd.f32 %v1556, %v1561
    %1563 = vset.pattern.permute.xlu0 3
    %1564 = vperm.xlu0 %1563, %v1540
    %v1565 = vpop.permute.xlu0 %1564
    %v1567 = vmul.f32 %v1202, %v1565
    %1569 = vrot.lane.b32.xlu0 %v1567, 96
    %v1570 = vpop.permute.xlu0 %1569
    %v1572 = vadd.f32 %v1562, %v1570
    %1573 = vset.pattern.permute.xlu0 4
    %1574 = vperm.xlu0 %1573, %v1540
    %v1575 = vpop.permute.xlu0 %1574
    %v1577 = vmul.f32 %v866, %v1575
    %v1578 = vadd.f32 %v1572, %v1577
    %1579 = vset.pattern.permute.xlu0 5
    %1580 = vperm.xlu0 %1579, %v1540
    %v1581 = vpop.permute.xlu0 %1580
    %v1583 = vmul.f32 %v866, %v1581
    %1585 = vrot.lane.b32.xlu0 %v1583, 96
    %v1586 = vpop.permute.xlu0 %1585
    %v1588 = vadd.f32 %v1578, %v1586
    %v1589 = vld [vmem:[#allocation27] sm:$0xff]
    %v1590 = vld [vmem:[#allocation27 + $0x8] sm:$0xff]
    %v1591 = vld [vmem:[#allocation27 + $0x10] sm:$0xff]
    %v1592 = vld [vmem:[#allocation27 + $0x18] sm:$0xff]
    %v1593 = vld [vmem:[#allocation24] sm:$0x1]
    %v1595 = vlaneseq
    %v1596 = vshrl.u32 %v1595, 7
    %v1597 = vsub.s32 0, %v1596
    %v1598 = vrot.slane %v1593, %v1597
    %vm1600 = vcmask 261120
    %v1602 = vsel %vm1600, %v1588, 0
    %1604 = vmatprep.subr.mxu0 0.0
    %1605 = vmatpush1.msra.mxu0 %v1589
    %1606 = vmatprep.subr.mxu0 0.0
    %1607 = vmatpush1.msra.mxu0 %v1590
    %1608 = vmatprep.subr.mxu0 0.0
    %1609 = vmatpush1.msra.mxu0 %v1591
    %1610 = vmatprep.subr.mxu0 0.0
    %1611 = vmatpush1.msra.mxu0 %v1592
    %1612 = vmatprep.subr.mxu0 0.0
    %1613 = vmatpush1.msra.mxu0 0.0
    %1614 = vmatprep.subr.mxu0 0.0
    %1615 = vmatpush1.msra.mxu0 0.0
    %1616 = vmatprep.subr.mxu0 0.0
    %1617 = vmatpush1.msra.mxu0 0.0
    %1618 = vmatprep.subr.mxu0 0.0
    %1619 = vmatpush1.msra.mxu0 0.0
    %1620 = vmatprep.subr.mxu0 0.0
    %1621 = vmatpush1.msra.mxu0 0.0
    %1622 = vmatprep.subr.mxu0 0.0
    %1623 = vmatpush1.msra.mxu0 0.0
    %1624 = vmatprep.subr.mxu0 0.0
    %1625 = vmatpush1.msra.mxu0 0.0
    %1626 = vmatprep.subr.mxu0 0.0
    %1627 = vmatpush1.msra.mxu0 0.0
    %1628 = vmatprep.subr.mxu0 0.0
    %1629 = vmatpush1.msra.mxu0 0.0
    %1630 = vmatprep.subr.mxu0 0.0
    %1631 = vmatpush1.msra.mxu0 0.0
    %1632 = vmatprep.subr.mxu0 0.0
    %1633 = vmatpush1.msra.mxu0 0.0
    %1634 = vmatprep.subr.mxu0 0.0
    %1635 = vmatpush1.msra.mxu0 0.0
    %1636 = vmatprep.subr.mxu0 0.0
    %1637 = vmatpush1.msra.mxu0 0.0
    %1638 = vmatprep.subr.mxu0 0.0
    %1639 = vmatpush1.msra.mxu0 0.0
    %1640 = vmatprep.subr.mxu0 0.0
    %1641 = vmatpush1.msra.mxu0 0.0
    %1642 = vmatprep.subr.mxu0 0.0
    %1643 = vmatpush1.msra.mxu0 0.0
    %1644 = vmatprep.subr.mxu0 0.0
    %1645 = vmatpush1.msra.mxu0 0.0
    %1646 = vmatprep.subr.mxu0 0.0
    %1647 = vmatpush1.msra.mxu0 0.0
    %1648 = vmatprep.subr.mxu0 0.0
    %1649 = vmatpush1.msra.mxu0 0.0
    %1650 = vmatprep.subr.mxu0 0.0
    %1651 = vmatpush1.msra.mxu0 0.0
    %1652 = vmatprep.subr.mxu0 0.0
    %1653 = vmatpush1.msra.mxu0 0.0
    %1654 = vmatprep.subr.mxu0 0.0
    %1655 = vmatpush1.msra.mxu0 0.0
    %1656 = vmatprep.subr.mxu0 0.0
    %1657 = vmatpush1.msra.mxu0 0.0
    %1658 = vmatprep.subr.mxu0 0.0
    %1659 = vmatpush1.msra.mxu0 0.0
    %1660 = vmatprep.subr.mxu0 0.0
    %1661 = vmatpush1.msra.mxu0 0.0
    %1662 = vmatprep.subr.mxu0 0.0
    %1663 = vmatpush1.msra.mxu0 0.0
    %1664 = vmatprep.subr.mxu0 0.0
    %1665 = vmatpush1.msra.mxu0 0.0
    %1666 = vmatprep.subr.mxu0 0.0
    %1667 = vmatpush1.msra.mxu0 0.0
    %1668 = vmatprep.mubr.f32.mxu0 0.0
    %1669 = vmatmul.mubr.f32.gmra.mrb[0].mxu0 %v1602
    %v1670 = vpop.f32.mrb[0].mxu0
    %v1671 = vadd.f32 %v1598, %v1670
    %v1672 = vpop.f32.mrb[0].mxu0
    %1673 = vdwg.mxu0
    %v1674 = vmax.f32 %v1671, 0.0
    %v1675 = vld [vmem:[%s45] sm:$0xff]
    %v1676 = vld [vmem:[%s45 + $0x8] sm:$0xff]
    %v1677 = vld [vmem:[%s45 + $0x10] sm:$0xff]
    %v1678 = vld [vmem:[%s45 + $0x18] sm:$0xff]
    %v1679 = vld [vmem:[%s45 + $0x20] sm:$0xff]
    %v1680 = vld [vmem:[%s45 + $0x28] sm:$0xff]
    %v1681 = vld [vmem:[%s45 + $0x30] sm:$0xff]
    %v1682 = vld [vmem:[%s45 + $0x38] sm:$0xff]
    %v1683 = vld [vmem:[#allocation26] sm:$0x1]
    %v1685 = vlaneseq
    %v1686 = vshrl.u32 %v1685, 7
    %v1687 = vsub.s32 0, %v1686
    %v1688 = vrot.slane %v1683, %v1687
    %v1691 = vsel %vm795, %v1674, 0
    %1693 = vmatprep.subr.mxu0 0.0
    %1694 = vmatpush1.msra.mxu0 %v1675
    %1695 = vmatprep.subr.mxu0 0.0
    %1696 = vmatpush1.msra.mxu0 %v1676
    %1697 = vmatprep.subr.mxu0 0.0
    %1698 = vmatpush1.msra.mxu0 %v1677
    %1699 = vmatprep.subr.mxu0 0.0
    %1700 = vmatpush1.msra.mxu0 %v1678
    %1701 = vmatprep.subr.mxu0 0.0
    %1702 = vmatpush1.msra.mxu0 %v1679
    %1703 = vmatprep.subr.mxu0 0.0
    %1704 = vmatpush1.msra.mxu0 %v1680
    %1705 = vmatprep.subr.mxu0 0.0
    %1706 = vmatpush1.msra.mxu0 %v1681
    %1707 = vmatprep.subr.mxu0 0.0
    %1708 = vmatpush1.msra.mxu0 %v1682
    %1709 = vmatprep.subr.mxu0 0.0
    %1710 = vmatpush1.msra.mxu0 0.0
    %1711 = vmatprep.subr.mxu0 0.0
    %1712 = vmatpush1.msra.mxu0 0.0
    %1713 = vmatprep.subr.mxu0 0.0
    %1714 = vmatpush1.msra.mxu0 0.0
    %1715 = vmatprep.subr.mxu0 0.0
    %1716 = vmatpush1.msra.mxu0 0.0
    %1717 = vmatprep.subr.mxu0 0.0
    %1718 = vmatpush1.msra.mxu0 0.0
    %1719 = vmatprep.subr.mxu0 0.0
    %1720 = vmatpush1.msra.mxu0 0.0
    %1721 = vmatprep.subr.mxu0 0.0
    %1722 = vmatpush1.msra.mxu0 0.0
    %1723 = vmatprep.subr.mxu0 0.0
    %1724 = vmatpush1.msra.mxu0 0.0
    %1725 = vmatprep.subr.mxu0 0.0
    %1726 = vmatpush1.msra.mxu0 0.0
    %1727 = vmatprep.subr.mxu0 0.0
    %1728 = vmatpush1.msra.mxu0 0.0
    %1729 = vmatprep.subr.mxu0 0.0
    %1730 = vmatpush1.msra.mxu0 0.0
    %1731 = vmatprep.subr.mxu0 0.0
    %1732 = vmatpush1.msra.mxu0 0.0
    %1733 = vmatprep.subr.mxu0 0.0
    %1734 = vmatpush1.msra.mxu0 0.0
    %1735 = vmatprep.subr.mxu0 0.0
    %1736 = vmatpush1.msra.mxu0 0.0
    %1737 = vmatprep.subr.mxu0 0.0
    %1738 = vmatpush1.msra.mxu0 0.0
    %1739 = vmatprep.subr.mxu0 0.0
    %1740 = vmatpush1.msra.mxu0 0.0
    %1741 = vmatprep.subr.mxu0 0.0
    %1742 = vmatpush1.msra.mxu0 0.0
    %1743 = vmatprep.subr.mxu0 0.0
    %1744 = vmatpush1.msra.mxu0 0.0
    %1745 = vmatprep.subr.mxu0 0.0
    %1746 = vmatpush1.msra.mxu0 0.0
    %1747 = vmatprep.subr.mxu0 0.0
    %1748 = vmatpush1.msra.mxu0 0.0
    %1749 = vmatprep.subr.mxu0 0.0
    %1750 = vmatpush1.msra.mxu0 0.0
    %1751 = vmatprep.subr.mxu0 0.0
    %1752 = vmatpush1.msra.mxu0 0.0
    %1753 = vmatprep.subr.mxu0 0.0
    %1754 = vmatpush1.msra.mxu0 0.0
    %1755 = vmatprep.subr.mxu0 0.0
    %1756 = vmatpush1.msra.mxu0 0.0
    %1757 = vmatprep.mubr.f32.mxu0 0.0
    %1758 = vmatmul.mubr.f32.gmra.mrb[0].mxu0 %v1691
    %v1759 = vpop.f32.mrb[0].mxu0
    %v1760 = vadd.f32 %v1688, %v1759
    %v1761 = vpop.f32.mrb[0].mxu0
    %1762 = vdwg.mxu0
    %v1763 = vld [vmem:[#allocation32] sm:$0xff]
    %v1764 = vld [vmem:[#allocation32 + $0x8] sm:$0xff]
    %v1765 = vld [vmem:[#allocation32 + $0x10] sm:$0xff]
    %v1766 = vld [vmem:[#allocation32 + $0x18] sm:$0xff]
    %v1767 = vld [vmem:[#allocation29] sm:$0x1]
    %v1769 = vlaneseq
    %v1770 = vshrl.u32 %v1769, 7
    %v1771 = vsub.s32 0, %v1770
    %v1772 = vrot.slane %v1767, %v1771
    %v1775 = vsel %vm1600, %v1327, 0
    %1777 = vmatprep.subr.mxu0 0.0
    %1778 = vmatpush1.msra.mxu0 %v1763
    %1779 = vmatprep.subr.mxu0 0.0
    %1780 = vmatpush1.msra.mxu0 %v1764
    %1781 = vmatprep.subr.mxu0 0.0
    %1782 = vmatpush1.msra.mxu0 %v1765
    %1783 = vmatprep.subr.mxu0 0.0
    %1784 = vmatpush1.msra.mxu0 %v1766
    %1785 = vmatprep.subr.mxu0 0.0
    %1786 = vmatpush1.msra.mxu0 0.0
    %1787 = vmatprep.subr.mxu0 0.0
    %1788 = vmatpush1.msra.mxu0 0.0
    %1789 = vmatprep.subr.mxu0 0.0
    %1790 = vmatpush1.msra.mxu0 0.0
    %1791 = vmatprep.subr.mxu0 0.0
    %1792 = vmatpush1.msra.mxu0 0.0
    %1793 = vmatprep.subr.mxu0 0.0
    %1794 = vmatpush1.msra.mxu0 0.0
    %1795 = vmatprep.subr.mxu0 0.0
    %1796 = vmatpush1.msra.mxu0 0.0
    %1797 = vmatprep.subr.mxu0 0.0
    %1798 = vmatpush1.msra.mxu0 0.0
    %1799 = vmatprep.subr.mxu0 0.0
    %1800 = vmatpush1.msra.mxu0 0.0
    %1801 = vmatprep.subr.mxu0 0.0
    %1802 = vmatpush1.msra.mxu0 0.0
    %1803 = vmatprep.subr.mxu0 0.0
    %1804 = vmatpush1.msra.mxu0 0.0
    %1805 = vmatprep.subr.mxu0 0.0
    %1806 = vmatpush1.msra.mxu0 0.0
    %1807 = vmatprep.subr.mxu0 0.0
    %1808 = vmatpush1.msra.mxu0 0.0
    %1809 = vmatprep.subr.mxu0 0.0
    %1810 = vmatpush1.msra.mxu0 0.0
    %1811 = vmatprep.subr.mxu0 0.0
    %1812 = vmatpush1.msra.mxu0 0.0
    %1813 = vmatprep.subr.mxu0 0.0
    %1814 = vmatpush1.msra.mxu0 0.0
    %1815 = vmatprep.subr.mxu0 0.0
    %1816 = vmatpush1.msra.mxu0 0.0
    %1817 = vmatprep.subr.mxu0 0.0
    %1818 = vmatpush1.msra.mxu0 0.0
    %1819 = vmatprep.subr.mxu0 0.0
    %1820 = vmatpush1.msra.mxu0 0.0
    %1821 = vmatprep.subr.mxu0 0.0
    %1822 = vmatpush1.msra.mxu0 0.0
    %1823 = vmatprep.subr.mxu0 0.0
    %1824 = vmatpush1.msra.mxu0 0.0
    %1825 = vmatprep.subr.mxu0 0.0
    %1826 = vmatpush1.msra.mxu0 0.0
    %1827 = vmatprep.subr.mxu0 0.0
    %1828 = vmatpush1.msra.mxu0 0.0
    %1829 = vmatprep.subr.mxu0 0.0
    %1830 = vmatpush1.msra.mxu0 0.0
    %1831 = vmatprep.subr.mxu0 0.0
    %1832 = vmatpush1.msra.mxu0 0.0
    %1833 = vmatprep.subr.mxu0 0.0
    %1834 = vmatpush1.msra.mxu0 0.0
    %1835 = vmatprep.subr.mxu0 0.0
    %1836 = vmatpush1.msra.mxu0 0.0
    %1837 = vmatprep.subr.mxu0 0.0
    %1838 = vmatpush1.msra.mxu0 0.0
    %1839 = vmatprep.subr.mxu0 0.0
    %1840 = vmatpush1.msra.mxu0 0.0
    %1841 = vmatprep.mubr.f32.mxu0 0.0
    %1842 = vmatmul.mubr.f32.gmra.mrb[0].mxu0 %v1775
    %v1843 = vpop.f32.mrb[0].mxu0
    %v1844 = vadd.f32 %v1772, %v1843
    %v1845 = vpop.f32.mrb[0].mxu0
    %1846 = vdwg.mxu0
    %v1847 = vmax.f32 %v1844, 0.0
    %v1848 = vld [vmem:[%s53] sm:$0xff]
    %v1849 = vld [vmem:[%s53 + $0x8] sm:$0xff]
    %v1850 = vld [vmem:[%s53 + $0x10] sm:$0xff]
    %v1851 = vld [vmem:[%s53 + $0x18] sm:$0xff]
    %v1852 = vld [vmem:[%s53 + $0x20] sm:$0xff]
    %v1853 = vld [vmem:[%s53 + $0x28] sm:$0xff]
    %v1854 = vld [vmem:[%s53 + $0x30] sm:$0xff]
    %v1855 = vld [vmem:[%s53 + $0x38] sm:$0xff]
    %v1856 = vld [vmem:[#allocation30] sm:$0x1]
    %v1858 = vlaneseq
    %v1859 = vshrl.u32 %v1858, 7
    %v1860 = vsub.s32 0, %v1859
    %v1861 = vrot.slane %v1856, %v1860
    %v1864 = vsel %vm795, %v1847, 0
    %1866 = vmatprep.subr.mxu0 0.0
    %1867 = vmatpush1.msra.mxu0 %v1848
    %1868 = vmatprep.subr.mxu0 0.0
    %1869 = vmatpush1.msra.mxu0 %v1849
    %1870 = vmatprep.subr.mxu0 0.0
    %1871 = vmatpush1.msra.mxu0 %v1850
    %1872 = vmatprep.subr.mxu0 0.0
    %1873 = vmatpush1.msra.mxu0 %v1851
    %1874 = vmatprep.subr.mxu0 0.0
    %1875 = vmatpush1.msra.mxu0 %v1852
    %1876 = vmatprep.subr.mxu0 0.0
    %1877 = vmatpush1.msra.mxu0 %v1853
    %1878 = vmatprep.subr.mxu0 0.0
    %1879 = vmatpush1.msra.mxu0 %v1854
    %1880 = vmatprep.subr.mxu0 0.0
    %1881 = vmatpush1.msra.mxu0 %v1855
    %1882 = vmatprep.subr.mxu0 0.0
    %1883 = vmatpush1.msra.mxu0 0.0
    %1884 = vmatprep.subr.mxu0 0.0
    %1885 = vmatpush1.msra.mxu0 0.0
    %1886 = vmatprep.subr.mxu0 0.0
    %1887 = vmatpush1.msra.mxu0 0.0
    %1888 = vmatprep.subr.mxu0 0.0
    %1889 = vmatpush1.msra.mxu0 0.0
    %1890 = vmatprep.subr.mxu0 0.0
    %1891 = vmatpush1.msra.mxu0 0.0
    %1892 = vmatprep.subr.mxu0 0.0
    %1893 = vmatpush1.msra.mxu0 0.0
    %1894 = vmatprep.subr.mxu0 0.0
    %1895 = vmatpush1.msra.mxu0 0.0
    %1896 = vmatprep.subr.mxu0 0.0
    %1897 = vmatpush1.msra.mxu0 0.0
    %1898 = vmatprep.subr.mxu0 0.0
    %1899 = vmatpush1.msra.mxu0 0.0
    %1900 = vmatprep.subr.mxu0 0.0
    %1901 = vmatpush1.msra.mxu0 0.0
    %1902 = vmatprep.subr.mxu0 0.0
    %1903 = vmatpush1.msra.mxu0 0.0
    %1904 = vmatprep.subr.mxu0 0.0
    %1905 = vmatpush1.msra.mxu0 0.0
    %1906 = vmatprep.subr.mxu0 0.0
    %1907 = vmatpush1.msra.mxu0 0.0
    %1908 = vmatprep.subr.mxu0 0.0
    %1909 = vmatpush1.msra.mxu0 0.0
    %1910 = vmatprep.subr.mxu0 0.0
    %1911 = vmatpush1.msra.mxu0 0.0
    %1912 = vmatprep.subr.mxu0 0.0
    %1913 = vmatpush1.msra.mxu0 0.0
    %1914 = vmatprep.subr.mxu0 0.0
    %1915 = vmatpush1.msra.mxu0 0.0
    %1916 = vmatprep.subr.mxu0 0.0
    %1917 = vmatpush1.msra.mxu0 0.0
    %1918 = vmatprep.subr.mxu0 0.0
    %1919 = vmatpush1.msra.mxu0 0.0
    %1920 = vmatprep.subr.mxu0 0.0
    %1921 = vmatpush1.msra.mxu0 0.0
    %1922 = vmatprep.subr.mxu0 0.0
    %1923 = vmatpush1.msra.mxu0 0.0
    %1924 = vmatprep.subr.mxu0 0.0
    %1925 = vmatpush1.msra.mxu0 0.0
    %1926 = vmatprep.subr.mxu0 0.0
    %1927 = vmatpush1.msra.mxu0 0.0
    %1928 = vmatprep.subr.mxu0 0.0
    %1929 = vmatpush1.msra.mxu0 0.0
    %1930 = vmatprep.mubr.f32.mxu0 0.0
    %1931 = vmatmul.mubr.f32.gmra.mrb[0].mxu0 %v1864
    %v1932 = vpop.f32.mrb[0].mxu0
    %v1933 = vadd.f32 %v1861, %v1932
    %v1934 = vpop.f32.mrb[0].mxu0
    %1935 = vdwg.mxu0
    %v1936 = vld [vmem:[#allocation36] sm:$0xff]
    %v1937 = vld [vmem:[#allocation36 + $0x8] sm:$0xff]
    %v1938 = vld [vmem:[#allocation36 + $0x10] sm:$0xff]
    %v1939 = vld [vmem:[#allocation36 + $0x18] sm:$0xff]
    %v1940 = vld [vmem:[#allocation33] sm:$0x1]
    %v1942 = vlaneseq
    %v1943 = vshrl.u32 %v1942, 7
    %v1944 = vsub.s32 0, %v1943
    %v1945 = vrot.slane %v1940, %v1944
    %v1948 = vsel %vm1600, %v1449, 0
    %1950 = vmatprep.subr.mxu0 0.0
    %1951 = vmatpush1.msra.mxu0 %v1936
    %1952 = vmatprep.subr.mxu0 0.0
    %1953 = vmatpush1.msra.mxu0 %v1937
    %1954 = vmatprep.subr.mxu0 0.0
    %1955 = vmatpush1.msra.mxu0 %v1938
    %1956 = vmatprep.subr.mxu0 0.0
    %1957 = vmatpush1.msra.mxu0 %v1939
    %1958 = vmatprep.subr.mxu0 0.0
    %1959 = vmatpush1.msra.mxu0 0.0
    %1960 = vmatprep.subr.mxu0 0.0
    %1961 = vmatpush1.msra.mxu0 0.0
    %1962 = vmatprep.subr.mxu0 0.0
    %1963 = vmatpush1.msra.mxu0 0.0
    %1964 = vmatprep.subr.mxu0 0.0
    %1965 = vmatpush1.msra.mxu0 0.0
    %1966 = vmatprep.subr.mxu0 0.0
    %1967 = vmatpush1.msra.mxu0 0.0
    %1968 = vmatprep.subr.mxu0 0.0
    %1969 = vmatpush1.msra.mxu0 0.0
    %1970 = vmatprep.subr.mxu0 0.0
    %1971 = vmatpush1.msra.mxu0 0.0
    %1972 = vmatprep.subr.mxu0 0.0
    %1973 = vmatpush1.msra.mxu0 0.0
    %1974 = vmatprep.subr.mxu0 0.0
    %1975 = vmatpush1.msra.mxu0 0.0
    %1976 = vmatprep.subr.mxu0 0.0
    %1977 = vmatpush1.msra.mxu0 0.0
    %1978 = vmatprep.subr.mxu0 0.0
    %1979 = vmatpush1.msra.mxu0 0.0
    %1980 = vmatprep.subr.mxu0 0.0
    %1981 = vmatpush1.msra.mxu0 0.0
    %1982 = vmatprep.subr.mxu0 0.0
    %1983 = vmatpush1.msra.mxu0 0.0
    %1984 = vmatprep.subr.mxu0 0.0
    %1985 = vmatpush1.msra.mxu0 0.0
    %1986 = vmatprep.subr.mxu0 0.0
    %1987 = vmatpush1.msra.mxu0 0.0
    %1988 = vmatprep.subr.mxu0 0.0
    %1989 = vmatpush1.msra.mxu0 0.0
    %1990 = vmatprep.subr.mxu0 0.0
    %1991 = vmatpush1.msra.mxu0 0.0
    %1992 = vmatprep.subr.mxu0 0.0
    %1993 = vmatpush1.msra.mxu0 0.0
    %1994 = vmatprep.subr.mxu0 0.0
    %1995 = vmatpush1.msra.mxu0 0.0
    %1996 = vmatprep.subr.mxu0 0.0
    %1997 = vmatpush1.msra.mxu0 0.0
    %1998 = vmatprep.subr.mxu0 0.0
    %1999 = vmatpush1.msra.mxu0 0.0
    %2000 = vmatprep.subr.mxu0 0.0
    %2001 = vmatpush1.msra.mxu0 0.0
    %2002 = vmatprep.subr.mxu0 0.0
    %2003 = vmatpush1.msra.mxu0 0.0
    %2004 = vmatprep.subr.mxu0 0.0
    %2005 = vmatpush1.msra.mxu0 0.0
    %2006 = vmatprep.subr.mxu0 0.0
    %2007 = vmatpush1.msra.mxu0 0.0
    %2008 = vmatprep.subr.mxu0 0.0
    %2009 = vmatpush1.msra.mxu0 0.0
    %2010 = vmatprep.subr.mxu0 0.0
    %2011 = vmatpush1.msra.mxu0 0.0
    %2012 = vmatprep.subr.mxu0 0.0
    %2013 = vmatpush1.msra.mxu0 0.0
    %2014 = vmatprep.mubr.f32.mxu0 0.0
    %2015 = vmatmul.mubr.f32.gmra.mrb[0].mxu0 %v1948
    %v2016 = vpop.f32.mrb[0].mxu0
    %v2017 = vadd.f32 %v1945, %v2016
    %v2018 = vpop.f32.mrb[0].mxu0
    %2019 = vdwg.mxu0
    %v2020 = vmax.f32 %v2017, 0.0
    %v2021 = vld [vmem:[%s61] sm:$0xff]
    %v2022 = vld [vmem:[%s61 + $0x8] sm:$0xff]
    %v2023 = vld [vmem:[%s61 + $0x10] sm:$0xff]
    %v2024 = vld [vmem:[%s61 + $0x18] sm:$0xff]
    %v2025 = vld [vmem:[%s61 + $0x20] sm:$0xff]
    %v2026 = vld [vmem:[%s61 + $0x28] sm:$0xff]
    %v2027 = vld [vmem:[%s61 + $0x30] sm:$0xff]
    %v2028 = vld [vmem:[%s61 + $0x38] sm:$0xff]
    %v2029 = vld [vmem:[#allocation35] sm:$0x1]
    %v2031 = vlaneseq
    %v2032 = vshrl.u32 %v2031, 7
    %v2033 = vsub.s32 0, %v2032
    %v2034 = vrot.slane %v2029, %v2033
    %v2037 = vsel %vm795, %v2020, 0
    %2039 = vmatprep.subr.mxu0 0.0
    %2040 = vmatpush1.msra.mxu0 %v2021
    %2041 = vmatprep.subr.mxu0 0.0
    %2042 = vmatpush1.msra.mxu0 %v2022
    %2043 = vmatprep.subr.mxu0 0.0
    %2044 = vmatpush1.msra.mxu0 %v2023
    %2045 = vmatprep.subr.mxu0 0.0
    %2046 = vmatpush1.msra.mxu0 %v2024
    %2047 = vmatprep.subr.mxu0 0.0
    %2048 = vmatpush1.msra.mxu0 %v2025
    %2049 = vmatprep.subr.mxu0 0.0
    %2050 = vmatpush1.msra.mxu0 %v2026
    %2051 = vmatprep.subr.mxu0 0.0
    %2052 = vmatpush1.msra.mxu0 %v2027
    %2053 = vmatprep.subr.mxu0 0.0
    %2054 = vmatpush1.msra.mxu0 %v2028
    %2055 = vmatprep.subr.mxu0 0.0
    %2056 = vmatpush1.msra.mxu0 0.0
    %2057 = vmatprep.subr.mxu0 0.0
    %2058 = vmatpush1.msra.mxu0 0.0
    %2059 = vmatprep.subr.mxu0 0.0
    %2060 = vmatpush1.msra.mxu0 0.0
    %2061 = vmatprep.subr.mxu0 0.0
    %2062 = vmatpush1.msra.mxu0 0.0
    %2063 = vmatprep.subr.mxu0 0.0
    %2064 = vmatpush1.msra.mxu0 0.0
    %2065 = vmatprep.subr.mxu0 0.0
    %2066 = vmatpush1.msra.mxu0 0.0
    %2067 = vmatprep.subr.mxu0 0.0
    %2068 = vmatpush1.msra.mxu0 0.0
    %2069 = vmatprep.subr.mxu0 0.0
    %2070 = vmatpush1.msra.mxu0 0.0
    %2071 = vmatprep.subr.mxu0 0.0
    %2072 = vmatpush1.msra.mxu0 0.0
    %2073 = vmatprep.subr.mxu0 0.0
    %2074 = vmatpush1.msra.mxu0 0.0
    %2075 = vmatprep.subr.mxu0 0.0
    %2076 = vmatpush1.msra.mxu0 0.0
    %2077 = vmatprep.subr.mxu0 0.0
    %2078 = vmatpush1.msra.mxu0 0.0
    %2079 = vmatprep.subr.mxu0 0.0
    %2080 = vmatpush1.msra.mxu0 0.0
    %2081 = vmatprep.subr.mxu0 0.0
    %2082 = vmatpush1.msra.mxu0 0.0
    %2083 = vmatprep.subr.mxu0 0.0
    %2084 = vmatpush1.msra.mxu0 0.0
    %2085 = vmatprep.subr.mxu0 0.0
    %2086 = vmatpush1.msra.mxu0 0.0
    %2087 = vmatprep.subr.mxu0 0.0
    %2088 = vmatpush1.msra.mxu0 0.0
    %2089 = vmatprep.subr.mxu0 0.0
    %2090 = vmatpush1.msra.mxu0 0.0
    %2091 = vmatprep.subr.mxu0 0.0
    %2092 = vmatpush1.msra.mxu0 0.0
    %2093 = vmatprep.subr.mxu0 0.0
    %2094 = vmatpush1.msra.mxu0 0.0
    %2095 = vmatprep.subr.mxu0 0.0
    %2096 = vmatpush1.msra.mxu0 0.0
    %2097 = vmatprep.subr.mxu0 0.0
    %2098 = vmatpush1.msra.mxu0 0.0
    %2099 = vmatprep.subr.mxu0 0.0
    %2100 = vmatpush1.msra.mxu0 0.0
    %2101 = vmatprep.subr.mxu0 0.0
    %2102 = vmatpush1.msra.mxu0 0.0
    %2103 = vmatprep.mubr.f32.mxu0 0.0
    %2104 = vmatmul.mubr.f32.gmra.mrb[0].mxu0 %v2037
    %v2105 = vpop.f32.mrb[0].mxu0
    %v2106 = vadd.f32 %v2034, %v2105
    %v2107 = vpop.f32.mrb[0].mxu0
    %2108 = vdwg.mxu0
    %v2109 = vld [vmem:[%s69] sm:$0xff]
    %v2110 = vld [vmem:[%s69 + $0x8] sm:$0xff]
    %v2111 = vld [vmem:[%s69 + $0x10] sm:$0xff]
    %v2112 = vld [vmem:[%s69 + $0x18] sm:$0xff]
    %v2113 = vld [vmem:[#allocation39] sm:$0x1]
    %v2115 = vlaneseq
    %v2116 = vshrl.u32 %v2115, 7
    %v2117 = vsub.s32 0, %v2116
    %v2118 = vrot.slane %v2113, %v2117
    %2120 = vmatprep.subr.mxu0 0.0
    %2121 = vmatpush1.msra.mxu0 %v2109
    %2122 = vmatprep.subr.mxu0 0.0
    %2123 = vmatpush1.msra.mxu0 %v2110
    %2124 = vmatprep.subr.mxu0 0.0
    %2125 = vmatpush1.msra.mxu0 %v2111
    %2126 = vmatprep.subr.mxu0 0.0
    %2127 = vmatpush1.msra.mxu0 %v2112
    %2128 = vmatprep.subr.mxu0 0.0
    %2129 = vmatpush1.msra.mxu0 0.0
    %2130 = vmatprep.subr.mxu0 0.0
    %2131 = vmatpush1.msra.mxu0 0.0
    %2132 = vmatprep.subr.mxu0 0.0
    %2133 = vmatpush1.msra.mxu0 0.0
    %2134 = vmatprep.subr.mxu0 0.0
    %2135 = vmatpush1.msra.mxu0 0.0
    %2136 = vmatprep.subr.mxu0 0.0
    %2137 = vmatpush1.msra.mxu0 0.0
    %2138 = vmatprep.subr.mxu0 0.0
    %2139 = vmatpush1.msra.mxu0 0.0
    %2140 = vmatprep.subr.mxu0 0.0
    %2141 = vmatpush1.msra.mxu0 0.0
    %2142 = vmatprep.subr.mxu0 0.0
    %2143 = vmatpush1.msra.mxu0 0.0
    %2144 = vmatprep.subr.mxu0 0.0
    %2145 = vmatpush1.msra.mxu0 0.0
    %2146 = vmatprep.subr.mxu0 0.0
    %2147 = vmatpush1.msra.mxu0 0.0
    %2148 = vmatprep.subr.mxu0 0.0
    %2149 = vmatpush1.msra.mxu0 0.0
    %2150 = vmatprep.subr.mxu0 0.0
    %2151 = vmatpush1.msra.mxu0 0.0
    %2152 = vmatprep.subr.mxu0 0.0
    %2153 = vmatpush1.msra.mxu0 0.0
    %2154 = vmatprep.subr.mxu0 0.0
    %2155 = vmatpush1.msra.mxu0 0.0
    %2156 = vmatprep.subr.mxu0 0.0
    %2157 = vmatpush1.msra.mxu0 0.0
    %2158 = vmatprep.subr.mxu0 0.0
    %2159 = vmatpush1.msra.mxu0 0.0
    %2160 = vmatprep.subr.mxu0 0.0
    %2161 = vmatpush1.msra.mxu0 0.0
    %2162 = vmatprep.subr.mxu0 0.0
    %2163 = vmatpush1.msra.mxu0 0.0
    %2164 = vmatprep.subr.mxu0 0.0
    %2165 = vmatpush1.msra.mxu0 0.0
    %2166 = vmatprep.subr.mxu0 0.0
    %2167 = vmatpush1.msra.mxu0 0.0
    %2168 = vmatprep.subr.mxu0 0.0
    %2169 = vmatpush1.msra.mxu0 0.0
    %2170 = vmatprep.subr.mxu0 0.0
    %2171 = vmatpush1.msra.mxu0 0.0
    %2172 = vmatprep.subr.mxu0 0.0
    %2173 = vmatpush1.msra.mxu0 0.0
    %2174 = vmatprep.subr.mxu0 0.0
    %2175 = vmatpush1.msra.mxu0 0.0
    %2176 = vmatprep.subr.mxu0 0.0
    %2177 = vmatpush1.msra.mxu0 0.0
    %2178 = vmatprep.subr.mxu0 0.0
    %2179 = vmatpush1.msra.mxu0 0.0
    %2180 = vmatprep.subr.mxu0 0.0
    %2181 = vmatpush1.msra.mxu0 0.0
    %2182 = vmatprep.subr.mxu0 0.0
    %2183 = vmatpush1.msra.mxu0 0.0
    %2184 = vmatprep.mubr.f32.mxu0 0.0
    %2185 = vmatmul.mubr.f32.gmra.mrb[0].mxu0 %v1775
    %v2186 = vpop.f32.mrb[0].mxu0
    %v2187 = vadd.f32 %v2118, %v2186
    %v2188 = vpop.f32.mrb[0].mxu0
    %2189 = vdwg.mxu0
    %v2190 = vsel %vm1284, %v2187, -inf
    %2191 = vmax.xlane.f32.xlu0 %v2190
    %v2192 = vpop.xlane.xlu0 %2191
    %v2193 = vsub.f32 %v2187, %v2192
    %v2194 = vmul.f32 %v2193, 1.442695
    %v2195 = vpow.pop %v2194
    %v2196 = vsel %vm1284, %v2195, 0.0
    %2197 = vadd.xlane.f32.xlu0 %v2196
    %v2198 = vpop.xlane.xlu0 %2197
    %v2199 = vrcp.pop %v2198
    %v2200 = vmul.f32 %v2195, %v2199
    %2202 = vset.pattern.permute.xlu0 0
    %2203 = vperm.xlu0 %2202, %v2200
    %v2204 = vpop.permute.xlu0 %2203
    %v2206 = vmul.f32 %v1933, %v2204
    %2207 = vset.pattern.permute.xlu0 1
    %2208 = vperm.xlu0 %2207, %v2200
    %v2209 = vpop.permute.xlu0 %2208
    %v2211 = vmul.f32 %v1933, %v2209
    %2213 = vrot.lane.b32.xlu0 %v2211, 96
    %v2214 = vpop.permute.xlu0 %2213
    %v2216 = vadd.f32 %v2206, %v2214
    %2217 = vset.pattern.permute.xlu0 2
    %2218 = vperm.xlu0 %2217, %v2200
    %v2219 = vpop.permute.xlu0 %2218
    %v2221 = vmul.f32 %v1760, %v2219
    %v2222 = vadd.f32 %v2216, %v2221
    %2223 = vset.pattern.permute.xlu0 3
    %2224 = vperm.xlu0 %2223, %v2200
    %v2225 = vpop.permute.xlu0 %2224
    %v2227 = vmul.f32 %v1760, %v2225
    %2229 = vrot.lane.b32.xlu0 %v2227, 96
    %v2230 = vpop.permute.xlu0 %2229
    %v2232 = vadd.f32 %v2222, %v2230
    %v2233 = vld [vmem:[%s73] sm:$0xff]
    %v2234 = vld [vmem:[%s73 + $0x8] sm:$0xff]
    %v2235 = vld [vmem:[%s73 + $0x10] sm:$0xff]
    %v2236 = vld [vmem:[%s73 + $0x18] sm:$0xff]
    %v2237 = vld [vmem:[#allocation41] sm:$0x1]
    %v2239 = vlaneseq
    %v2240 = vshrl.u32 %v2239, 7
    %v2241 = vsub.s32 0, %v2240
    %v2242 = vrot.slane %v2237, %v2241
    %2244 = vmatprep.subr.mxu0 0.0
    %2245 = vmatpush1.msra.mxu0 %v2233
    %2246 = vmatprep.subr.mxu0 0.0
    %2247 = vmatpush1.msra.mxu0 %v2234
    %2248 = vmatprep.subr.mxu0 0.0
    %2249 = vmatpush1.msra.mxu0 %v2235
    %2250 = vmatprep.subr.mxu0 0.0
    %2251 = vmatpush1.msra.mxu0 %v2236
    %2252 = vmatprep.subr.mxu0 0.0
    %2253 = vmatpush1.msra.mxu0 0.0
    %2254 = vmatprep.subr.mxu0 0.0
    %2255 = vmatpush1.msra.mxu0 0.0
    %2256 = vmatprep.subr.mxu0 0.0
    %2257 = vmatpush1.msra.mxu0 0.0
    %2258 = vmatprep.subr.mxu0 0.0
    %2259 = vmatpush1.msra.mxu0 0.0
    %2260 = vmatprep.subr.mxu0 0.0
    %2261 = vmatpush1.msra.mxu0 0.0
    %2262 = vmatprep.subr.mxu0 0.0
    %2263 = vmatpush1.msra.mxu0 0.0
    %2264 = vmatprep.subr.mxu0 0.0
    %2265 = vmatpush1.msra.mxu0 0.0
    %2266 = vmatprep.subr.mxu0 0.0
    %2267 = vmatpush1.msra.mxu0 0.0
    %2268 = vmatprep.subr.mxu0 0.0
    %2269 = vmatpush1.msra.mxu0 0.0
    %2270 = vmatprep.subr.mxu0 0.0
    %2271 = vmatpush1.msra.mxu0 0.0
    %2272 = vmatprep.subr.mxu0 0.0
    %2273 = vmatpush1.msra.mxu0 0.0
    %2274 = vmatprep.subr.mxu0 0.0
    %2275 = vmatpush1.msra.mxu0 0.0
    %2276 = vmatprep.subr.mxu0 0.0
    %2277 = vmatpush1.msra.mxu0 0.0
    %2278 = vmatprep.subr.mxu0 0.0
    %2279 = vmatpush1.msra.mxu0 0.0
    %2280 = vmatprep.subr.mxu0 0.0
    %2281 = vmatpush1.msra.mxu0 0.0
    %2282 = vmatprep.subr.mxu0 0.0
    %2283 = vmatpush1.msra.mxu0 0.0
    %2284 = vmatprep.subr.mxu0 0.0
    %2285 = vmatpush1.msra.mxu0 0.0
    %2286 = vmatprep.subr.mxu0 0.0
    %2287 = vmatpush1.msra.mxu0 0.0
    %2288 = vmatprep.subr.mxu0 0.0
    %2289 = vmatpush1.msra.mxu0 0.0
    %2290 = vmatprep.subr.mxu0 0.0
    %2291 = vmatpush1.msra.mxu0 0.0
    %2292 = vmatprep.subr.mxu0 0.0
    %2293 = vmatpush1.msra.mxu0 0.0
    %2294 = vmatprep.subr.mxu0 0.0
    %2295 = vmatpush1.msra.mxu0 0.0
    %2296 = vmatprep.subr.mxu0 0.0
    %2297 = vmatpush1.msra.mxu0 0.0
    %2298 = vmatprep.subr.mxu0 0.0
    %2299 = vmatpush1.msra.mxu0 0.0
    %2300 = vmatprep.subr.mxu0 0.0
    %2301 = vmatpush1.msra.mxu0 0.0
    %2302 = vmatprep.subr.mxu0 0.0
    %2303 = vmatpush1.msra.mxu0 0.0
    %2304 = vmatprep.subr.mxu0 0.0
    %2305 = vmatpush1.msra.mxu0 0.0
    %2306 = vmatprep.subr.mxu0 0.0
    %2307 = vmatpush1.msra.mxu0 0.0
    %2308 = vmatprep.mubr.f32.mxu0 0.0
    %2309 = vmatmul.mubr.f32.gmra.mrb[0].mxu0 %v1948
    %v2310 = vpop.f32.mrb[0].mxu0
    %v2311 = vadd.f32 %v2242, %v2310
    %v2312 = vpop.f32.mrb[0].mxu0
    %2313 = vdwg.mxu0
    %v2314 = vsel %vm1284, %v2311, -inf
    %2315 = vmax.xlane.f32.xlu0 %v2314
    %v2316 = vpop.xlane.xlu0 %2315
    %v2317 = vsub.f32 %v2311, %v2316
    %v2318 = vmul.f32 %v2317, 1.442695
    %v2319 = vpow.pop %v2318
    %v2320 = vsel %vm1284, %v2319, 0.0
    %2321 = vadd.xlane.f32.xlu0 %v2320
    %v2322 = vpop.xlane.xlu0 %2321
    %v2323 = vrcp.pop %v2322
    %v2324 = vmul.f32 %v2319, %v2323
    %2326 = vset.pattern.permute.xlu0 0
    %2327 = vperm.xlu0 %2326, %v2324
    %v2328 = vpop.permute.xlu0 %2327
    %v2330 = vmul.f32 %v2106, %v2328
    %2331 = vset.pattern.permute.xlu0 1
    %2332 = vperm.xlu0 %2331, %v2324
    %v2333 = vpop.permute.xlu0 %2332
    %v2335 = vmul.f32 %v2106, %v2333
    %2337 = vrot.lane.b32.xlu0 %v2335, 96
    %v2338 = vpop.permute.xlu0 %2337
    %v2340 = vadd.f32 %v2330, %v2338
    %2341 = vset.pattern.permute.xlu0 2
    %2342 = vperm.xlu0 %2341, %v2324
    %v2343 = vpop.permute.xlu0 %2342
    %v2345 = vmul.f32 %v1760, %v2343
    %v2346 = vadd.f32 %v2340, %v2345
    %2347 = vset.pattern.permute.xlu0 3
    %2348 = vperm.xlu0 %2347, %v2324
    %v2349 = vpop.permute.xlu0 %2348
    %v2351 = vmul.f32 %v1760, %v2349
    %2353 = vrot.lane.b32.xlu0 %v2351, 96
    %v2354 = vpop.permute.xlu0 %2353
    %v2356 = vadd.f32 %v2346, %v2354
    %v2357 = vld [vmem:[%s65] sm:$0xff]
    %v2358 = vld [vmem:[%s65 + $0x8] sm:$0xff]
    %v2359 = vld [vmem:[%s65 + $0x10] sm:$0xff]
    %v2360 = vld [vmem:[%s65 + $0x18] sm:$0xff]
    %v2361 = vld [vmem:[#allocation38] sm:$0x1]
    %v2363 = vlaneseq
    %v2364 = vshrl.u32 %v2363, 7
    %v2365 = vsub.s32 0, %v2364
    %v2366 = vrot.slane %v2361, %v2365
    %2368 = vmatprep.subr.mxu0 0.0
    %2369 = vmatpush1.msra.mxu0 %v2357
    %2370 = vmatprep.subr.mxu0 0.0
    %2371 = vmatpush1.msra.mxu0 %v2358
    %2372 = vmatprep.subr.mxu0 0.0
    %2373 = vmatpush1.msra.mxu0 %v2359
    %2374 = vmatprep.subr.mxu0 0.0
    %2375 = vmatpush1.msra.mxu0 %v2360
    %2376 = vmatprep.subr.mxu0 0.0
    %2377 = vmatpush1.msra.mxu0 0.0
    %2378 = vmatprep.subr.mxu0 0.0
    %2379 = vmatpush1.msra.mxu0 0.0
    %2380 = vmatprep.subr.mxu0 0.0
    %2381 = vmatpush1.msra.mxu0 0.0
    %2382 = vmatprep.subr.mxu0 0.0
    %2383 = vmatpush1.msra.mxu0 0.0
    %2384 = vmatprep.subr.mxu0 0.0
    %2385 = vmatpush1.msra.mxu0 0.0
    %2386 = vmatprep.subr.mxu0 0.0
    %2387 = vmatpush1.msra.mxu0 0.0
    %2388 = vmatprep.subr.mxu0 0.0
    %2389 = vmatpush1.msra.mxu0 0.0
    %2390 = vmatprep.subr.mxu0 0.0
    %2391 = vmatpush1.msra.mxu0 0.0
    %2392 = vmatprep.subr.mxu0 0.0
    %2393 = vmatpush1.msra.mxu0 0.0
    %2394 = vmatprep.subr.mxu0 0.0
    %2395 = vmatpush1.msra.mxu0 0.0
    %2396 = vmatprep.subr.mxu0 0.0
    %2397 = vmatpush1.msra.mxu0 0.0
    %2398 = vmatprep.subr.mxu0 0.0
    %2399 = vmatpush1.msra.mxu0 0.0
    %2400 = vmatprep.subr.mxu0 0.0
    %2401 = vmatpush1.msra.mxu0 0.0
    %2402 = vmatprep.subr.mxu0 0.0
    %2403 = vmatpush1.msra.mxu0 0.0
    %2404 = vmatprep.subr.mxu0 0.0
    %2405 = vmatpush1.msra.mxu0 0.0
    %2406 = vmatprep.subr.mxu0 0.0
    %2407 = vmatpush1.msra.mxu0 0.0
    %2408 = vmatprep.subr.mxu0 0.0
    %2409 = vmatpush1.msra.mxu0 0.0
    %2410 = vmatprep.subr.mxu0 0.0
    %2411 = vmatpush1.msra.mxu0 0.0
    %2412 = vmatprep.subr.mxu0 0.0
    %2413 = vmatpush1.msra.mxu0 0.0
    %2414 = vmatprep.subr.mxu0 0.0
    %2415 = vmatpush1.msra.mxu0 0.0
    %2416 = vmatprep.subr.mxu0 0.0
    %2417 = vmatpush1.msra.mxu0 0.0
    %2418 = vmatprep.subr.mxu0 0.0
    %2419 = vmatpush1.msra.mxu0 0.0
    %2420 = vmatprep.subr.mxu0 0.0
    %2421 = vmatpush1.msra.mxu0 0.0
    %2422 = vmatprep.subr.mxu0 0.0
    %2423 = vmatpush1.msra.mxu0 0.0
    %2424 = vmatprep.subr.mxu0 0.0
    %2425 = vmatpush1.msra.mxu0 0.0
    %2426 = vmatprep.subr.mxu0 0.0
    %2427 = vmatpush1.msra.mxu0 0.0
    %2428 = vmatprep.subr.mxu0 0.0
    %2429 = vmatpush1.msra.mxu0 0.0
    %2430 = vmatprep.subr.mxu0 0.0
    %2431 = vmatpush1.msra.mxu0 0.0
    %2432 = vmatprep.mubr.f32.mxu0 0.0
    %2433 = vmatmul.mubr.f32.gmra.mrb[0].mxu0 %v1602
    %v2434 = vpop.f32.mrb[0].mxu0
    %v2435 = vadd.f32 %v2366, %v2434
    %v2436 = vpop.f32.mrb[0].mxu0
    %2437 = vdwg.mxu0
    %v2438 = vsel %vm1529, %v2435, -inf
    %2439 = vmax.xlane.f32.xlu0 %v2438
    %v2440 = vpop.xlane.xlu0 %2439
    %v2441 = vsub.f32 %v2435, %v2440
    %v2442 = vmul.f32 %v2441, 1.442695
    %v2443 = vpow.pop %v2442
    %v2444 = vsel %vm1529, %v2443, 0.0
    %2445 = vadd.xlane.f32.xlu0 %v2444
    %v2446 = vpop.xlane.xlu0 %2445
    %v2447 = vrcp.pop %v2446
    %v2448 = vmul.f32 %v2443, %v2447
    %2450 = vset.pattern.permute.xlu0 0
    %2451 = vperm.xlu0 %2450, %v2448
    %v2452 = vpop.permute.xlu0 %2451
    %v2454 = vmul.f32 %v1933, %v2452
    %2455 = vset.pattern.permute.xlu0 1
    %2456 = vperm.xlu0 %2455, %v2448
    %v2457 = vpop.permute.xlu0 %2456
    %v2459 = vmul.f32 %v1933, %v2457
    %2461 = vrot.lane.b32.xlu0 %v2459, 96
    %v2462 = vpop.permute.xlu0 %2461
    %v2464 = vadd.f32 %v2454, %v2462
    %2465 = vset.pattern.permute.xlu0 2
    %2466 = vperm.xlu0 %2465, %v2448
    %v2467 = vpop.permute.xlu0 %2466
    %v2469 = vmul.f32 %v2106, %v2467
    %v2470 = vadd.f32 %v2464, %v2469
    %2471 = vset.pattern.permute.xlu0 3
    %2472 = vperm.xlu0 %2471, %v2448
    %v2473 = vpop.permute.xlu0 %2472
    %v2475 = vmul.f32 %v2106, %v2473
    %2477 = vrot.lane.b32.xlu0 %v2475, 96
    %v2478 = vpop.permute.xlu0 %2477
    %v2480 = vadd.f32 %v2470, %v2478
    %2481 = vset.pattern.permute.xlu0 4
    %2482 = vperm.xlu0 %2481, %v2448
    %v2483 = vpop.permute.xlu0 %2482
    %v2485 = vmul.f32 %v1760, %v2483
    %v2486 = vadd.f32 %v2480, %v2485
    %2487 = vset.pattern.permute.xlu0 5
    %2488 = vperm.xlu0 %2487, %v2448
    %v2489 = vpop.permute.xlu0 %2488
    %v2491 = vmul.f32 %v1760, %v2489
    %2493 = vrot.lane.b32.xlu0 %v2491, 96
    %v2494 = vpop.permute.xlu0 %2493
    %v2496 = vadd.f32 %v2486, %v2494
    %v2497 = vld [vmem:[#allocation45] sm:$0xff]
    %v2498 = vld [vmem:[#allocation45 + $0x8] sm:$0xff]
    %v2499 = vld [vmem:[#allocation45 + $0x10] sm:$0xff]
    %v2500 = vld [vmem:[#allocation45 + $0x18] sm:$0xff]
    %v2501 = vld [vmem:[#allocation42] sm:$0x1]
    %v2503 = vlaneseq
    %v2504 = vshrl.u32 %v2503, 7
    %v2505 = vsub.s32 0, %v2504
    %v2506 = vrot.slane %v2501, %v2505
    %v2509 = vsel %vm1600, %v2496, 0
    %2511 = vmatprep.subr.mxu0 0.0
    %2512 = vmatpush1.msra.mxu0 %v2497
    %2513 = vmatprep.subr.mxu0 0.0
    %2514 = vmatpush1.msra.mxu0 %v2498
    %2515 = vmatprep.subr.mxu0 0.0
    %2516 = vmatpush1.msra.mxu0 %v2499
    %2517 = vmatprep.subr.mxu0 0.0
    %2518 = vmatpush1.msra.mxu0 %v2500
    %2519 = vmatprep.subr.mxu0 0.0
    %2520 = vmatpush1.msra.mxu0 0.0
    %2521 = vmatprep.subr.mxu0 0.0
    %2522 = vmatpush1.msra.mxu0 0.0
    %2523 = vmatprep.subr.mxu0 0.0
    %2524 = vmatpush1.msra.mxu0 0.0
    %2525 = vmatprep.subr.mxu0 0.0
    %2526 = vmatpush1.msra.mxu0 0.0
    %2527 = vmatprep.subr.mxu0 0.0
    %2528 = vmatpush1.msra.mxu0 0.0
    %2529 = vmatprep.subr.mxu0 0.0
    %2530 = vmatpush1.msra.mxu0 0.0
    %2531 = vmatprep.subr.mxu0 0.0
    %2532 = vmatpush1.msra.mxu0 0.0
    %2533 = vmatprep.subr.mxu0 0.0
    %2534 = vmatpush1.msra.mxu0 0.0
    %2535 = vmatprep.subr.mxu0 0.0
    %2536 = vmatpush1.msra.mxu0 0.0
    %2537 = vmatprep.subr.mxu0 0.0
    %2538 = vmatpush1.msra.mxu0 0.0
    %2539 = vmatprep.subr.mxu0 0.0
    %2540 = vmatpush1.msra.mxu0 0.0
    %2541 = vmatprep.subr.mxu0 0.0
    %2542 = vmatpush1.msra.mxu0 0.0
    %2543 = vmatprep.subr.mxu0 0.0
    %2544 = vmatpush1.msra.mxu0 0.0
    %2545 = vmatprep.subr.mxu0 0.0
    %2546 = vmatpush1.msra.mxu0 0.0
    %2547 = vmatprep.subr.mxu0 0.0
    %2548 = vmatpush1.msra.mxu0 0.0
    %2549 = vmatprep.subr.mxu0 0.0
    %2550 = vmatpush1.msra.mxu0 0.0
    %2551 = vmatprep.subr.mxu0 0.0
    %2552 = vmatpush1.msra.mxu0 0.0
    %2553 = vmatprep.subr.mxu0 0.0
    %2554 = vmatpush1.msra.mxu0 0.0
    %2555 = vmatprep.subr.mxu0 0.0
    %2556 = vmatpush1.msra.mxu0 0.0
    %2557 = vmatprep.subr.mxu0 0.0
    %2558 = vmatpush1.msra.mxu0 0.0
    %2559 = vmatprep.subr.mxu0 0.0
    %2560 = vmatpush1.msra.mxu0 0.0
    %2561 = vmatprep.subr.mxu0 0.0
    %2562 = vmatpush1.msra.mxu0 0.0
    %2563 = vmatprep.subr.mxu0 0.0
    %2564 = vmatpush1.msra.mxu0 0.0
    %2565 = vmatprep.subr.mxu0 0.0
    %2566 = vmatpush1.msra.mxu0 0.0
    %2567 = vmatprep.subr.mxu0 0.0
    %2568 = vmatpush1.msra.mxu0 0.0
    %2569 = vmatprep.subr.mxu0 0.0
    %2570 = vmatpush1.msra.mxu0 0.0
    %2571 = vmatprep.subr.mxu0 0.0
    %2572 = vmatpush1.msra.mxu0 0.0
    %2573 = vmatprep.subr.mxu0 0.0
    %2574 = vmatpush1.msra.mxu0 0.0
    %2575 = vmatprep.mubr.f32.mxu0 0.0
    %2576 = vmatmul.mubr.f32.gmra.mrb[0].mxu0 %v2509
    %v2577 = vpop.f32.mrb[0].mxu0
    %v2578 = vadd.f32 %v2506, %v2577
    %v2579 = vpop.f32.mrb[0].mxu0
    %2580 = vdwg.mxu0
    %v2581 = vmax.f32 %v2578, 0.0
    %v2582 = vld [vmem:[%s81] sm:$0xff]
    %v2583 = vld [vmem:[%s81 + $0x8] sm:$0xff]
    %v2584 = vld [vmem:[%s81 + $0x10] sm:$0xff]
    %v2585 = vld [vmem:[%s81 + $0x18] sm:$0xff]
    %v2586 = vld [vmem:[%s81 + $0x20] sm:$0xff]
    %v2587 = vld [vmem:[%s81 + $0x28] sm:$0xff]
    %v2588 = vld [vmem:[%s81 + $0x30] sm:$0xff]
    %v2589 = vld [vmem:[%s81 + $0x38] sm:$0xff]
    %v2590 = vld [vmem:[#allocation44] sm:$0x1]
    %v2592 = vlaneseq
    %v2593 = vshrl.u32 %v2592, 7
    %v2594 = vsub.s32 0, %v2593
    %v2595 = vrot.slane %v2590, %v2594
    %v2598 = vsel %vm795, %v2581, 0
    %2600 = vmatprep.subr.mxu0 0.0
    %2601 = vmatpush1.msra.mxu0 %v2582
    %2602 = vmatprep.subr.mxu0 0.0
    %2603 = vmatpush1.msra.mxu0 %v2583
    %2604 = vmatprep.subr.mxu0 0.0
    %2605 = vmatpush1.msra.mxu0 %v2584
    %2606 = vmatprep.subr.mxu0 0.0
    %2607 = vmatpush1.msra.mxu0 %v2585
    %2608 = vmatprep.subr.mxu0 0.0
    %2609 = vmatpush1.msra.mxu0 %v2586
    %2610 = vmatprep.subr.mxu0 0.0
    %2611 = vmatpush1.msra.mxu0 %v2587
    %2612 = vmatprep.subr.mxu0 0.0
    %2613 = vmatpush1.msra.mxu0 %v2588
    %2614 = vmatprep.subr.mxu0 0.0
    %2615 = vmatpush1.msra.mxu0 %v2589
    %2616 = vmatprep.subr.mxu0 0.0
    %2617 = vmatpush1.msra.mxu0 0.0
    %2618 = vmatprep.subr.mxu0 0.0
    %2619 = vmatpush1.msra.mxu0 0.0
    %2620 = vmatprep.subr.mxu0 0.0
    %2621 = vmatpush1.msra.mxu0 0.0
    %2622 = vmatprep.subr.mxu0 0.0
    %2623 = vmatpush1.msra.mxu0 0.0
    %2624 = vmatprep.subr.mxu0 0.0
    %2625 = vmatpush1.msra.mxu0 0.0
    %2626 = vmatprep.subr.mxu0 0.0
    %2627 = vmatpush1.msra.mxu0 0.0
    %2628 = vmatprep.subr.mxu0 0.0
    %2629 = vmatpush1.msra.mxu0 0.0
    %2630 = vmatprep.subr.mxu0 0.0
    %2631 = vmatpush1.msra.mxu0 0.0
    %2632 = vmatprep.subr.mxu0 0.0
    %2633 = vmatpush1.msra.mxu0 0.0
    %2634 = vmatprep.subr.mxu0 0.0
    %2635 = vmatpush1.msra.mxu0 0.0
    %2636 = vmatprep.subr.mxu0 0.0
    %2637 = vmatpush1.msra.mxu0 0.0
    %2638 = vmatprep.subr.mxu0 0.0
    %2639 = vmatpush1.msra.mxu0 0.0
    %2640 = vmatprep.subr.mxu0 0.0
    %2641 = vmatpush1.msra.mxu0 0.0
    %2642 = vmatprep.subr.mxu0 0.0
    %2643 = vmatpush1.msra.mxu0 0.0
    %2644 = vmatprep.subr.mxu0 0.0
    %2645 = vmatpush1.msra.mxu0 0.0
    %2646 = vmatprep.subr.mxu0 0.0
    %2647 = vmatpush1.msra.mxu0 0.0
    %2648 = vmatprep.subr.mxu0 0.0
    %2649 = vmatpush1.msra.mxu0 0.0
    %2650 = vmatprep.subr.mxu0 0.0
    %2651 = vmatpush1.msra.mxu0 0.0
    %2652 = vmatprep.subr.mxu0 0.0
    %2653 = vmatpush1.msra.mxu0 0.0
    %2654 = vmatprep.subr.mxu0 0.0
    %2655 = vmatpush1.msra.mxu0 0.0
    %2656 = vmatprep.subr.mxu0 0.0
    %2657 = vmatpush1.msra.mxu0 0.0
    %2658 = vmatprep.subr.mxu0 0.0
    %2659 = vmatpush1.msra.mxu0 0.0
    %2660 = vmatprep.subr.mxu0 0.0
    %2661 = vmatpush1.msra.mxu0 0.0
    %2662 = vmatprep.subr.mxu0 0.0
    %2663 = vmatpush1.msra.mxu0 0.0
    %2664 = vmatprep.mubr.f32.mxu0 0.0
    %2665 = vmatmul.mubr.f32.gmra.mrb[0].mxu0 %v2598
    %v2666 = vpop.f32.mrb[0].mxu0
    %v2667 = vadd.f32 %v2595, %v2666
    %v2668 = vpop.f32.mrb[0].mxu0
    %2669 = vdwg.mxu0
    %v2670 = vld [vmem:[#allocation50] sm:$0xff]
    %v2671 = vld [vmem:[#allocation50 + $0x8] sm:$0xff]
    %v2672 = vld [vmem:[#allocation50 + $0x10] sm:$0xff]
    %v2673 = vld [vmem:[#allocation50 + $0x18] sm:$0xff]
    %v2674 = vld [vmem:[#allocation47] sm:$0x1]
    %v2676 = vlaneseq
    %v2677 = vshrl.u32 %v2676, 7
    %v2678 = vsub.s32 0, %v2677
    %v2679 = vrot.slane %v2674, %v2678
    %v2682 = vsel %vm1600, %v2232, 0
    %2684 = vmatprep.subr.mxu0 0.0
    %2685 = vmatpush1.msra.mxu0 %v2670
    %2686 = vmatprep.subr.mxu0 0.0
    %2687 = vmatpush1.msra.mxu0 %v2671
    %2688 = vmatprep.subr.mxu0 0.0
    %2689 = vmatpush1.msra.mxu0 %v2672
    %2690 = vmatprep.subr.mxu0 0.0
    %2691 = vmatpush1.msra.mxu0 %v2673
    %2692 = vmatprep.subr.mxu0 0.0
    %2693 = vmatpush1.msra.mxu0 0.0
    %2694 = vmatprep.subr.mxu0 0.0
    %2695 = vmatpush1.msra.mxu0 0.0
    %2696 = vmatprep.subr.mxu0 0.0
    %2697 = vmatpush1.msra.mxu0 0.0
    %2698 = vmatprep.subr.mxu0 0.0
    %2699 = vmatpush1.msra.mxu0 0.0
    %2700 = vmatprep.subr.mxu0 0.0
    %2701 = vmatpush1.msra.mxu0 0.0
    %2702 = vmatprep.subr.mxu0 0.0
    %2703 = vmatpush1.msra.mxu0 0.0
    %2704 = vmatprep.subr.mxu0 0.0
    %2705 = vmatpush1.msra.mxu0 0.0
    %2706 = vmatprep.subr.mxu0 0.0
    %2707 = vmatpush1.msra.mxu0 0.0
    %2708 = vmatprep.subr.mxu0 0.0
    %2709 = vmatpush1.msra.mxu0 0.0
    %2710 = vmatprep.subr.mxu0 0.0
    %2711 = vmatpush1.msra.mxu0 0.0
    %2712 = vmatprep.subr.mxu0 0.0
    %2713 = vmatpush1.msra.mxu0 0.0
    %2714 = vmatprep.subr.mxu0 0.0
    %2715 = vmatpush1.msra.mxu0 0.0
    %2716 = vmatprep.subr.mxu0 0.0
    %2717 = vmatpush1.msra.mxu0 0.0
    %2718 = vmatprep.subr.mxu0 0.0
    %2719 = vmatpush1.msra.mxu0 0.0
    %2720 = vmatprep.subr.mxu0 0.0
    %2721 = vmatpush1.msra.mxu0 0.0
    %2722 = vmatprep.subr.mxu0 0.0
    %2723 = vmatpush1.msra.mxu0 0.0
    %2724 = vmatprep.subr.mxu0 0.0
    %2725 = vmatpush1.msra.mxu0 0.0
    %2726 = vmatprep.subr.mxu0 0.0
    %2727 = vmatpush1.msra.mxu0 0.0
    %2728 = vmatprep.subr.mxu0 0.0
    %2729 = vmatpush1.msra.mxu0 0.0
    %2730 = vmatprep.subr.mxu0 0.0
    %2731 = vmatpush1.msra.mxu0 0.0
    %2732 = vmatprep.subr.mxu0 0.0
    %2733 = vmatpush1.msra.mxu0 0.0
    %2734 = vmatprep.subr.mxu0 0.0
    %2735 = vmatpush1.msra.mxu0 0.0
    %2736 = vmatprep.subr.mxu0 0.0
    %2737 = vmatpush1.msra.mxu0 0.0
    %2738 = vmatprep.subr.mxu0 0.0
    %2739 = vmatpush1.msra.mxu0 0.0
    %2740 = vmatprep.subr.mxu0 0.0
    %2741 = vmatpush1.msra.mxu0 0.0
    %2742 = vmatprep.subr.mxu0 0.0
    %2743 = vmatpush1.msra.mxu0 0.0
    %2744 = vmatprep.subr.mxu0 0.0
    %2745 = vmatpush1.msra.mxu0 0.0
    %2746 = vmatprep.subr.mxu0 0.0
    %2747 = vmatpush1.msra.mxu0 0.0
    %2748 = vmatprep.mubr.f32.mxu0 0.0
    %2749 = vmatmul.mubr.f32.gmra.mrb[0].mxu0 %v2682
    %v2750 = vpop.f32.mrb[0].mxu0
    %v2751 = vadd.f32 %v2679, %v2750
    %v2752 = vpop.f32.mrb[0].mxu0
    %2753 = vdwg.mxu0
    %v2754 = vmax.f32 %v2751, 0.0
    %v2755 = vld [vmem:[%s89] sm:$0xff]
    %v2756 = vld [vmem:[%s89 + $0x8] sm:$0xff]
    %v2757 = vld [vmem:[%s89 + $0x10] sm:$0xff]
    %v2758 = vld [vmem:[%s89 + $0x18] sm:$0xff]
    %v2759 = vld [vmem:[%s89 + $0x20] sm:$0xff]
    %v2760 = vld [vmem:[%s89 + $0x28] sm:$0xff]
    %v2761 = vld [vmem:[%s89 + $0x30] sm:$0xff]
    %v2762 = vld [vmem:[%s89 + $0x38] sm:$0xff]
    %v2763 = vld [vmem:[#allocation48] sm:$0x1]
    %v2765 = vlaneseq
    %v2766 = vshrl.u32 %v2765, 7
    %v2767 = vsub.s32 0, %v2766
    %v2768 = vrot.slane %v2763, %v2767
    %v2771 = vsel %vm795, %v2754, 0
    %2773 = vmatprep.subr.mxu0 0.0
    %2774 = vmatpush1.msra.mxu0 %v2755
    %2775 = vmatprep.subr.mxu0 0.0
    %2776 = vmatpush1.msra.mxu0 %v2756
    %2777 = vmatprep.subr.mxu0 0.0
    %2778 = vmatpush1.msra.mxu0 %v2757
    %2779 = vmatprep.subr.mxu0 0.0
    %2780 = vmatpush1.msra.mxu0 %v2758
    %2781 = vmatprep.subr.mxu0 0.0
    %2782 = vmatpush1.msra.mxu0 %v2759
    %2783 = vmatprep.subr.mxu0 0.0
    %2784 = vmatpush1.msra.mxu0 %v2760
    %2785 = vmatprep.subr.mxu0 0.0
    %2786 = vmatpush1.msra.mxu0 %v2761
    %2787 = vmatprep.subr.mxu0 0.0
    %2788 = vmatpush1.msra.mxu0 %v2762
    %2789 = vmatprep.subr.mxu0 0.0
    %2790 = vmatpush1.msra.mxu0 0.0
    %2791 = vmatprep.subr.mxu0 0.0
    %2792 = vmatpush1.msra.mxu0 0.0
    %2793 = vmatprep.subr.mxu0 0.0
    %2794 = vmatpush1.msra.mxu0 0.0
    %2795 = vmatprep.subr.mxu0 0.0
    %2796 = vmatpush1.msra.mxu0 0.0
    %2797 = vmatprep.subr.mxu0 0.0
    %2798 = vmatpush1.msra.mxu0 0.0
    %2799 = vmatprep.subr.mxu0 0.0
    %2800 = vmatpush1.msra.mxu0 0.0
    %2801 = vmatprep.subr.mxu0 0.0
    %2802 = vmatpush1.msra.mxu0 0.0
    %2803 = vmatprep.subr.mxu0 0.0
    %2804 = vmatpush1.msra.mxu0 0.0
    %2805 = vmatprep.subr.mxu0 0.0
    %2806 = vmatpush1.msra.mxu0 0.0
    %2807 = vmatprep.subr.mxu0 0.0
    %2808 = vmatpush1.msra.mxu0 0.0
    %2809 = vmatprep.subr.mxu0 0.0
    %2810 = vmatpush1.msra.mxu0 0.0
    %2811 = vmatprep.subr.mxu0 0.0
    %2812 = vmatpush1.msra.mxu0 0.0
    %2813 = vmatprep.subr.mxu0 0.0
    %2814 = vmatpush1.msra.mxu0 0.0
    %2815 = vmatprep.subr.mxu0 0.0
    %2816 = vmatpush1.msra.mxu0 0.0
    %2817 = vmatprep.subr.mxu0 0.0
    %2818 = vmatpush1.msra.mxu0 0.0
    %2819 = vmatprep.subr.mxu0 0.0
    %2820 = vmatpush1.msra.mxu0 0.0
    %2821 = vmatprep.subr.mxu0 0.0
    %2822 = vmatpush1.msra.mxu0 0.0
    %2823 = vmatprep.subr.mxu0 0.0
    %2824 = vmatpush1.msra.mxu0 0.0
    %2825 = vmatprep.subr.mxu0 0.0
    %2826 = vmatpush1.msra.mxu0 0.0
    %2827 = vmatprep.subr.mxu0 0.0
    %2828 = vmatpush1.msra.mxu0 0.0
    %2829 = vmatprep.subr.mxu0 0.0
    %2830 = vmatpush1.msra.mxu0 0.0
    %2831 = vmatprep.subr.mxu0 0.0
    %2832 = vmatpush1.msra.mxu0 0.0
    %2833 = vmatprep.subr.mxu0 0.0
    %2834 = vmatpush1.msra.mxu0 0.0
    %2835 = vmatprep.subr.mxu0 0.0
    %2836 = vmatpush1.msra.mxu0 0.0
    %2837 = vmatprep.mubr.f32.mxu0 0.0
    %2838 = vmatmul.mubr.f32.gmra.mrb[0].mxu0 %v2771
    %v2839 = vpop.f32.mrb[0].mxu0
    %v2840 = vadd.f32 %v2768, %v2839
    %v2841 = vpop.f32.mrb[0].mxu0
    %2842 = vdwg.mxu0
    %v2843 = vld [vmem:[#allocation54] sm:$0xff]
    %v2844 = vld [vmem:[#allocation54 + $0x8] sm:$0xff]
    %v2845 = vld [vmem:[#allocation54 + $0x10] sm:$0xff]
    %v2846 = vld [vmem:[#allocation54 + $0x18] sm:$0xff]
    %v2847 = vld [vmem:[#allocation51] sm:$0x1]
    %v2849 = vlaneseq
    %v2850 = vshrl.u32 %v2849, 7
    %v2851 = vsub.s32 0, %v2850
    %v2852 = vrot.slane %v2847, %v2851
    %v2855 = vsel %vm1600, %v2356, 0
    %2857 = vmatprep.subr.mxu0 0.0
    %2858 = vmatpush1.msra.mxu0 %v2843
    %2859 = vmatprep.subr.mxu0 0.0
    %2860 = vmatpush1.msra.mxu0 %v2844
    %2861 = vmatprep.subr.mxu0 0.0
    %2862 = vmatpush1.msra.mxu0 %v2845
    %2863 = vmatprep.subr.mxu0 0.0
    %2864 = vmatpush1.msra.mxu0 %v2846
    %2865 = vmatprep.subr.mxu0 0.0
    %2866 = vmatpush1.msra.mxu0 0.0
    %2867 = vmatprep.subr.mxu0 0.0
    %2868 = vmatpush1.msra.mxu0 0.0
    %2869 = vmatprep.subr.mxu0 0.0
    %2870 = vmatpush1.msra.mxu0 0.0
    %2871 = vmatprep.subr.mxu0 0.0
    %2872 = vmatpush1.msra.mxu0 0.0
    %2873 = vmatprep.subr.mxu0 0.0
    %2874 = vmatpush1.msra.mxu0 0.0
    %2875 = vmatprep.subr.mxu0 0.0
    %2876 = vmatpush1.msra.mxu0 0.0
    %2877 = vmatprep.subr.mxu0 0.0
    %2878 = vmatpush1.msra.mxu0 0.0
    %2879 = vmatprep.subr.mxu0 0.0
    %2880 = vmatpush1.msra.mxu0 0.0
    %2881 = vmatprep.subr.mxu0 0.0
    %2882 = vmatpush1.msra.mxu0 0.0
    %2883 = vmatprep.subr.mxu0 0.0
    %2884 = vmatpush1.msra.mxu0 0.0
    %2885 = vmatprep.subr.mxu0 0.0
    %2886 = vmatpush1.msra.mxu0 0.0
    %2887 = vmatprep.subr.mxu0 0.0
    %2888 = vmatpush1.msra.mxu0 0.0
    %2889 = vmatprep.subr.mxu0 0.0
    %2890 = vmatpush1.msra.mxu0 0.0
    %2891 = vmatprep.subr.mxu0 0.0
    %2892 = vmatpush1.msra.mxu0 0.0
    %2893 = vmatprep.subr.mxu0 0.0
    %2894 = vmatpush1.msra.mxu0 0.0
    %2895 = vmatprep.subr.mxu0 0.0
    %2896 = vmatpush1.msra.mxu0 0.0
    %2897 = vmatprep.subr.mxu0 0.0
    %2898 = vmatpush1.msra.mxu0 0.0
    %2899 = vmatprep.subr.mxu0 0.0
    %2900 = vmatpush1.msra.mxu0 0.0
    %2901 = vmatprep.subr.mxu0 0.0
    %2902 = vmatpush1.msra.mxu0 0.0
    %2903 = vmatprep.subr.mxu0 0.0
    %2904 = vmatpush1.msra.mxu0 0.0
    %2905 = vmatprep.subr.mxu0 0.0
    %2906 = vmatpush1.msra.mxu0 0.0
    %2907 = vmatprep.subr.mxu0 0.0
    %2908 = vmatpush1.msra.mxu0 0.0
    %2909 = vmatprep.subr.mxu0 0.0
    %2910 = vmatpush1.msra.mxu0 0.0
    %2911 = vmatprep.subr.mxu0 0.0
    %2912 = vmatpush1.msra.mxu0 0.0
    %2913 = vmatprep.subr.mxu0 0.0
    %2914 = vmatpush1.msra.mxu0 0.0
    %2915 = vmatprep.subr.mxu0 0.0
    %2916 = vmatpush1.msra.mxu0 0.0
    %2917 = vmatprep.subr.mxu0 0.0
    %2918 = vmatpush1.msra.mxu0 0.0
    %2919 = vmatprep.subr.mxu0 0.0
    %2920 = vmatpush1.msra.mxu0 0.0
    %2921 = vmatprep.mubr.f32.mxu0 0.0
    %2922 = vmatmul.mubr.f32.gmra.mrb[0].mxu0 %v2855
    %v2923 = vpop.f32.mrb[0].mxu0
    %v2924 = vadd.f32 %v2852, %v2923
    %v2925 = vpop.f32.mrb[0].mxu0
    %2926 = vdwg.mxu0
    %v2927 = vmax.f32 %v2924, 0.0
    %v2928 = vld [vmem:[%s97] sm:$0xff]
    %v2929 = vld [vmem:[%s97 + $0x8] sm:$0xff]
    %v2930 = vld [vmem:[%s97 + $0x10] sm:$0xff]
    %v2931 = vld [vmem:[%s97 + $0x18] sm:$0xff]
    %v2932 = vld [vmem:[%s97 + $0x20] sm:$0xff]
    %v2933 = vld [vmem:[%s97 + $0x28] sm:$0xff]
    %v2934 = vld [vmem:[%s97 + $0x30] sm:$0xff]
    %v2935 = vld [vmem:[%s97 + $0x38] sm:$0xff]
    %v2936 = vld [vmem:[#allocation53] sm:$0x1]
    %v2938 = vlaneseq
    %v2939 = vshrl.u32 %v2938, 7
    %v2940 = vsub.s32 0, %v2939
    %v2941 = vrot.slane %v2936, %v2940
    %v2944 = vsel %vm795, %v2927, 0
    %2946 = vmatprep.subr.mxu0 0.0
    %2947 = vmatpush1.msra.mxu0 %v2928
    %2948 = vmatprep.subr.mxu0 0.0
    %2949 = vmatpush1.msra.mxu0 %v2929
    %2950 = vmatprep.subr.mxu0 0.0
    %2951 = vmatpush1.msra.mxu0 %v2930
    %2952 = vmatprep.subr.mxu0 0.0
    %2953 = vmatpush1.msra.mxu0 %v2931
    %2954 = vmatprep.subr.mxu0 0.0
    %2955 = vmatpush1.msra.mxu0 %v2932
    %2956 = vmatprep.subr.mxu0 0.0
    %2957 = vmatpush1.msra.mxu0 %v2933
    %2958 = vmatprep.subr.mxu0 0.0
    %2959 = vmatpush1.msra.mxu0 %v2934
    %2960 = vmatprep.subr.mxu0 0.0
    %2961 = vmatpush1.msra.mxu0 %v2935
    %2962 = vmatprep.subr.mxu0 0.0
    %2963 = vmatpush1.msra.mxu0 0.0
    %2964 = vmatprep.subr.mxu0 0.0
    %2965 = vmatpush1.msra.mxu0 0.0
    %2966 = vmatprep.subr.mxu0 0.0
    %2967 = vmatpush1.msra.mxu0 0.0
    %2968 = vmatprep.subr.mxu0 0.0
    %2969 = vmatpush1.msra.mxu0 0.0
    %2970 = vmatprep.subr.mxu0 0.0
    %2971 = vmatpush1.msra.mxu0 0.0
    %2972 = vmatprep.subr.mxu0 0.0
    %2973 = vmatpush1.msra.mxu0 0.0
    %2974 = vmatprep.subr.mxu0 0.0
    %2975 = vmatpush1.msra.mxu0 0.0
    %2976 = vmatprep.subr.mxu0 0.0
    %2977 = vmatpush1.msra.mxu0 0.0
    %2978 = vmatprep.subr.mxu0 0.0
    %2979 = vmatpush1.msra.mxu0 0.0
    %2980 = vmatprep.subr.mxu0 0.0
    %2981 = vmatpush1.msra.mxu0 0.0
    %2982 = vmatprep.subr.mxu0 0.0
    %2983 = vmatpush1.msra.mxu0 0.0
    %2984 = vmatprep.subr.mxu0 0.0
    %2985 = vmatpush1.msra.mxu0 0.0
    %2986 = vmatprep.subr.mxu0 0.0
    %2987 = vmatpush1.msra.mxu0 0.0
    %2988 = vmatprep.subr.mxu0 0.0
    %2989 = vmatpush1.msra.mxu0 0.0
    %2990 = vmatprep.subr.mxu0 0.0
    %2991 = vmatpush1.msra.mxu0 0.0
    %2992 = vmatprep.subr.mxu0 0.0
    %2993 = vmatpush1.msra.mxu0 0.0
    %2994 = vmatprep.subr.mxu0 0.0
    %2995 = vmatpush1.msra.mxu0 0.0
    %2996 = vmatprep.subr.mxu0 0.0
    %2997 = vmatpush1.msra.mxu0 0.0
    %2998 = vmatprep.subr.mxu0 0.0
    %2999 = vmatpush1.msra.mxu0 0.0
    %3000 = vmatprep.subr.mxu0 0.0
    %3001 = vmatpush1.msra.mxu0 0.0
    %3002 = vmatprep.subr.mxu0 0.0
    %3003 = vmatpush1.msra.mxu0 0.0
    %3004 = vmatprep.subr.mxu0 0.0
    %3005 = vmatpush1.msra.mxu0 0.0
    %3006 = vmatprep.subr.mxu0 0.0
    %3007 = vmatpush1.msra.mxu0 0.0
    %3008 = vmatprep.subr.mxu0 0.0
    %3009 = vmatpush1.msra.mxu0 0.0
    %3010 = vmatprep.mubr.f32.mxu0 0.0
    %3011 = vmatmul.mubr.f32.gmra.mrb[0].mxu0 %v2944
    %v3012 = vpop.f32.mrb[0].mxu0
    %v3013 = vadd.f32 %v2941, %v3012
    %v3014 = vpop.f32.mrb[0].mxu0
    %3015 = vdwg.mxu0
    %v3016 = vld [vmem:[%s105] sm:$0xff]
    %v3017 = vld [vmem:[%s105 + $0x8] sm:$0xff]
    %v3018 = vld [vmem:[%s105 + $0x10] sm:$0xff]
    %v3019 = vld [vmem:[%s105 + $0x18] sm:$0xff]
    %v3020 = vld [vmem:[#allocation57] sm:$0x1]
    %v3022 = vlaneseq
    %v3023 = vshrl.u32 %v3022, 7
    %v3024 = vsub.s32 0, %v3023
    %v3025 = vrot.slane %v3020, %v3024
    %3027 = vmatprep.subr.mxu0 0.0
    %3028 = vmatpush1.msra.mxu0 %v3016
    %3029 = vmatprep.subr.mxu0 0.0
    %3030 = vmatpush1.msra.mxu0 %v3017
    %3031 = vmatprep.subr.mxu0 0.0
    %3032 = vmatpush1.msra.mxu0 %v3018
    %3033 = vmatprep.subr.mxu0 0.0
    %3034 = vmatpush1.msra.mxu0 %v3019
    %3035 = vmatprep.subr.mxu0 0.0
    %3036 = vmatpush1.msra.mxu0 0.0
    %3037 = vmatprep.subr.mxu0 0.0
    %3038 = vmatpush1.msra.mxu0 0.0
    %3039 = vmatprep.subr.mxu0 0.0
    %3040 = vmatpush1.msra.mxu0 0.0
    %3041 = vmatprep.subr.mxu0 0.0
    %3042 = vmatpush1.msra.mxu0 0.0
    %3043 = vmatprep.subr.mxu0 0.0
    %3044 = vmatpush1.msra.mxu0 0.0
    %3045 = vmatprep.subr.mxu0 0.0
    %3046 = vmatpush1.msra.mxu0 0.0
    %3047 = vmatprep.subr.mxu0 0.0
    %3048 = vmatpush1.msra.mxu0 0.0
    %3049 = vmatprep.subr.mxu0 0.0
    %3050 = vmatpush1.msra.mxu0 0.0
    %3051 = vmatprep.subr.mxu0 0.0
    %3052 = vmatpush1.msra.mxu0 0.0
    %3053 = vmatprep.subr.mxu0 0.0
    %3054 = vmatpush1.msra.mxu0 0.0
    %3055 = vmatprep.subr.mxu0 0.0
    %3056 = vmatpush1.msra.mxu0 0.0
    %3057 = vmatprep.subr.mxu0 0.0
    %3058 = vmatpush1.msra.mxu0 0.0
    %3059 = vmatprep.subr.mxu0 0.0
    %3060 = vmatpush1.msra.mxu0 0.0
    %3061 = vmatprep.subr.mxu0 0.0
    %3062 = vmatpush1.msra.mxu0 0.0
    %3063 = vmatprep.subr.mxu0 0.0
    %3064 = vmatpush1.msra.mxu0 0.0
    %3065 = vmatprep.subr.mxu0 0.0
    %3066 = vmatpush1.msra.mxu0 0.0
    %3067 = vmatprep.subr.mxu0 0.0
    %3068 = vmatpush1.msra.mxu0 0.0
    %3069 = vmatprep.subr.mxu0 0.0
    %3070 = vmatpush1.msra.mxu0 0.0
    %3071 = vmatprep.subr.mxu0 0.0
    %3072 = vmatpush1.msra.mxu0 0.0
    %3073 = vmatprep.subr.mxu0 0.0
    %3074 = vmatpush1.msra.mxu0 0.0
    %3075 = vmatprep.subr.mxu0 0.0
    %3076 = vmatpush1.msra.mxu0 0.0
    %3077 = vmatprep.subr.mxu0 0.0
    %3078 = vmatpush1.msra.mxu0 0.0
    %3079 = vmatprep.subr.mxu0 0.0
    %3080 = vmatpush1.msra.mxu0 0.0
    %3081 = vmatprep.subr.mxu0 0.0
    %3082 = vmatpush1.msra.mxu0 0.0
    %3083 = vmatprep.subr.mxu0 0.0
    %3084 = vmatpush1.msra.mxu0 0.0
    %3085 = vmatprep.subr.mxu0 0.0
    %3086 = vmatpush1.msra.mxu0 0.0
    %3087 = vmatprep.subr.mxu0 0.0
    %3088 = vmatpush1.msra.mxu0 0.0
    %3089 = vmatprep.subr.mxu0 0.0
    %3090 = vmatpush1.msra.mxu0 0.0
    %3091 = vmatprep.mubr.f32.mxu0 0.0
    %3092 = vmatmul.mubr.f32.gmra.mrb[0].mxu0 %v2682
    %v3093 = vpop.f32.mrb[0].mxu0
    %v3094 = vadd.f32 %v3025, %v3093
    %v3095 = vpop.f32.mrb[0].mxu0
    %3096 = vdwg.mxu0
    %v3097 = vsel %vm1284, %v3094, -inf
    %3098 = vmax.xlane.f32.xlu0 %v3097
    %v3099 = vpop.xlane.xlu0 %3098
    %v3100 = vsub.f32 %v3094, %v3099
    %v3101 = vmul.f32 %v3100, 1.442695
    %v3102 = vpow.pop %v3101
    %v3103 = vsel %vm1284, %v3102, 0.0
    %3104 = vadd.xlane.f32.xlu0 %v3103
    %v3105 = vpop.xlane.xlu0 %3104
    %v3106 = vrcp.pop %v3105
    %v3107 = vmul.f32 %v3102, %v3106
    %3109 = vset.pattern.permute.xlu0 0
    %3110 = vperm.xlu0 %3109, %v3107
    %v3111 = vpop.permute.xlu0 %3110
    %v3113 = vmul.f32 %v2840, %v3111
    %3114 = vset.pattern.permute.xlu0 1
    %3115 = vperm.xlu0 %3114, %v3107
    %v3116 = vpop.permute.xlu0 %3115
    %v3118 = vmul.f32 %v2840, %v3116
    %3120 = vrot.lane.b32.xlu0 %v3118, 96
    %v3121 = vpop.permute.xlu0 %3120
    %v3123 = vadd.f32 %v3113, %v3121
    %3124 = vset.pattern.permute.xlu0 2
    %3125 = vperm.xlu0 %3124, %v3107
    %v3126 = vpop.permute.xlu0 %3125
    %v3128 = vmul.f32 %v2667, %v3126
    %v3129 = vadd.f32 %v3123, %v3128
    %3130 = vset.pattern.permute.xlu0 3
    %3131 = vperm.xlu0 %3130, %v3107
    %v3132 = vpop.permute.xlu0 %3131
    %v3134 = vmul.f32 %v2667, %v3132
    %3136 = vrot.lane.b32.xlu0 %v3134, 96
    %v3137 = vpop.permute.xlu0 %3136
    %v3139 = vadd.f32 %v3129, %v3137
    %v3140 = vld [vmem:[%s109] sm:$0xff]
    %v3141 = vld [vmem:[%s109 + $0x8] sm:$0xff]
    %v3142 = vld [vmem:[%s109 + $0x10] sm:$0xff]
    %v3143 = vld [vmem:[%s109 + $0x18] sm:$0xff]
    %v3144 = vld [vmem:[%s107] sm:$0x1]
    %v3146 = vlaneseq
    %v3147 = vshrl.u32 %v3146, 7
    %v3148 = vsub.s32 0, %v3147
    %v3149 = vrot.slane %v3144, %v3148
    %3151 = vmatprep.subr.mxu0 0.0
    %3152 = vmatpush1.msra.mxu0 %v3140
    %3153 = vmatprep.subr.mxu0 0.0
    %3154 = vmatpush1.msra.mxu0 %v3141
    %3155 = vmatprep.subr.mxu0 0.0
    %3156 = vmatpush1.msra.mxu0 %v3142
    %3157 = vmatprep.subr.mxu0 0.0
    %3158 = vmatpush1.msra.mxu0 %v3143
    %3159 = vmatprep.subr.mxu0 0.0
    %3160 = vmatpush1.msra.mxu0 0.0
    %3161 = vmatprep.subr.mxu0 0.0
    %3162 = vmatpush1.msra.mxu0 0.0
    %3163 = vmatprep.subr.mxu0 0.0
    %3164 = vmatpush1.msra.mxu0 0.0
    %3165 = vmatprep.subr.mxu0 0.0
    %3166 = vmatpush1.msra.mxu0 0.0
    %3167 = vmatprep.subr.mxu0 0.0
    %3168 = vmatpush1.msra.mxu0 0.0
    %3169 = vmatprep.subr.mxu0 0.0
    %3170 = vmatpush1.msra.mxu0 0.0
    %3171 = vmatprep.subr.mxu0 0.0
    %3172 = vmatpush1.msra.mxu0 0.0
    %3173 = vmatprep.subr.mxu0 0.0
    %3174 = vmatpush1.msra.mxu0 0.0
    %3175 = vmatprep.subr.mxu0 0.0
    %3176 = vmatpush1.msra.mxu0 0.0
    %3177 = vmatprep.subr.mxu0 0.0
    %3178 = vmatpush1.msra.mxu0 0.0
    %3179 = vmatprep.subr.mxu0 0.0
    %3180 = vmatpush1.msra.mxu0 0.0
    %3181 = vmatprep.subr.mxu0 0.0
    %3182 = vmatpush1.msra.mxu0 0.0
    %3183 = vmatprep.subr.mxu0 0.0
    %3184 = vmatpush1.msra.mxu0 0.0
    %3185 = vmatprep.subr.mxu0 0.0
    %3186 = vmatpush1.msra.mxu0 0.0
    %3187 = vmatprep.subr.mxu0 0.0
    %3188 = vmatpush1.msra.mxu0 0.0
    %3189 = vmatprep.subr.mxu0 0.0
    %3190 = vmatpush1.msra.mxu0 0.0
    %3191 = vmatprep.subr.mxu0 0.0
    %3192 = vmatpush1.msra.mxu0 0.0
    %3193 = vmatprep.subr.mxu0 0.0
    %3194 = vmatpush1.msra.mxu0 0.0
    %3195 = vmatprep.subr.mxu0 0.0
    %3196 = vmatpush1.msra.mxu0 0.0
    %3197 = vmatprep.subr.mxu0 0.0
    %3198 = vmatpush1.msra.mxu0 0.0
    %3199 = vmatprep.subr.mxu0 0.0
    %3200 = vmatpush1.msra.mxu0 0.0
    %3201 = vmatprep.subr.mxu0 0.0
    %3202 = vmatpush1.msra.mxu0 0.0
    %3203 = vmatprep.subr.mxu0 0.0
    %3204 = vmatpush1.msra.mxu0 0.0
    %3205 = vmatprep.subr.mxu0 0.0
    %3206 = vmatpush1.msra.mxu0 0.0
    %3207 = vmatprep.subr.mxu0 0.0
    %3208 = vmatpush1.msra.mxu0 0.0
    %3209 = vmatprep.subr.mxu0 0.0
    %3210 = vmatpush1.msra.mxu0 0.0
    %3211 = vmatprep.subr.mxu0 0.0
    %3212 = vmatpush1.msra.mxu0 0.0
    %3213 = vmatprep.subr.mxu0 0.0
    %3214 = vmatpush1.msra.mxu0 0.0
    %3215 = vmatprep.mubr.f32.mxu0 0.0
    %3216 = vmatmul.mubr.f32.gmra.mrb[0].mxu0 %v2855
    %v3217 = vpop.f32.mrb[0].mxu0
    %v3218 = vadd.f32 %v3149, %v3217
    %v3219 = vpop.f32.mrb[0].mxu0
    %3220 = vdwg.mxu0
    %v3221 = vsel %vm1284, %v3218, -inf
    %3222 = vmax.xlane.f32.xlu0 %v3221
    %v3223 = vpop.xlane.xlu0 %3222
    %v3224 = vsub.f32 %v3218, %v3223
    %v3225 = vmul.f32 %v3224, 1.442695
    %v3226 = vpow.pop %v3225
    %v3227 = vsel %vm1284, %v3226, 0.0
    %3228 = vadd.xlane.f32.xlu0 %v3227
    %v3229 = vpop.xlane.xlu0 %3228
    %v3230 = vrcp.pop %v3229
    %v3231 = vmul.f32 %v3226, %v3230
    %3233 = vset.pattern.permute.xlu0 0
    %3234 = vperm.xlu0 %3233, %v3231
    %v3235 = vpop.permute.xlu0 %3234
    %v3237 = vmul.f32 %v3013, %v3235
    %3238 = vset.pattern.permute.xlu0 1
    %3239 = vperm.xlu0 %3238, %v3231
    %v3240 = vpop.permute.xlu0 %3239
    %v3242 = vmul.f32 %v3013, %v3240
    %3244 = vrot.lane.b32.xlu0 %v3242, 96
    %v3245 = vpop.permute.xlu0 %3244
    %v3247 = vadd.f32 %v3237, %v3245
    %3248 = vset.pattern.permute.xlu0 2
    %3249 = vperm.xlu0 %3248, %v3231
    %v3250 = vpop.permute.xlu0 %3249
    %v3252 = vmul.f32 %v2667, %v3250
    %v3253 = vadd.f32 %v3247, %v3252
    %3254 = vset.pattern.permute.xlu0 3
    %3255 = vperm.xlu0 %3254, %v3231
    %v3256 = vpop.permute.xlu0 %3255
    %v3258 = vmul.f32 %v2667, %v3256
    %3260 = vrot.lane.b32.xlu0 %v3258, 96
    %v3261 = vpop.permute.xlu0 %3260
    %v3263 = vadd.f32 %v3253, %v3261
    %v3264 = vld [vmem:[%s115] sm:$0xff]
    %v3265 = vld [vmem:[%s115 + $0x8] sm:$0xff]
    %v3266 = vld [vmem:[%s115 + $0x10] sm:$0xff]
    %v3267 = vld [vmem:[%s115 + $0x18] sm:$0xff]
    %v3268 = vld [vmem:[%s111] sm:$0x1]
    %v3270 = vlaneseq
    %v3271 = vshrl.u32 %v3270, 7
    %v3272 = vsub.s32 0, %v3271
    %v3273 = vrot.slane %v3268, %v3272
    %v3276 = vsel %vm1600, %v3139, 0
    %3278 = vmatprep.subr.mxu0 0.0
    %3279 = vmatpush1.msra.mxu0 %v3264
    %3280 = vmatprep.subr.mxu0 0.0
    %3281 = vmatpush1.msra.mxu0 %v3265
    %3282 = vmatprep.subr.mxu0 0.0
    %3283 = vmatpush1.msra.mxu0 %v3266
    %3284 = vmatprep.subr.mxu0 0.0
    %3285 = vmatpush1.msra.mxu0 %v3267
    %3286 = vmatprep.subr.mxu0 0.0
    %3287 = vmatpush1.msra.mxu0 0.0
    %3288 = vmatprep.subr.mxu0 0.0
    %3289 = vmatpush1.msra.mxu0 0.0
    %3290 = vmatprep.subr.mxu0 0.0
    %3291 = vmatpush1.msra.mxu0 0.0
    %3292 = vmatprep.subr.mxu0 0.0
    %3293 = vmatpush1.msra.mxu0 0.0
    %3294 = vmatprep.subr.mxu0 0.0
    %3295 = vmatpush1.msra.mxu0 0.0
    %3296 = vmatprep.subr.mxu0 0.0
    %3297 = vmatpush1.msra.mxu0 0.0
    %3298 = vmatprep.subr.mxu0 0.0
    %3299 = vmatpush1.msra.mxu0 0.0
    %3300 = vmatprep.subr.mxu0 0.0
    %3301 = vmatpush1.msra.mxu0 0.0
    %3302 = vmatprep.subr.mxu0 0.0
    %3303 = vmatpush1.msra.mxu0 0.0
    %3304 = vmatprep.subr.mxu0 0.0
    %3305 = vmatpush1.msra.mxu0 0.0
    %3306 = vmatprep.subr.mxu0 0.0
    %3307 = vmatpush1.msra.mxu0 0.0
    %3308 = vmatprep.subr.mxu0 0.0
    %3309 = vmatpush1.msra.mxu0 0.0
    %3310 = vmatprep.subr.mxu0 0.0
    %3311 = vmatpush1.msra.mxu0 0.0
    %3312 = vmatprep.subr.mxu0 0.0
    %3313 = vmatpush1.msra.mxu0 0.0
    %3314 = vmatprep.subr.mxu0 0.0
    %3315 = vmatpush1.msra.mxu0 0.0
    %3316 = vmatprep.subr.mxu0 0.0
    %3317 = vmatpush1.msra.mxu0 0.0
    %3318 = vmatprep.subr.mxu0 0.0
    %3319 = vmatpush1.msra.mxu0 0.0
    %3320 = vmatprep.subr.mxu0 0.0
    %3321 = vmatpush1.msra.mxu0 0.0
    %3322 = vmatprep.subr.mxu0 0.0
    %3323 = vmatpush1.msra.mxu0 0.0
    %3324 = vmatprep.subr.mxu0 0.0
    %3325 = vmatpush1.msra.mxu0 0.0
    %3326 = vmatprep.subr.mxu0 0.0
    %3327 = vmatpush1.msra.mxu0 0.0
    %3328 = vmatprep.subr.mxu0 0.0
    %3329 = vmatpush1.msra.mxu0 0.0
    %3330 = vmatprep.subr.mxu0 0.0
    %3331 = vmatpush1.msra.mxu0 0.0
    %3332 = vmatprep.subr.mxu0 0.0
    %3333 = vmatpush1.msra.mxu0 0.0
    %3334 = vmatprep.subr.mxu0 0.0
    %3335 = vmatpush1.msra.mxu0 0.0
    %3336 = vmatprep.subr.mxu0 0.0
    %3337 = vmatpush1.msra.mxu0 0.0
    %3338 = vmatprep.subr.mxu0 0.0
    %3339 = vmatpush1.msra.mxu0 0.0
    %3340 = vmatprep.subr.mxu0 0.0
    %3341 = vmatpush1.msra.mxu0 0.0
    %3342 = vmatprep.mubr.f32.mxu0 0.0
    %3343 = vmatmul.mubr.f32.gmra.mrb[0].mxu0 %v3276
    %v3344 = vpop.f32.mrb[0].mxu0
    %v3345 = vadd.f32 %v3273, %v3344
    %v3346 = vpop.f32.mrb[0].mxu0
    %3347 = vdwg.mxu0
    %v3348 = vmax.f32 %v3345, 0.0
    %v3349 = vld [vmem:[%s117] sm:$0xff]
    %v3350 = vld [vmem:[%s117 + $0x8] sm:$0xff]
    %v3351 = vld [vmem:[#allocation2] sm:$0x1]
    %v3353 = vlaneseq
    %v3354 = vshrl.u32 %v3353, 7
    %v3355 = vsub.s32 0, %v3354
    %v3356 = vrot.slane %v3351, %v3355
    %v3359 = vsel %vm705, %v3348, 0
    %3361 = vmatprep.subr.mxu0 0.0
    %3362 = vmatpush1.msra.mxu0 %v3349
    %3363 = vmatprep.subr.mxu0 0.0
    %3364 = vmatpush1.msra.mxu0 %v3350
    %3365 = vmatprep.subr.mxu0 0.0
    %3366 = vmatpush1.msra.mxu0 0.0
    %3367 = vmatprep.subr.mxu0 0.0
    %3368 = vmatpush1.msra.mxu0 0.0
    %3369 = vmatprep.subr.mxu0 0.0
    %3370 = vmatpush1.msra.mxu0 0.0
    %3371 = vmatprep.subr.mxu0 0.0
    %3372 = vmatpush1.msra.mxu0 0.0
    %3373 = vmatprep.subr.mxu0 0.0
    %3374 = vmatpush1.msra.mxu0 0.0
    %3375 = vmatprep.subr.mxu0 0.0
    %3376 = vmatpush1.msra.mxu0 0.0
    %3377 = vmatprep.subr.mxu0 0.0
    %3378 = vmatpush1.msra.mxu0 0.0
    %3379 = vmatprep.subr.mxu0 0.0
    %3380 = vmatpush1.msra.mxu0 0.0
    %3381 = vmatprep.subr.mxu0 0.0
    %3382 = vmatpush1.msra.mxu0 0.0
    %3383 = vmatprep.subr.mxu0 0.0
    %3384 = vmatpush1.msra.mxu0 0.0
    %3385 = vmatprep.subr.mxu0 0.0
    %3386 = vmatpush1.msra.mxu0 0.0
    %3387 = vmatprep.subr.mxu0 0.0
    %3388 = vmatpush1.msra.mxu0 0.0
    %3389 = vmatprep.subr.mxu0 0.0
    %3390 = vmatpush1.msra.mxu0 0.0
    %3391 = vmatprep.subr.mxu0 0.0
    %3392 = vmatpush1.msra.mxu0 0.0
    %3393 = vmatprep.subr.mxu0 0.0
    %3394 = vmatpush1.msra.mxu0 0.0
    %3395 = vmatprep.subr.mxu0 0.0
    %3396 = vmatpush1.msra.mxu0 0.0
    %3397 = vmatprep.subr.mxu0 0.0
    %3398 = vmatpush1.msra.mxu0 0.0
    %3399 = vmatprep.subr.mxu0 0.0
    %3400 = vmatpush1.msra.mxu0 0.0
    %3401 = vmatprep.subr.mxu0 0.0
    %3402 = vmatpush1.msra.mxu0 0.0
    %3403 = vmatprep.subr.mxu0 0.0
    %3404 = vmatpush1.msra.mxu0 0.0
    %3405 = vmatprep.subr.mxu0 0.0
    %3406 = vmatpush1.msra.mxu0 0.0
    %3407 = vmatprep.subr.mxu0 0.0
    %3408 = vmatpush1.msra.mxu0 0.0
    %3409 = vmatprep.subr.mxu0 0.0
    %3410 = vmatpush1.msra.mxu0 0.0
    %3411 = vmatprep.subr.mxu0 0.0
    %3412 = vmatpush1.msra.mxu0 0.0
    %3413 = vmatprep.subr.mxu0 0.0
    %3414 = vmatpush1.msra.mxu0 0.0
    %3415 = vmatprep.subr.mxu0 0.0
    %3416 = vmatpush1.msra.mxu0 0.0
    %3417 = vmatprep.subr.mxu0 0.0
    %3418 = vmatpush1.msra.mxu0 0.0
    %3419 = vmatprep.subr.mxu0 0.0
    %3420 = vmatpush1.msra.mxu0 0.0
    %3421 = vmatprep.subr.mxu0 0.0
    %3422 = vmatpush1.msra.mxu0 0.0
    %3423 = vmatprep.subr.mxu0 0.0
    %3424 = vmatpush1.msra.mxu0 0.0
    %3425 = vmatprep.mubr.f32.mxu0 0.0
    %3426 = vmatmul.mubr.f32.gmra.mrb[0].mxu0 %v3359
    %v3427 = vpop.f32.mrb[0].mxu0
    %v3428 = vadd.f32 %v3356, %v3427
    %v3429 = vpop.f32.mrb[0].mxu0
    %3430 = vdwg.mxu0
    %v3431 = vsub.f32 0.0, %v3428
    %v3432 = vmul.f32 %v3431, 1.442695
    %v3433 = vpow.pop %v3432
    %v3434 = vadd.f32 %v3433, 1.0
    %v3435 = vrcp.pop %v3434
    %v3436 = vmul.f32 1.0, %v3435
    %v3437 = vld [vmem:[%s123] sm:$0xff]
    %v3438 = vld [vmem:[%s123 + $0x8] sm:$0xff]
    %v3439 = vld [vmem:[%s123 + $0x10] sm:$0xff]
    %v3440 = vld [vmem:[%s123 + $0x18] sm:$0xff]
    %v3441 = vld [vmem:[%s119] sm:$0x1]
    %v3443 = vlaneseq
    %v3444 = vshrl.u32 %v3443, 7
    %v3445 = vsub.s32 0, %v3444
    %v3446 = vrot.slane %v3441, %v3445
    %v3449 = vsel %vm1600, %v3263, 0
    %3451 = vmatprep.subr.mxu0 0.0
    %3452 = vmatpush1.msra.mxu0 %v3437
    %3453 = vmatprep.subr.mxu0 0.0
    %3454 = vmatpush1.msra.mxu0 %v3438
    %3455 = vmatprep.subr.mxu0 0.0
    %3456 = vmatpush1.msra.mxu0 %v3439
    %3457 = vmatprep.subr.mxu0 0.0
    %3458 = vmatpush1.msra.mxu0 %v3440
    %3459 = vmatprep.subr.mxu0 0.0
    %3460 = vmatpush1.msra.mxu0 0.0
    %3461 = vmatprep.subr.mxu0 0.0
    %3462 = vmatpush1.msra.mxu0 0.0
    %3463 = vmatprep.subr.mxu0 0.0
    %3464 = vmatpush1.msra.mxu0 0.0
    %3465 = vmatprep.subr.mxu0 0.0
    %3466 = vmatpush1.msra.mxu0 0.0
    %3467 = vmatprep.subr.mxu0 0.0
    %3468 = vmatpush1.msra.mxu0 0.0
    %3469 = vmatprep.subr.mxu0 0.0
    %3470 = vmatpush1.msra.mxu0 0.0
    %3471 = vmatprep.subr.mxu0 0.0
    %3472 = vmatpush1.msra.mxu0 0.0
    %3473 = vmatprep.subr.mxu0 0.0
    %3474 = vmatpush1.msra.mxu0 0.0
    %3475 = vmatprep.subr.mxu0 0.0
    %3476 = vmatpush1.msra.mxu0 0.0
    %3477 = vmatprep.subr.mxu0 0.0
    %3478 = vmatpush1.msra.mxu0 0.0
    %3479 = vmatprep.subr.mxu0 0.0
    %3480 = vmatpush1.msra.mxu0 0.0
    %3481 = vmatprep.subr.mxu0 0.0
    %3482 = vmatpush1.msra.mxu0 0.0
    %3483 = vmatprep.subr.mxu0 0.0
    %3484 = vmatpush1.msra.mxu0 0.0
    %3485 = vmatprep.subr.mxu0 0.0
    %3486 = vmatpush1.msra.mxu0 0.0
    %3487 = vmatprep.subr.mxu0 0.0
    %3488 = vmatpush1.msra.mxu0 0.0
    %3489 = vmatprep.subr.mxu0 0.0
    %3490 = vmatpush1.msra.mxu0 0.0
    %3491 = vmatprep.subr.mxu0 0.0
    %3492 = vmatpush1.msra.mxu0 0.0
    %3493 = vmatprep.subr.mxu0 0.0
    %3494 = vmatpush1.msra.mxu0 0.0
    %3495 = vmatprep.subr.mxu0 0.0
    %3496 = vmatpush1.msra.mxu0 0.0
    %3497 = vmatprep.subr.mxu0 0.0
    %3498 = vmatpush1.msra.mxu0 0.0
    %3499 = vmatprep.subr.mxu0 0.0
    %3500 = vmatpush1.msra.mxu0 0.0
    %3501 = vmatprep.subr.mxu0 0.0
    %3502 = vmatpush1.msra.mxu0 0.0
    %3503 = vmatprep.subr.mxu0 0.0
    %3504 = vmatpush1.msra.mxu0 0.0
    %3505 = vmatprep.subr.mxu0 0.0
    %3506 = vmatpush1.msra.mxu0 0.0
    %3507 = vmatprep.subr.mxu0 0.0
    %3508 = vmatpush1.msra.mxu0 0.0
    %3509 = vmatprep.subr.mxu0 0.0
    %3510 = vmatpush1.msra.mxu0 0.0
    %3511 = vmatprep.subr.mxu0 0.0
    %3512 = vmatpush1.msra.mxu0 0.0
    %3513 = vmatprep.subr.mxu0 0.0
    %3514 = vmatpush1.msra.mxu0 0.0
    %3515 = vmatprep.mubr.f32.mxu0 0.0
    %3516 = vmatmul.mubr.f32.gmra.mrb[0].mxu0 %v3449
    %v3517 = vpop.f32.mrb[0].mxu0
    %v3518 = vadd.f32 %v3446, %v3517
    %v3519 = vpop.f32.mrb[0].mxu0
    %3520 = vdwg.mxu0
    %v3521 = vmax.f32 %v3518, 0.0
    %v3522 = vld [vmem:[%s125] sm:$0xff]
    %v3523 = vld [vmem:[%s125 + $0x8] sm:$0xff]
    %v3524 = vld [vmem:[#allocation3] sm:$0x1]
    %v3526 = vlaneseq
    %v3527 = vshrl.u32 %v3526, 7
    %v3528 = vsub.s32 0, %v3527
    %v3529 = vrot.slane %v3524, %v3528
    %v3532 = vsel %vm705, %v3521, 0
    %3534 = vmatprep.subr.mxu0 0.0
    %3535 = vmatpush1.msra.mxu0 %v3522
    %3536 = vmatprep.subr.mxu0 0.0
    %3537 = vmatpush1.msra.mxu0 %v3523
    %3538 = vmatprep.subr.mxu0 0.0
    %3539 = vmatpush1.msra.mxu0 0.0
    %3540 = vmatprep.subr.mxu0 0.0
    %3541 = vmatpush1.msra.mxu0 0.0
    %3542 = vmatprep.subr.mxu0 0.0
    %3543 = vmatpush1.msra.mxu0 0.0
    %3544 = vmatprep.subr.mxu0 0.0
    %3545 = vmatpush1.msra.mxu0 0.0
    %3546 = vmatprep.subr.mxu0 0.0
    %3547 = vmatpush1.msra.mxu0 0.0
    %3548 = vmatprep.subr.mxu0 0.0
    %3549 = vmatpush1.msra.mxu0 0.0
    %3550 = vmatprep.subr.mxu0 0.0
    %3551 = vmatpush1.msra.mxu0 0.0
    %3552 = vmatprep.subr.mxu0 0.0
    %3553 = vmatpush1.msra.mxu0 0.0
    %3554 = vmatprep.subr.mxu0 0.0
    %3555 = vmatpush1.msra.mxu0 0.0
    %3556 = vmatprep.subr.mxu0 0.0
    %3557 = vmatpush1.msra.mxu0 0.0
    %3558 = vmatprep.subr.mxu0 0.0
    %3559 = vmatpush1.msra.mxu0 0.0
    %3560 = vmatprep.subr.mxu0 0.0
    %3561 = vmatpush1.msra.mxu0 0.0
    %3562 = vmatprep.subr.mxu0 0.0
    %3563 = vmatpush1.msra.mxu0 0.0
    %3564 = vmatprep.subr.mxu0 0.0
    %3565 = vmatpush1.msra.mxu0 0.0
    %3566 = vmatprep.subr.mxu0 0.0
    %3567 = vmatpush1.msra.mxu0 0.0
    %3568 = vmatprep.subr.mxu0 0.0
    %3569 = vmatpush1.msra.mxu0 0.0
    %3570 = vmatprep.subr.mxu0 0.0
    %3571 = vmatpush1.msra.mxu0 0.0
    %3572 = vmatprep.subr.mxu0 0.0
    %3573 = vmatpush1.msra.mxu0 0.0
    %3574 = vmatprep.subr.mxu0 0.0
    %3575 = vmatpush1.msra.mxu0 0.0
    %3576 = vmatprep.subr.mxu0 0.0
    %3577 = vmatpush1.msra.mxu0 0.0
    %3578 = vmatprep.subr.mxu0 0.0
    %3579 = vmatpush1.msra.mxu0 0.0
    %3580 = vmatprep.subr.mxu0 0.0
    %3581 = vmatpush1.msra.mxu0 0.0
    %3582 = vmatprep.subr.mxu0 0.0
    %3583 = vmatpush1.msra.mxu0 0.0
    %3584 = vmatprep.subr.mxu0 0.0
    %3585 = vmatpush1.msra.mxu0 0.0
    %3586 = vmatprep.subr.mxu0 0.0
    %3587 = vmatpush1.msra.mxu0 0.0
    %3588 = vmatprep.subr.mxu0 0.0
    %3589 = vmatpush1.msra.mxu0 0.0
    %3590 = vmatprep.subr.mxu0 0.0
    %3591 = vmatpush1.msra.mxu0 0.0
    %3592 = vmatprep.subr.mxu0 0.0
    %3593 = vmatpush1.msra.mxu0 0.0
    %3594 = vmatprep.subr.mxu0 0.0
    %3595 = vmatpush1.msra.mxu0 0.0
    %3596 = vmatprep.subr.mxu0 0.0
    %3597 = vmatpush1.msra.mxu0 0.0
    %3598 = vmatprep.mubr.f32.mxu0 0.0
    %3599 = vmatmul.mubr.f32.gmra.mrb[0].mxu0 %v3532
    %v3600 = vpop.f32.mrb[0].mxu0
    %v3601 = vadd.f32 %v3529, %v3600
    %v3602 = vpop.f32.mrb[0].mxu0
    %3603 = vdwg.mxu0
    %v3604 = vsub.f32 0.0, %v3601
    %v3605 = vmul.f32 %v3604, 1.442695
    %v3606 = vpow.pop %v3605
    %v3607 = vadd.f32 %v3606, 1.0
    %v3608 = vrcp.pop %v3607
    %v3609 = vmul.f32 1.0, %v3608
    %3611 = vrot.lane.b32.xlu0 %v3609, 1
    %v3612 = vpop.permute.xlu0 %3611
    %vm3614 = vcmask 7168
    %v3615 = vsel %vm3614, %v3436, %v3612
    %vm3616 = vcmask 15360
    %3617 = vst.msk [vmem:[%s127] sm:$0xff] %vm3616, %v3615
    // Predicated region
    $region398: #{tpu_custom_call.1} parent=1 // pred_check
      _
    $region399: #{tpu_custom_call.1} parent=1 // pred_check_branch
      %3619 = sbr.rel (0) target = $region401
    $region400: #{tpu_custom_call.1} parent=1 // pred_region
      _
    $region401: #{tpu_custom_call.1} parent=1 // pred_fallthru
      _
    // Predicated region
    $region402: #{tpu_custom_call.1} parent=1 // pred_check
      _
    $region403: #{tpu_custom_call.1} parent=1 // pred_check_branch
      %3621 = sbr.rel (0) target = $region405
    $region404: #{tpu_custom_call.1} parent=1 // pred_region
      _
    $region405: #{tpu_custom_call.1} parent=1 // pred_fallthru
      _
    %3622 = vsyncpa [#allocation5], 1
    %3623 = vsyncpa [#allocation7], 1
    %3624 = vsyncpa [#allocation10], 1
    %3625 = vsyncpa [#allocation13], 1
    %3626 = vsyncpa [#allocation16], 1
    %3627 = vsyncpa [#allocation19], 1
    %3628 = vsyncpa [#allocation22], 1
    %3629 = vsyncpa [#allocation25], 1
    %3630 = vsyncpa [#allocation28], 1
    %3631 = vsyncpa [#allocation31], 1
    %3632 = vsyncpa [#allocation34], 1
    %3633 = vsyncpa [#allocation37], 1
    %3634 = vsyncpa [#allocation40], 1
    %3635 = vsyncpa [#allocation43], 1
    %3636 = vsyncpa [#allocation46], 1
    %3637 = vsyncpa [#allocation49], 1
    %3638 = vsyncpa [#allocation52], 1
    %3639 = vsyncpa [#allocation55], 1
    %3640 = vsyncpa [#allocation58], 1

</llo_original>
